<compile_context>
chip_gen: v7x
topology: tpu7x:2x2x1
jax: 0.10.0
libtpu: 0.0.40
codegen_flags: <defaults>
</compile_context>

<pallas_src>
import jax
import jax.numpy as jnp
from jax.experimental import pallas as pl
from jax.experimental.pallas import tpu as pltpu

_VMEM_LIMIT = 48 * 1024 * 1024          # explicit scoped-VMEM limit (ok on v5e/v6e/v7x)
_ROW_BLOCK_BUDGET = 8 * 1024 * 1024     # per-block budget for the dominant row stream


def _row_tile(n_rows, bytes_per_row, budget_bytes=_ROW_BLOCK_BUDGET):
    """Largest sublane-aligned row tile dividing n_rows whose double-buffered
    block stays under `budget_bytes` (keeps VMEM bounded on every TPU gen)."""
    if n_rows % 8 != 0:
        return n_rows  # full-extent block is always legal
    for cand in (1024, 512, 256, 128, 64, 32, 16, 8):
        if cand <= n_rows and n_rows % cand == 0 and 2 * cand * bytes_per_row <= budget_bytes:
            return cand
    return 8


# --------------------------------------------------------------------------- #
# Kernel 1: fused encoder + wide relation matmul for layer 1
#   xw1 = (relu(emb + emb_bias) @ W_enc + b_enc) @ [W1_1 | ... | W1_R]
# --------------------------------------------------------------------------- #
def _encode_xw_kernel(emb_ref, embb_ref, we_ref, be_ref, wcat_ref, xw_ref):
    x = jnp.maximum(emb_ref[...] + embb_ref[...], 0.0)
    h = jnp.dot(x, we_ref[...], preferred_element_type=jnp.float32) + be_ref[...]
    xw_ref[...] = jnp.dot(h, wcat_ref[...],
                          preferred_element_type=jnp.float32).astype(jnp.bfloat16)


def encode_xw(node_emb, node_emb_bias, w_enc, b_enc, w_cat):
    N, E = node_emb.shape
    H = w_enc.shape[1]
    RH = w_cat.shape[1]
    tm = _row_tile(N, (E + RH) * 4)
    return pl.pallas_call(
        _encode_xw_kernel,
        out_shape=jax.ShapeDtypeStruct((N, RH), jnp.bfloat16),
        grid=(N // tm,),
        in_specs=[
            pl.BlockSpec((tm, E), lambda i: (i, 0)),
            pl.BlockSpec((1, E), lambda i: (0, 0)),
            pl.BlockSpec((E, H), lambda i: (0, 0)),
            pl.BlockSpec((1, H), lambda i: (0, 0)),
            pl.BlockSpec((H, RH), lambda i: (0, 0)),
        ],
        out_specs=pl.BlockSpec((tm, RH), lambda i: (i, 0)),
        compiler_params=pltpu.CompilerParams(
            dimension_semantics=("parallel",), vmem_limit_bytes=_VMEM_LIMIT),
    )(node_emb, node_emb_bias, w_enc, b_enc, w_cat)


# --------------------------------------------------------------------------- #
# Kernel 2: fused relu + wide relation matmul for layer 2
#   xw2 = relu(h1) @ [W2_1 | ... | W2_R]
# --------------------------------------------------------------------------- #
def _relu_xw_kernel(h_ref, wcat_ref, xw_ref):
    x = jnp.maximum(h_ref[...], 0.0)
    xw_ref[...] = jnp.dot(x, wcat_ref[...],
                          preferred_element_type=jnp.float32).astype(jnp.bfloat16)


def relu_xw(h, w_cat):
    N, H = h.shape
    RH = w_cat.shape[1]
    tm = _row_tile(N, H * 4 + RH * 2)
    return pl.pallas_call(
        _relu_xw_kernel,
        out_shape=jax.ShapeDtypeStruct((N, RH), jnp.bfloat16),
        grid=(N // tm,),
        in_specs=[
            pl.BlockSpec((tm, H), lambda i: (i, 0)),
            pl.BlockSpec((H, RH), lambda i: (0, 0)),
        ],
        out_specs=pl.BlockSpec((tm, RH), lambda i: (i, 0)),
        compiler_params=pltpu.CompilerParams(
            dimension_semantics=("parallel",), vmem_limit_bytes=_VMEM_LIMIT),
    )(h, w_cat)


# --------------------------------------------------------------------------- #
# Kernel 3: relational aggregation  out = sum_r A_r @ XW_r + b
# grid = (row_tiles, R); relation axis is the (last, "arbitrary") reduction,
# the output block is VMEM-resident across it and accumulated in-place.
# --------------------------------------------------------------------------- #
def _rgcn_agg_kernel(a_ref, xw_ref, b_ref, o_ref):
    r = pl.program_id(1)

    @pl.when(r == 0)
    def _():
        o_ref[...] = jnp.zeros_like(o_ref)

    # A tile (TM, N) bf16  @  XW_r (N, H) bf16  ->  f32 accumulation on the MXU
    o_ref[...] += jnp.dot(a_ref[0], xw_ref[...], preferred_element_type=jnp.float32)

    @pl.when(r == pl.num_programs(1) - 1)
    def _():
        o_ref[...] += b_ref[...]


def rgcn_aggregate(adj, xw_all, bias):
    R, N, _ = adj.shape
    RH = xw_all.shape[1]
    H = RH // R
    tm = _row_tile(N, N * adj.dtype.itemsize + H * 4)
    return pl.pallas_call(
        _rgcn_agg_kernel,
        out_shape=jax.ShapeDtypeStruct((N, H), jnp.float32),
        grid=(N // tm, R),
        in_specs=[
            pl.BlockSpec((1, tm, N), lambda i, r: (r, i, 0)),   # adjacency slab (bf16)
            pl.BlockSpec((N, H), lambda i, r: (0, r)),          # XW column block of rel. r
            pl.BlockSpec((1, H), lambda i, r: (0, 0)),          # layer bias
        ],
        out_specs=pl.BlockSpec((tm, H), lambda i, r: (i, 0)),
        compiler_params=pltpu.CompilerParams(
            dimension_semantics=("parallel", "arbitrary"),
            vmem_limit_bytes=_VMEM_LIMIT),
    )(adj, xw_all, bias)


# --------------------------------------------------------------------------- #
# Kernel 4: decoder  x = node_emb + (h @ W_dec + b_dec)
# --------------------------------------------------------------------------- #
def _decode_kernel(emb_ref, h_ref, w_ref, b_ref, o_ref):
    o_ref[...] = emb_ref[...] + (
        jnp.dot(h_ref[...], w_ref[...], preferred_element_type=jnp.float32) + b_ref[...])


def decode_embed(node_emb, h, w_dec, b_dec):
    N, E = node_emb.shape
    H = h.shape[1]
    tm = _row_tile(N, (2 * E + H) * 4)
    return pl.pallas_call(
        _decode_kernel,
        out_shape=jax.ShapeDtypeStruct((N, E), jnp.float32),
        grid=(N // tm,),
        in_specs=[
            pl.BlockSpec((tm, E), lambda i: (i, 0)),
            pl.BlockSpec((tm, H), lambda i: (i, 0)),
            pl.BlockSpec((H, E), lambda i: (0, 0)),
            pl.BlockSpec((1, E), lambda i: (0, 0)),
        ],
        out_specs=pl.BlockSpec((tm, E), lambda i: (i, 0)),
        compiler_params=pltpu.CompilerParams(
            dimension_semantics=("parallel",), vmem_limit_bytes=_VMEM_LIMIT),
    )(node_emb, h, w_dec, b_dec)


# --------------------------------------------------------------------------- #
# Kernel 5: DistMult scores, lane-dense output (1, T).
# Inputs are passed pre-transposed (E, T) so the reduction runs over sublanes
# and the store is an unmasked lane-dense row.
# --------------------------------------------------------------------------- #
def _distmult_kernel(s_ref, p_ref, o_ref, score_ref):
    score_ref[...] = jnp.sum(s_ref[...] * p_ref[...] * o_ref[...],
                             axis=0, keepdims=True)


def distmult_scores(s_t, p_t, o_t):
    E, T = s_t.shape
    return pl.pallas_call(
        _distmult_kernel,
        out_shape=jax.ShapeDtypeStruct((1, T), jnp.float32),
        grid=(1,),
        in_specs=[pl.BlockSpec((E, T), lambda i: (0, 0))] * 3,
        out_specs=pl.BlockSpec((1, T), lambda i: (0, 0)),
        compiler_params=pltpu.CompilerParams(
            dimension_semantics=("arbitrary",), vmem_limit_bytes=_VMEM_LIMIT),
    )(s_t, p_t, o_t)


# ------------------------------- JAX glue ---------------------------------- #
def build_adjacency(edges, nnodes, nrel):
    """Dense relational adjacency: forward, inverse and self-loop relations."""
    R = 2 * nrel + 1
    A = jnp.zeros((R, nnodes, nnodes), jnp.float32)
    s, p, o = edges[:, 0], edges[:, 1], edges[:, 2]
    A = A.at[p, s, o].add(1.0)             # forward edges
    A = A.at[p + nrel, o, s].add(1.0)      # inverse edges
    idx = jnp.arange(nnodes)
    A = A.at[2 * nrel, idx, idx].add(1.0)  # self-loops
    # TODO(synk): torch_rgcn's RelationalGraphConvolutionRP additionally applies
    # edge dropout and edge-count normalisation when stacking the adjacency; that
    # class's source is not part of the given spec, so it is omitted here.
    # TODO(synk): a sparse (edge-list + scalar-prefetch gather) formulation would
    # replace this dense O(R*N^2) stream for real graphs.
    return A.astype(jnp.bfloat16)          # small integer counts: exact in bf16


def init_params(key, nnodes, nrel, nemb, nhid):
    R = 2 * nrel + 1
    ks = jax.random.split(key, 8)
    s = 0.1
    return {
        "node_emb": s * jax.random.normal(ks[0], (nnodes, nemb), jnp.float32),
        "node_emb_bias": jnp.zeros((1, nemb), jnp.float32),
        # nn.Linear(nemb, nhid): stored as (in, out) with bias (1, out)
        "w_enc": s * jax.random.normal(ks[1], (nemb, nhid), jnp.float32),
        "b_enc": s * jax.random.normal(ks[2], (1, nhid), jnp.float32),
        # RGCN layers: weights (num_relations, in, out), bias (1, out)
        "w_rgc1": s * jax.random.normal(ks[3], (R, nhid, nhid), jnp.float32),
        "b_rgc1": jnp.zeros((1, nhid), jnp.float32),
        "w_rgc2": s * jax.random.normal(ks[4], (R, nhid, nhid), jnp.float32),
        "b_rgc2": jnp.zeros((1, nhid), jnp.float32),
        # nn.Linear(nhid, nemb)
        "w_dec": s * jax.random.normal(ks[5], (nhid, nemb), jnp.float32),
        "b_dec": s * jax.random.normal(ks[6], (1, nemb), jnp.float32),
        # DistMult relation embeddings (nrel, nemb)
        "relations": s * jax.random.normal(ks[7], (nrel, nemb), jnp.float32),
    }


def compression_relation_predictor_forward(params, adj, triples, decoder_l2=0.01):
    R = adj.shape[0]
    H = params["w_rgc1"].shape[1]
    # Concatenate per-relation weights into lane-dense (H, R*H) slabs (layout
    # plumbing only; fused by XLA under jit).
    w1_cat = jnp.transpose(params["w_rgc1"], (1, 0, 2)).reshape(H, R * H)
    w2_cat = jnp.transpose(params["w_rgc2"], (1, 0, 2)).reshape(H, R * H)

    # encoder bottleneck + layer-1 feature matmul (fused, lane-dense)
    xw1 = encode_xw(params["node_emb"], params["node_emb_bias"],
                    params["w_enc"], params["b_enc"], w1_cat)
    h1 = rgcn_aggregate(adj, xw1, params["b_rgc1"])
    # relu + layer-2 feature matmul (fused), then aggregation
    xw2 = relu_xw(h1, w2_cat)
    h2 = rgcn_aggregate(adj, xw2, params["b_rgc2"])
    # decoder
    x = decode_embed(params["node_emb"], h2, params["w_dec"], params["b_dec"])

    # DistMult decoder: gathers/transposes are plain-JAX glue, reduce is Pallas
    s_t = jnp.take(x, triples[:, 0], axis=0).T
    p_t = jnp.take(params["relations"], triples[:, 1], axis=0).T
    o_t = jnp.take(x, triples[:, 2], axis=0).T
    scores = distmult_scores(s_t, p_t, o_t)[0]

    # Plain-l2 penalty: torch compute_penalty returns the *unscaled* sum
    # (0 when decoder_l2 == 0); the l2 coefficient is applied in the loss.
    if decoder_l2 == 0.0:
        penalty = jnp.float32(0.0)
    else:
        penalty = jnp.sum(params["relations"] ** 2)
    return scores, penalty


def reference_forward(params, adj, triples, decoder_l2=0.01):
    """Pure-JAX f32 reference of the same forward pass (for validation)."""
    A = adj.astype(jnp.float32)
    x = jnp.maximum(params["node_emb"] + params["node_emb_bias"], 0.0)
    x = x @ params["w_enc"] + params["b_enc"]
    x = jnp.einsum("rij,jk,rkl->il", A, x, params["w_rgc1"]) + params["b_rgc1"]
    x = jnp.maximum(x, 0.0)
    x = jnp.einsum("rij,jk,rkl->il", A, x, params["w_rgc2"]) + params["b_rgc2"]
    x = params["node_emb"] + (x @ params["w_dec"] + params["b_dec"])
    s = x[triples[:, 0]]
    p = params["relations"][triples[:, 1]]
    o = x[triples[:, 2]]
    scores = jnp.sum(s * p * o, axis=-1)
    if decoder_l2 == 0.0:
        penalty = jnp.float32(0.0)
    else:
        penalty = jnp.sum(params["relations"] ** 2)
    return scores, penalty


if __name__ == "__main__":
    key = jax.random.PRNGKey(0)
    # small but lane-aligned shapes; N=384 exercises the multi-row-tile path
    nnodes, nrel, nemb, nhid = 384, 3, 128, 128

    k_p, k_e, k_t = jax.random.split(key, 3)
    params = init_params(k_p, nnodes, nrel, nemb, nhid)

    # graph edges and query triples: (subject, predicate, object)
    n_edges, n_triples = 96, 16
    edges = jnp.stack(
        [
            jax.random.randint(jax.random.fold_in(k_e, 0), (n_edges,), 0, nnodes),
            jax.random.randint(jax.random.fold_in(k_e, 1), (n_edges,), 0, nrel),
            jax.random.randint(jax.random.fold_in(k_e, 2), (n_edges,), 0, nnodes),
        ],
        axis=1,
    )
    triples = jnp.stack(
        [
            jax.random.randint(jax.random.fold_in(k_t, 0), (n_triples,), 0, nnodes),
            jax.random.randint(jax.random.fold_in(k_t, 1), (n_triples,), 0, nrel),
            jax.random.randint(jax.random.fold_in(k_t, 2), (n_triples,), 0, nnodes),
        ],
        axis=1,
    )

    adj = build_adjacency(edges, nnodes, nrel)

    fwd = jax.jit(compression_relation_predictor_forward)
    scores, penalty = fwd(params, adj, triples)
    jax.block_until_ready((scores, penalty))

    ref_scores, ref_penalty = jax.jit(reference_forward)(params, adj, triples)
    assert scores.shape == (n_triples,)
    assert bool(jnp.all(jnp.isfinite(scores))) and bool(jnp.isfinite(penalty))
    # bf16 A / X@W with f32 accumulation: allow small relative deviation
    assert bool(jnp.allclose(scores, ref_scores, rtol=0.1, atol=1e-2))
    assert bool(jnp.allclose(penalty, ref_penalty, rtol=1e-5, atol=1e-6))
    print("KERNEL_OK")
</pallas_src>

<mosaic_0001>
module attributes {stable_mosaic.version = 11 : i64} {
  func.func @_rgcn_agg_kernel(%arg0: i32, %arg1: i32, %arg2: memref<1x128x384xbf16, #tpu.memory_space<vmem>>, %arg3: memref<384x128xbf16, #tpu.memory_space<vmem>>, %arg4: memref<1x128xf32, #tpu.memory_space<vmem>>, %arg5: memref<128x128xf32, #tpu.memory_space<vmem>>) attributes {dimension_semantics = [#tpu.dimension_semantics<parallel>, #tpu.dimension_semantics<arbitrary>], iteration_bounds = array<i64: 3, 7>, scalar_prefetch = 0 : i64, scratch_operands = 0 : i64, tpu.core_type = #tpu.core_type<tc>, window_params = [{transform_indices = @transform_0, window_bounds = array<i64: 1, 128, 384>}, {transform_indices = @transform_1, window_bounds = array<i64: 384, 128>}, {pipeline_mode = #tpu.pipeline_mode<synchronous>, transform_indices = @transform_2, window_bounds = array<i64: 1, 128>}, {transform_indices = @transform_3, window_bounds = array<i64: 128, 128>}]} {
    %c0_i32 = arith.constant 0 : i32
    %0 = arith.cmpi eq, %arg1, %c0_i32 : i32
    %1 = arith.extui %0 : i1 to i32
    %c0_i32_0 = arith.constant 0 : i32
    %2 = arith.cmpi ne, %1, %c0_i32_0 : i32
    scf.if %2 {
      %cst_10 = arith.constant 0.000000e+00 : f32
      %13 = vector.broadcast %cst_10 : f32 to vector<128x128xf32>
      %c0_11 = arith.constant 0 : index
      %c0_12 = arith.constant 0 : index
      %14 = vector.load %arg5[%c0_11, %c0_12] : memref<128x128xf32, #tpu.memory_space<vmem>>, vector<128x128xf32>
      tpu.vector_store %arg5[%c0_11, %c0_12], %13 {strides = array<i32>} : memref<128x128xf32, #tpu.memory_space<vmem>>, vector<128x128xf32>,
    } else {
    }
    %c0 = arith.constant 0 : index
    %c0_1 = arith.constant 0 : index
    %3 = vector.load %arg5[%c0, %c0_1] : memref<128x128xf32, #tpu.memory_space<vmem>>, vector<128x128xf32>
    %c0_2 = arith.constant 0 : index
    %c0_3 = arith.constant 0 : index
    %c0_4 = arith.constant 0 : index
    %4 = vector.load %arg2[%c0_2, %c0_3, %c0_4] : memref<1x128x384xbf16, #tpu.memory_space<vmem>>, vector<1x128x384xbf16>
    %5 = vector.shape_cast %4 : vector<1x128x384xbf16> to vector<128x384xbf16>
    %c0_5 = arith.constant 0 : index
    %c0_6 = arith.constant 0 : index
    %6 = vector.load %arg3[%c0_5, %c0_6] : memref<384x128xbf16, #tpu.memory_space<vmem>>, vector<384x128xbf16>
    %cst = arith.constant dense<0.000000e+00> : vector<128x128xf32>
    %7 = tpu.matmul %5, %6, %cst {dimension_numbers = #tpu.dot_dimension_numbers<[1], [0], [0], [1], [0, 0, 1, 1], [], []>} : vector<128x384xbf16>, vector<384x128xbf16>, vector<128x128xf32> -> vector<128x128xf32>
    %8 = arith.addf %3, %7 : vector<128x128xf32>
    %c0_7 = arith.constant 0 : index
    %c0_8 = arith.constant 0 : index
    %9 = vector.load %arg5[%c0_7, %c0_8] : memref<128x128xf32, #tpu.memory_space<vmem>>, vector<128x128xf32>
    tpu.vector_store %arg5[%c0_7, %c0_8], %8 {strides = array<i32>} : memref<128x128xf32, #tpu.memory_space<vmem>>, vector<128x128xf32>,
    %c6_i32 = arith.constant 6 : i32
    %10 = arith.cmpi eq, %arg1, %c6_i32 : i32
    %11 = arith.extui %10 : i1 to i32
    %c0_i32_9 = arith.constant 0 : i32
    %12 = arith.cmpi ne, %11, %c0_i32_9 : i32
    scf.if %12 {
      %c0_10 = arith.constant 0 : index
      %c0_11 = arith.constant 0 : index
      %13 = vector.load %arg5[%c0_10, %c0_11] : memref<128x128xf32, #tpu.memory_space<vmem>>, vector<128x128xf32>
      %c0_12 = arith.constant 0 : index
      %c0_13 = arith.constant 0 : index
      %14 = vector.load %arg4[%c0_12, %c0_13] : memref<1x128xf32, #tpu.memory_space<vmem>>, vector<1x128xf32>
      %15 = vector.broadcast %14 : vector<1x128xf32> to vector<128x128xf32>
      %16 = arith.addf %13, %15 : vector<128x128xf32>
      %c0_14 = arith.constant 0 : index
      %c0_15 = arith.constant 0 : index
      %17 = vector.load %arg5[%c0_14, %c0_15] : memref<128x128xf32, #tpu.memory_space<vmem>>, vector<128x128xf32>
      tpu.vector_store %arg5[%c0_14, %c0_15], %16 {strides = array<i32>} : memref<128x128xf32, #tpu.memory_space<vmem>>, vector<128x128xf32>,
    } else {
    }
    return
  }
  func.func @transform_0(%arg0: i32, %arg1: i32) -> (i32, i32, i32) {
    %c0_i32 = arith.constant 0 : i32
    %c0_i32_0 = arith.constant 0 : i32
    return %arg1, %arg0, %c0_i32 : i32, i32, i32
  }
  func.func @transform_1(%arg0: i32, %arg1: i32) -> (i32, i32) {
    %c0_i32 = arith.constant 0 : i32
    %c0_i32_0 = arith.constant 0 : i32
    return %c0_i32, %arg1 : i32, i32
  }
  func.func @transform_2(%arg0: i32, %arg1: i32) -> (i32, i32) {
    %c0_i32 = arith.constant 0 : i32
    %c0_i32_0 = arith.constant 0 : i32
    %c0_i32_1 = arith.constant 0 : i32
    return %c0_i32, %c0_i32_0 : i32, i32
  }
  func.func @transform_3(%arg0: i32, %arg1: i32) -> (i32, i32) {
    %c0_i32 = arith.constant 0 : i32
    %c0_i32_0 = arith.constant 0 : i32
    return %arg0, %c0_i32 : i32, i32
  }
}

module attributes {stable_mosaic.version = 11 : i64} {
  func.func @_encode_xw_kernel(%arg0: i32, %arg1: memref<128x128xf32, #tpu.memory_space<vmem>>, %arg2: memref<1x128xf32, #tpu.memory_space<vmem>>, %arg3: memref<128x128xf32, #tpu.memory_space<vmem>>, %arg4: memref<1x128xf32, #tpu.memory_space<vmem>>, %arg5: memref<128x896xf32, #tpu.memory_space<vmem>>, %arg6: memref<128x896xbf16, #tpu.memory_space<vmem>>) attributes {dimension_semantics = [#tpu.dimension_semantics<parallel>], iteration_bounds = array<i64: 3>, scalar_prefetch = 0 : i64, scratch_operands = 0 : i64, tpu.core_type = #tpu.core_type<tc>, window_params = [{transform_indices = @transform_0, window_bounds = array<i64: 128, 128>}, {pipeline_mode = #tpu.pipeline_mode<synchronous>, transform_indices = @transform_1, window_bounds = array<i64: 1, 128>}, {pipeline_mode = #tpu.pipeline_mode<synchronous>, transform_indices = @transform_2, window_bounds = array<i64: 128, 128>}, {pipeline_mode = #tpu.pipeline_mode<synchronous>, transform_indices = @transform_3, window_bounds = array<i64: 1, 128>}, {pipeline_mode = #tpu.pipeline_mode<synchronous>, transform_indices = @transform_4, window_bounds = array<i64: 128, 896>}, {transform_indices = @transform_5, window_bounds = array<i64: 128, 896>}]} {
    %c0 = arith.constant 0 : index
    %c0_0 = arith.constant 0 : index
    %0 = vector.load %arg1[%c0, %c0_0] : memref<128x128xf32, #tpu.memory_space<vmem>>, vector<128x128xf32>
    %c0_1 = arith.constant 0 : index
    %c0_2 = arith.constant 0 : index
    %1 = vector.load %arg2[%c0_1, %c0_2] : memref<1x128xf32, #tpu.memory_space<vmem>>, vector<1x128xf32>
    %2 = vector.broadcast %1 : vector<1x128xf32> to vector<128x128xf32>
    %3 = arith.addf %0, %2 : vector<128x128xf32>
    %cst = arith.constant 0.000000e+00 : f32
    %4 = vector.broadcast %cst : f32 to vector<128x128xf32>
    %5 = arith.maximumf %3, %4 : vector<128x128xf32>
    %c0_3 = arith.constant 0 : index
    %c0_4 = arith.constant 0 : index
    %6 = vector.load %arg3[%c0_3, %c0_4] : memref<128x128xf32, #tpu.memory_space<vmem>>, vector<128x128xf32>
    %cst_5 = arith.constant dense<0.000000e+00> : vector<128x128xf32>
    %7 = tpu.matmul %5, %6, %cst_5 {dimension_numbers = #tpu.dot_dimension_numbers<[1], [0], [0], [1], [0, 0, 1, 1], [], []>} : vector<128x128xf32>, vector<128x128xf32>, vector<128x128xf32> -> vector<128x128xf32>
    %c0_6 = arith.constant 0 : index
    %c0_7 = arith.constant 0 : index
    %8 = vector.load %arg4[%c0_6, %c0_7] : memref<1x128xf32, #tpu.memory_space<vmem>>, vector<1x128xf32>
    %9 = vector.broadcast %8 : vector<1x128xf32> to vector<128x128xf32>
    %10 = arith.addf %7, %9 : vector<128x128xf32>
    %c0_8 = arith.constant 0 : index
    %c0_9 = arith.constant 0 : index
    %11 = vector.load %arg5[%c0_8, %c0_9] : memref<128x896xf32, #tpu.memory_space<vmem>>, vector<128x896xf32>
    %cst_10 = arith.constant dense<0.000000e+00> : vector<128x896xf32>
    %12 = tpu.matmul %10, %11, %cst_10 {dimension_numbers = #tpu.dot_dimension_numbers<[1], [0], [0], [1], [0, 0, 1, 1], [], []>} : vector<128x128xf32>, vector<128x896xf32>, vector<128x896xf32> -> vector<128x896xf32>
    %13 = arith.truncf %12 : vector<128x896xf32> to vector<128x896xbf16>
    %c0_11 = arith.constant 0 : index
    %c0_12 = arith.constant 0 : index
    %14 = vector.load %arg6[%c0_11, %c0_12] : memref<128x896xbf16, #tpu.memory_space<vmem>>, vector<128x896xbf16>
    tpu.vector_store %arg6[%c0_11, %c0_12], %13 {strides = array<i32>} : memref<128x896xbf16, #tpu.memory_space<vmem>>, vector<128x896xbf16>,
    return
  }
  func.func @transform_0(%arg0: i32) -> (i32, i32) {
    %c0_i32 = arith.constant 0 : i32
    %c0_i32_0 = arith.constant 0 : i32
    return %arg0, %c0_i32 : i32, i32
  }
  func.func @transform_1(%arg0: i32) -> (i32, i32) {
    %c0_i32 = arith.constant 0 : i32
    %c0_i32_0 = arith.constant 0 : i32
    %c0_i32_1 = arith.constant 0 : i32
    return %c0_i32, %c0_i32_0 : i32, i32
  }
  func.func @transform_2(%arg0: i32) -> (i32, i32) {
    %c0_i32 = arith.constant 0 : i32
    %c0_i32_0 = arith.constant 0 : i32
    %c0_i32_1 = arith.constant 0 : i32
    return %c0_i32, %c0_i32_0 : i32, i32
  }
  func.func @transform_3(%arg0: i32) -> (i32, i32) {
    %c0_i32 = arith.constant 0 : i32
    %c0_i32_0 = arith.constant 0 : i32
    %c0_i32_1 = arith.constant 0 : i32
    return %c0_i32, %c0_i32_0 : i32, i32
  }
  func.func @transform_4(%arg0: i32) -> (i32, i32) {
    %c0_i32 = arith.constant 0 : i32
    %c0_i32_0 = arith.constant 0 : i32
    %c0_i32_1 = arith.constant 0 : i32
    return %c0_i32, %c0_i32_0 : i32, i32
  }
  func.func @transform_5(%arg0: i32) -> (i32, i32) {
    %c0_i32 = arith.constant 0 : i32
    %c0_i32_0 = arith.constant 0 : i32
    return %arg0, %c0_i32 : i32, i32
  }
}

module attributes {stable_mosaic.version = 11 : i64} {
  func.func @_relu_xw_kernel(%arg0: i32, %arg1: memref<128x128xf32, #tpu.memory_space<vmem>>, %arg2: memref<128x896xf32, #tpu.memory_space<vmem>>, %arg3: memref<128x896xbf16, #tpu.memory_space<vmem>>) attributes {dimension_semantics = [#tpu.dimension_semantics<parallel>], iteration_bounds = array<i64: 3>, scalar_prefetch = 0 : i64, scratch_operands = 0 : i64, tpu.core_type = #tpu.core_type<tc>, window_params = [{transform_indices = @transform_0, window_bounds = array<i64: 128, 128>}, {pipeline_mode = #tpu.pipeline_mode<synchronous>, transform_indices = @transform_1, window_bounds = array<i64: 128, 896>}, {transform_indices = @transform_2, window_bounds = array<i64: 128, 896>}]} {
    %c0 = arith.constant 0 : index
    %c0_0 = arith.constant 0 : index
    %0 = vector.load %arg1[%c0, %c0_0] : memref<128x128xf32, #tpu.memory_space<vmem>>, vector<128x128xf32>
    %cst = arith.constant 0.000000e+00 : f32
    %1 = vector.broadcast %cst : f32 to vector<128x128xf32>
    %2 = arith.maximumf %0, %1 : vector<128x128xf32>
    %c0_1 = arith.constant 0 : index
    %c0_2 = arith.constant 0 : index
    %3 = vector.load %arg2[%c0_1, %c0_2] : memref<128x896xf32, #tpu.memory_space<vmem>>, vector<128x896xf32>
    %cst_3 = arith.constant dense<0.000000e+00> : vector<128x896xf32>
    %4 = tpu.matmul %2, %3, %cst_3 {dimension_numbers = #tpu.dot_dimension_numbers<[1], [0], [0], [1], [0, 0, 1, 1], [], []>} : vector<128x128xf32>, vector<128x896xf32>, vector<128x896xf32> -> vector<128x896xf32>
    %5 = arith.truncf %4 : vector<128x896xf32> to vector<128x896xbf16>
    %c0_4 = arith.constant 0 : index
    %c0_5 = arith.constant 0 : index
    %6 = vector.load %arg3[%c0_4, %c0_5] : memref<128x896xbf16, #tpu.memory_space<vmem>>, vector<128x896xbf16>
    tpu.vector_store %arg3[%c0_4, %c0_5], %5 {strides = array<i32>} : memref<128x896xbf16, #tpu.memory_space<vmem>>, vector<128x896xbf16>,
    return
  }
  func.func @transform_0(%arg0: i32) -> (i32, i32) {
    %c0_i32 = arith.constant 0 : i32
    %c0_i32_0 = arith.constant 0 : i32
    return %arg0, %c0_i32 : i32, i32
  }
  func.func @transform_1(%arg0: i32) -> (i32, i32) {
    %c0_i32 = arith.constant 0 : i32
    %c0_i32_0 = arith.constant 0 : i32
    %c0_i32_1 = arith.constant 0 : i32
    return %c0_i32, %c0_i32_0 : i32, i32
  }
  func.func @transform_2(%arg0: i32) -> (i32, i32) {
    %c0_i32 = arith.constant 0 : i32
    %c0_i32_0 = arith.constant 0 : i32
    return %arg0, %c0_i32 : i32, i32
  }
}

module attributes {stable_mosaic.version = 11 : i64} {
  func.func @_decode_kernel(%arg0: i32, %arg1: memref<128x128xf32, #tpu.memory_space<vmem>>, %arg2: memref<128x128xf32, #tpu.memory_space<vmem>>, %arg3: memref<128x128xf32, #tpu.memory_space<vmem>>, %arg4: memref<1x128xf32, #tpu.memory_space<vmem>>, %arg5: memref<128x128xf32, #tpu.memory_space<vmem>>) attributes {dimension_semantics = [#tpu.dimension_semantics<parallel>], iteration_bounds = array<i64: 3>, scalar_prefetch = 0 : i64, scratch_operands = 0 : i64, tpu.core_type = #tpu.core_type<tc>, window_params = [{transform_indices = @transform_0, window_bounds = array<i64: 128, 128>}, {transform_indices = @transform_1, window_bounds = array<i64: 128, 128>}, {pipeline_mode = #tpu.pipeline_mode<synchronous>, transform_indices = @transform_2, window_bounds = array<i64: 128, 128>}, {pipeline_mode = #tpu.pipeline_mode<synchronous>, transform_indices = @transform_3, window_bounds = array<i64: 1, 128>}, {transform_indices = @transform_4, window_bounds = array<i64: 128, 128>}]} {
    %c0 = arith.constant 0 : index
    %c0_0 = arith.constant 0 : index
    %0 = vector.load %arg1[%c0, %c0_0] : memref<128x128xf32, #tpu.memory_space<vmem>>, vector<128x128xf32>
    %c0_1 = arith.constant 0 : index
    %c0_2 = arith.constant 0 : index
    %1 = vector.load %arg2[%c0_1, %c0_2] : memref<128x128xf32, #tpu.memory_space<vmem>>, vector<128x128xf32>
    %c0_3 = arith.constant 0 : index
    %c0_4 = arith.constant 0 : index
    %2 = vector.load %arg3[%c0_3, %c0_4] : memref<128x128xf32, #tpu.memory_space<vmem>>, vector<128x128xf32>
    %cst = arith.constant dense<0.000000e+00> : vector<128x128xf32>
    %3 = tpu.matmul %1, %2, %cst {dimension_numbers = #tpu.dot_dimension_numbers<[1], [0], [0], [1], [0, 0, 1, 1], [], []>} : vector<128x128xf32>, vector<128x128xf32>, vector<128x128xf32> -> vector<128x128xf32>
    %c0_5 = arith.constant 0 : index
    %c0_6 = arith.constant 0 : index
    %4 = vector.load %arg4[%c0_5, %c0_6] : memref<1x128xf32, #tpu.memory_space<vmem>>, vector<1x128xf32>
    %5 = vector.broadcast %4 : vector<1x128xf32> to vector<128x128xf32>
    %6 = arith.addf %3, %5 : vector<128x128xf32>
    %7 = arith.addf %0, %6 : vector<128x128xf32>
    %c0_7 = arith.constant 0 : index
    %c0_8 = arith.constant 0 : index
    %8 = vector.load %arg5[%c0_7, %c0_8] : memref<128x128xf32, #tpu.memory_space<vmem>>, vector<128x128xf32>
    tpu.vector_store %arg5[%c0_7, %c0_8], %7 {strides = array<i32>} : memref<128x128xf32, #tpu.memory_space<vmem>>, vector<128x128xf32>,
    return
  }
  func.func @transform_0(%arg0: i32) -> (i32, i32) {
    %c0_i32 = arith.constant 0 : i32
    %c0_i32_0 = arith.constant 0 : i32
    return %arg0, %c0_i32 : i32, i32
  }
  func.func @transform_1(%arg0: i32) -> (i32, i32) {
    %c0_i32 = arith.constant 0 : i32
    %c0_i32_0 = arith.constant 0 : i32
    return %arg0, %c0_i32 : i32, i32
  }
  func.func @transform_2(%arg0: i32) -> (i32, i32) {
    %c0_i32 = arith.constant 0 : i32
    %c0_i32_0 = arith.constant 0 : i32
    %c0_i32_1 = arith.constant 0 : i32
    return %c0_i32, %c0_i32_0 : i32, i32
  }
  func.func @transform_3(%arg0: i32) -> (i32, i32) {
    %c0_i32 = arith.constant 0 : i32
    %c0_i32_0 = arith.constant 0 : i32
    %c0_i32_1 = arith.constant 0 : i32
    return %c0_i32, %c0_i32_0 : i32, i32
  }
  func.func @transform_4(%arg0: i32) -> (i32, i32) {
    %c0_i32 = arith.constant 0 : i32
    %c0_i32_0 = arith.constant 0 : i32
    return %arg0, %c0_i32 : i32, i32
  }
}

module attributes {stable_mosaic.version = 11 : i64} {
  func.func @_distmult_kernel(%arg0: i32, %arg1: memref<128x16xf32, #tpu.memory_space<vmem>>, %arg2: memref<128x16xf32, #tpu.memory_space<vmem>>, %arg3: memref<128x16xf32, #tpu.memory_space<vmem>>, %arg4: memref<1x16xf32, #tpu.memory_space<vmem>>) attributes {dimension_semantics = [#tpu.dimension_semantics<arbitrary>], iteration_bounds = array<i64: 1>, scalar_prefetch = 0 : i64, scratch_operands = 0 : i64, tpu.core_type = #tpu.core_type<tc>, window_params = [{pipeline_mode = #tpu.pipeline_mode<synchronous>, transform_indices = @transform_0, window_bounds = array<i64: 128, 16>}, {pipeline_mode = #tpu.pipeline_mode<synchronous>, transform_indices = @transform_1, window_bounds = array<i64: 128, 16>}, {pipeline_mode = #tpu.pipeline_mode<synchronous>, transform_indices = @transform_2, window_bounds = array<i64: 128, 16>}, {pipeline_mode = #tpu.pipeline_mode<synchronous>, transform_indices = @transform_3, window_bounds = array<i64: 1, 16>}]} {
    %c0 = arith.constant 0 : index
    %c0_0 = arith.constant 0 : index
    %0 = vector.load %arg1[%c0, %c0_0] : memref<128x16xf32, #tpu.memory_space<vmem>>, vector<128x16xf32>
    %c0_1 = arith.constant 0 : index
    %c0_2 = arith.constant 0 : index
    %1 = vector.load %arg2[%c0_1, %c0_2] : memref<128x16xf32, #tpu.memory_space<vmem>>, vector<128x16xf32>
    %2 = arith.mulf %0, %1 : vector<128x16xf32>
    %c0_3 = arith.constant 0 : index
    %c0_4 = arith.constant 0 : index
    %3 = vector.load %arg3[%c0_3, %c0_4] : memref<128x16xf32, #tpu.memory_space<vmem>>, vector<128x16xf32>
    %4 = arith.mulf %2, %3 : vector<128x16xf32>
    %cst = arith.constant dense<0.000000e+00> : vector<16xf32>
    %5 = vector.multi_reduction <add>, %4, %cst [0] : vector<128x16xf32> to vector<16xf32>
    %6 = vector.shape_cast %5 : vector<16xf32> to vector<1x16xf32>
    %c0_5 = arith.constant 0 : index
    %c0_6 = arith.constant 0 : index
    %7 = vector.load %arg4[%c0_5, %c0_6] : memref<1x16xf32, #tpu.memory_space<vmem>>, vector<1x16xf32>
    tpu.vector_store %arg4[%c0_5, %c0_6], %6 {strides = array<i32>} : memref<1x16xf32, #tpu.memory_space<vmem>>, vector<1x16xf32>,
    return
  }
  func.func @transform_0(%arg0: i32) -> (i32, i32) {
    %c0_i32 = arith.constant 0 : i32
    %c0_i32_0 = arith.constant 0 : i32
    %c0_i32_1 = arith.constant 0 : i32
    return %c0_i32, %c0_i32_0 : i32, i32
  }
  func.func @transform_1(%arg0: i32) -> (i32, i32) {
    %c0_i32 = arith.constant 0 : i32
    %c0_i32_0 = arith.constant 0 : i32
    %c0_i32_1 = arith.constant 0 : i32
    return %c0_i32, %c0_i32_0 : i32, i32
  }
  func.func @transform_2(%arg0: i32) -> (i32, i32) {
    %c0_i32 = arith.constant 0 : i32
    %c0_i32_0 = arith.constant 0 : i32
    %c0_i32_1 = arith.constant 0 : i32
    return %c0_i32, %c0_i32_0 : i32, i32
  }
  func.func @transform_3(%arg0: i32) -> (i32, i32) {
    %c0_i32 = arith.constant 0 : i32
    %c0_i32_0 = arith.constant 0 : i32
    %c0_i32_1 = arith.constant 0 : i32
    return %c0_i32, %c0_i32_0 : i32, i32
  }
}

</mosaic_0001>

<llo_original>
// kernel: compression_relation_predictor_forward.7
$region0: #{compression_relation_predictor_forward.7}
  #allocation0 [shape = 'u32[]', space=smem, size = 0x4, offset = 0x4, fixed_abs, tag = 'smem constant byte address 0x4 - core index']
  #allocation1 [shape = 'u32[144,128]{1,0:T(1,128)}', space=vmem, size = 0x12000, scoped, tag = 'internal scratch']
  %s0 = inlined_call_operand.vmem [shape: bf16[7,384,384], index: 0, kind: input, shape index: {}]
  %s1 = inlined_call_operand.vmem [shape: bf16[384,896], index: 1, kind: input, shape index: {}]
  %s2 = inlined_call_operand.vmem [shape: f32[1,128], index: 2, kind: input, shape index: {}]
  %s3 = inlined_call_operand.vmem [shape: f32[384,128], index: 3, kind: output, shape index: {}]
  %s4 = sld [smem:[#allocation0]]
  $region94: #{compression_relation_predictor_forward.7} parent=0
    _
  %s6 = ssub.s32 1, %s4
  %s7 = scalar_select 0, %s6, %s4
  $region1: #{compression_relation_predictor_forward.7} parent=0
    #allocation2 [shape = 'u8[196608]{0}', space=vmem, size = 0x30000, scoped, tag = 'input window, operand 1']
    loop: start=0, step=1, limit=23
    $region2: #{compression_relation_predictor_forward.7} parent=1 // loop_pre_header
      _
    $region3: #{compression_relation_predictor_forward.7} parent=1 // loop_header
      %s9 = sphi 0, %s13
      %p10 = scmp.ge.s32.totalorder %s9, 23
      %s16 = sphi 0, %s28
      %s17 = sphi 0, %s24
      %s18 = sphi 0, %s16
      %s19 = sphi 0, %s17
      %s20 = sphi 0, %s18
      %s21 = sphi 0, %s19
      %s33 = sphi 0, %s35
      %s36 = sphi 0, %s33
      %s37 = sphi 0, %s36
      %s53 = sphi 0, %s37
      %s59 = sphi 0, %s61
      %s62 = sphi 0, %s59
      %s63 = sphi 0, %s62
      %s79 = sphi 0, %s63
      %s83 = sphi 0, %s83
      %s85 = sphi 0, %s83
      %s86 = sphi 0, %s85
      %s100 = sphi 0, %s86
      %s106 = sphi 0, %s108
      %s109 = sphi 0, %s106
      %s110 = sphi 0, %s109
      %s126 = sphi 0, %s110
    $region4: #{compression_relation_predictor_forward.7} parent=1 // loop_header_branch
      %12 = sbr.rel (%p10) target = $region8
    $region5: #{compression_relation_predictor_forward.7} parent=1 // loop_body
      %s14 = ssub.s32 %s9, 1
      %s15 = ssub.s32 %s9, 2
      %s22 = sadd.s32 1, %s17
      %p23 = scmp.ge.s32.totalorder %s22, 7
      %s24 = scalar_select %p23, 0, %s22
      %s25 = sadd.s32 1, %s16
      %s26 = scalar_select %p23, %s25, %s16
      %p27 = scmp.ge.s32.totalorder %s26, 3
      %s28 = scalar_select %p27, 0, %s26
      %s29 = ssub.s32 %s17, %s24
      %s30 = ssub.s32 %s16, %s28
      %s31 = sor.u32 %s29, %s30
      %p32 = scmp.eq.s32.totalorder %s31, 0
      %s34 = sadd.s32 %s33, 1
      %s35 = scalar_select %p32, %s33, %s34
      %p38 = pneg %p32
      %p39 = scmp.eq.s32.totalorder %s9, 20
      %p40 = por %p38, %p39
      %p41 = scmp.ne.s32.totalorder %s33, %s36
      %p42 = scmp.eq.s32.totalorder %s9, 0
      %p43 = por %p41, %p42
      %p44 = scmp.ne.s32.totalorder %s33, %s36
      %p45 = scmp.eq.s32.totalorder %s14, 20
      %p46 = por %p44, %p45
      %p47 = scmp.ne.s32.totalorder %s36, %s37
      %p48 = scmp.eq.s32.totalorder %s14, 0
      %p49 = por %p47, %p48
      %p50 = scmp.ne.s32.totalorder %s36, %s37
      %p51 = scmp.eq.s32.totalorder %s15, 20
      %p52 = por %p50, %p51
      %p54 = scmp.ne.s32.totalorder %s37, %s53
      %p55 = scmp.eq.s32.totalorder %s15, 0
      %p56 = por %p54, %p55
      %s57 = ssub.s32 %s17, %s24
      %p58 = scmp.eq.s32.totalorder %s57, 0
      %s60 = sadd.s32 %s59, 1
      %s61 = scalar_select %p58, %s59, %s60
      %p64 = pneg %p58
      %p65 = scmp.eq.s32.totalorder %s9, 20
      %p66 = por %p64, %p65
      %p67 = scmp.ne.s32.totalorder %s59, %s62
      %p68 = scmp.eq.s32.totalorder %s9, 0
      %p69 = por %p67, %p68
      %p70 = scmp.ne.s32.totalorder %s59, %s62
      %p71 = scmp.eq.s32.totalorder %s14, 20
      %p72 = por %p70, %p71
      %p73 = scmp.ne.s32.totalorder %s62, %s63
      %p74 = scmp.eq.s32.totalorder %s14, 0
      %p75 = por %p73, %p74
      %p76 = scmp.ne.s32.totalorder %s62, %s63
      %p77 = scmp.eq.s32.totalorder %s15, 20
      %p78 = por %p76, %p77
      %p80 = scmp.ne.s32.totalorder %s63, %s79
      %p81 = scmp.eq.s32.totalorder %s15, 0
      %p82 = por %p80, %p81
      %s84 = sadd.s32 %s83, 1
      %p87 = scmp.eq.s32.totalorder %s9, 20
      %p88 = scmp.ne.s32.totalorder %s83, %s85
      %p89 = scmp.eq.s32.totalorder %s9, 0
      %p90 = por %p88, %p89
      %p91 = scmp.ne.s32.totalorder %s83, %s85
      %p92 = scmp.eq.s32.totalorder %s14, 20
      %p93 = por %p91, %p92
      %p94 = scmp.ne.s32.totalorder %s85, %s86
      %p95 = scmp.eq.s32.totalorder %s14, 0
      %p96 = por %p94, %p95
      %p97 = scmp.ne.s32.totalorder %s85, %s86
      %p98 = scmp.eq.s32.totalorder %s15, 20
      %p99 = por %p97, %p98
      %p101 = scmp.ne.s32.totalorder %s86, %s100
      %p102 = scmp.eq.s32.totalorder %s15, 0
      %p103 = por %p101, %p102
      %s104 = ssub.s32 %s16, %s28
      %p105 = scmp.eq.s32.totalorder %s104, 0
      %s107 = sadd.s32 %s106, 1
      %s108 = scalar_select %p105, %s106, %s107
      %p111 = pneg %p105
      %p112 = scmp.eq.s32.totalorder %s9, 20
      %p113 = por %p111, %p112
      %p114 = scmp.ne.s32.totalorder %s106, %s109
      %p115 = scmp.eq.s32.totalorder %s9, 0
      %p116 = por %p114, %p115
      %p117 = scmp.ne.s32.totalorder %s106, %s109
      %p118 = scmp.eq.s32.totalorder %s14, 20
      %p119 = por %p117, %p118
      %p120 = scmp.ne.s32.totalorder %s109, %s110
      %p121 = scmp.eq.s32.totalorder %s14, 0
      %p122 = por %p120, %p121
      %p123 = scmp.ne.s32.totalorder %s109, %s110
      %p124 = scmp.eq.s32.totalorder %s15, 20
      %p125 = por %p123, %p124
      %p127 = scmp.ne.s32.totalorder %s110, %s126
      %p128 = scmp.eq.s32.totalorder %s15, 0
      %p129 = por %p127, %p128
      %p130 = scmp.le.s32.totalorder 1, %s9
      %p131 = scmp.lt.s32.totalorder %s9, 22
      %p132 = pnand %p130, %p131
      %p133 = pneg %p132
      // Predicated region
      $region9: #{compression_relation_predictor_forward.7} parent=5 // pred_check
        _
      $region10: #{compression_relation_predictor_forward.7} parent=5 // pred_check_branch
        %135 = sbr.rel (%p132) target = $region12
      $region11: #{compression_relation_predictor_forward.7} parent=5 // pred_region
        %s136 = ssub.s32 %s9, 1
        // Predicated region
        $region13: #{compression_relation_predictor_forward.7} parent=11 // pred_check
          %p137 = pneg %p96
        $region14: #{compression_relation_predictor_forward.7} parent=11 // pred_check_branch
          %139 = sbr.rel (%p137) target = $region16
        $region15: #{compression_relation_predictor_forward.7} parent=11 // pred_region
          _
        $region16: #{compression_relation_predictor_forward.7} parent=11 // pred_fallthru
          _
      $region12: #{compression_relation_predictor_forward.7} parent=5 // pred_fallthru
        _
      %p140 = scmp.lt.s32.totalorder %s9, 21
      // Predicated region
      $region17: #{compression_relation_predictor_forward.7} parent=5 // pred_check
        %p141 = pneg %p140
      $region18: #{compression_relation_predictor_forward.7} parent=5 // pred_check_branch
        %143 = sbr.rel (%p141) target = $region20
      $region19: #{compression_relation_predictor_forward.7} parent=5 // pred_region
        // Predicated region
        $region21: #{compression_relation_predictor_forward.7} parent=19 // pred_check
          %p144 = pneg %p43
        $region22: #{compression_relation_predictor_forward.7} parent=19 // pred_check_branch
          %146 = sbr.rel (%p144) target = $region24
        $region23: #{compression_relation_predictor_forward.7} parent=19 // pred_region
          %s147 = smul.u32 16, %s16
          %p148 = scmp.lt.s32.totalorder %s17, 6
          %s149 = scalar_select %p148, %s17, 6
          %p150 = scmp.lt.s32.totalorder %s147, 47
          %s151 = scalar_select %p150, %s147, 47
          %s152 = smul.addr %s151, 3
          %s153 = smul.addr %s149, 144
          %s154 = sadd.s32 %s152, %s153
          %s155 = smul.addr %s154, 4
          %s156 = scalar_lea.vmem %s0, %s155
          %s157 = smul.u32 16, %s16
        $region24: #{compression_relation_predictor_forward.7} parent=19 // pred_fallthru
          _
        // Predicated region
        $region25: #{compression_relation_predictor_forward.7} parent=19 // pred_check
          %p158 = pneg %p69
        $region26: #{compression_relation_predictor_forward.7} parent=19 // pred_check_branch
          %160 = sbr.rel (%p158) target = $region28
        $region27: #{compression_relation_predictor_forward.7} parent=19 // pred_region
          %s161 = sand.u32 %s59, 1
          %s162 = sand.u32 %s59, 1
          %s163 = smul.addr %s162, 192
          %s164 = scalar_lea.vmem [#allocation2], %s163
          %s165 = smul.addr %s17, 4
          %s166 = scalar_lea.vmem %s1, %s165
          // Predicated region
          $region29: #{compression_relation_predictor_forward.7} parent=27 // pred_check
            _
          $region30: #{compression_relation_predictor_forward.7} parent=27 // pred_check_branch
            %168 = sbr.rel (0) target = $region32
          $region31: #{compression_relation_predictor_forward.7} parent=27 // pred_region
            // Predicated region
            $region33: #{compression_relation_predictor_forward.7} parent=31 // pred_check
              _
            $region34: #{compression_relation_predictor_forward.7} parent=31 // pred_check_branch
              %170 = sbr.rel target = $region36
            $region35: #{compression_relation_predictor_forward.7} parent=31 // pred_region
              // Predicated region
              $region48: #{compression_relation_predictor_forward.7} parent=35 // pred_check
                _
              $region49: #{compression_relation_predictor_forward.7} parent=35 // pred_check_branch
                %279 = sbr.rel (0) target = $region51
              $region50: #{compression_relation_predictor_forward.7} parent=35 // pred_region
                loop: start=0, step=1, limit=1
                $region52: #{compression_relation_predictor_forward.7} parent=50 // loop_pre_header
                  _
                $region53: #{compression_relation_predictor_forward.7} parent=50 // loop_header
                  %s281 = sphi 0, %s285
                  %p282 = scmp.ge.s32.totalorder %s281, 1
                  %s286 = sphi %s166, %s166
                  %s287 = sphi %s164, %s164
                $region54: #{compression_relation_predictor_forward.7} parent=50 // loop_header_branch
                  %284 = sbr.rel (%p282) target = $region58
                $region55: #{compression_relation_predictor_forward.7} parent=50 // loop_body
                  _
                $region56: #{compression_relation_predictor_forward.7} parent=50 // loop_footer
                  %s285 = sadd.s32 1, %s281
                $region57: #{compression_relation_predictor_forward.7} parent=50 // loop_footer_branch
                  %280 = sbr.rel target = $region53
                $region58: #{compression_relation_predictor_forward.7} parent=50 // loop_exit
                  _
                loop: start=0, step=1, limit=1
                $region59: #{compression_relation_predictor_forward.7} parent=50 // loop_pre_header
                  _
                $region60: #{compression_relation_predictor_forward.7} parent=50 // loop_header
                  %s290 = sphi 0, %s294
                  %p291 = scmp.ge.s32.totalorder %s290, 1
                  %s295 = sphi %s166, %s166
                  %s296 = sphi %s164, %s164
                $region61: #{compression_relation_predictor_forward.7} parent=50 // loop_header_branch
                  %293 = sbr.rel (%p291) target = $region65
                $region62: #{compression_relation_predictor_forward.7} parent=50 // loop_body
                  %v297 = vld [vmem:[%s295] sm:$0xf]
                  %298 = vst [vmem:[%s296] sm:$0xf] %v297
                  %v299 = vld [vmem:[%s295 + $0x1c] sm:$0xf]
                  %300 = vst [vmem:[%s296 + $0x4] sm:$0xf] %v299
                  %v301 = vld [vmem:[%s295 + $0x38] sm:$0xf]
                  %302 = vst [vmem:[%s296 + $0x8] sm:$0xf] %v301
                  %v303 = vld [vmem:[%s295 + $0x54] sm:$0xf]
                  %304 = vst [vmem:[%s296 + $0xc] sm:$0xf] %v303
                  %v305 = vld [vmem:[%s295 + $0x70] sm:$0xf]
                  %306 = vst [vmem:[%s296 + $0x10] sm:$0xf] %v305
                  %v307 = vld [vmem:[%s295 + $0x8c] sm:$0xf]
                  %308 = vst [vmem:[%s296 + $0x14] sm:$0xf] %v307
                  %v309 = vld [vmem:[%s295 + $0xa8] sm:$0xf]
                  %310 = vst [vmem:[%s296 + $0x18] sm:$0xf] %v309
                  %v311 = vld [vmem:[%s295 + $0xc4] sm:$0xf]
                  %312 = vst [vmem:[%s296 + $0x1c] sm:$0xf] %v311
                  %v313 = vld [vmem:[%s295 + $0xe0] sm:$0xf]
                  %314 = vst [vmem:[%s296 + $0x20] sm:$0xf] %v313
                  %v315 = vld [vmem:[%s295 + $0xfc] sm:$0xf]
                  %316 = vst [vmem:[%s296 + $0x24] sm:$0xf] %v315
                  %v317 = vld [vmem:[%s295 + $0x118] sm:$0xf]
                  %318 = vst [vmem:[%s296 + $0x28] sm:$0xf] %v317
                  %v319 = vld [vmem:[%s295 + $0x134] sm:$0xf]
                  %320 = vst [vmem:[%s296 + $0x2c] sm:$0xf] %v319
                  %v321 = vld [vmem:[%s295 + $0x150] sm:$0xf]
                  %322 = vst [vmem:[%s296 + $0x30] sm:$0xf] %v321
                  %v323 = vld [vmem:[%s295 + $0x16c] sm:$0xf]
                  %324 = vst [vmem:[%s296 + $0x34] sm:$0xf] %v323
                  %v325 = vld [vmem:[%s295 + $0x188] sm:$0xf]
                  %326 = vst [vmem:[%s296 + $0x38] sm:$0xf] %v325
                  %v327 = vld [vmem:[%s295 + $0x1a4] sm:$0xf]
                  %328 = vst [vmem:[%s296 + $0x3c] sm:$0xf] %v327
                  %v329 = vld [vmem:[%s295 + $0x1c0] sm:$0xf]
                  %330 = vst [vmem:[%s296 + $0x40] sm:$0xf] %v329
                  %v331 = vld [vmem:[%s295 + $0x1dc] sm:$0xf]
                  %332 = vst [vmem:[%s296 + $0x44] sm:$0xf] %v331
                  %v333 = vld [vmem:[%s295 + $0x1f8] sm:$0xf]
                  %334 = vst [vmem:[%s296 + $0x48] sm:$0xf] %v333
                  %v335 = vld [vmem:[%s295 + $0x214] sm:$0xf]
                  %336 = vst [vmem:[%s296 + $0x4c] sm:$0xf] %v335
                  %v337 = vld [vmem:[%s295 + $0x230] sm:$0xf]
                  %338 = vst [vmem:[%s296 + $0x50] sm:$0xf] %v337
                  %v339 = vld [vmem:[%s295 + $0x24c] sm:$0xf]
                  %340 = vst [vmem:[%s296 + $0x54] sm:$0xf] %v339
                  %v341 = vld [vmem:[%s295 + $0x268] sm:$0xf]
                  %342 = vst [vmem:[%s296 + $0x58] sm:$0xf] %v341
                  %v343 = vld [vmem:[%s295 + $0x284] sm:$0xf]
                  %344 = vst [vmem:[%s296 + $0x5c] sm:$0xf] %v343
                  %v345 = vld [vmem:[%s295 + $0x2a0] sm:$0xf]
                  %346 = vst [vmem:[%s296 + $0x60] sm:$0xf] %v345
                  %v347 = vld [vmem:[%s295 + $0x2bc] sm:$0xf]
                  %348 = vst [vmem:[%s296 + $0x64] sm:$0xf] %v347
                  %v349 = vld [vmem:[%s295 + $0x2d8] sm:$0xf]
                  %350 = vst [vmem:[%s296 + $0x68] sm:$0xf] %v349
                  %v351 = vld [vmem:[%s295 + $0x2f4] sm:$0xf]
                  %352 = vst [vmem:[%s296 + $0x6c] sm:$0xf] %v351
                  %v353 = vld [vmem:[%s295 + $0x310] sm:$0xf]
                  %354 = vst [vmem:[%s296 + $0x70] sm:$0xf] %v353
                  %v355 = vld [vmem:[%s295 + $0x32c] sm:$0xf]
                  %356 = vst [vmem:[%s296 + $0x74] sm:$0xf] %v355
                  %v357 = vld [vmem:[%s295 + $0x348] sm:$0xf]
                  %358 = vst [vmem:[%s296 + $0x78] sm:$0xf] %v357
                  %v359 = vld [vmem:[%s295 + $0x364] sm:$0xf]
                  %360 = vst [vmem:[%s296 + $0x7c] sm:$0xf] %v359
                  %v361 = vld [vmem:[%s295 + $0x380] sm:$0xf]
                  %362 = vst [vmem:[%s296 + $0x80] sm:$0xf] %v361
                  %v363 = vld [vmem:[%s295 + $0x39c] sm:$0xf]
                  %364 = vst [vmem:[%s296 + $0x84] sm:$0xf] %v363
                  %v365 = vld [vmem:[%s295 + $0x3b8] sm:$0xf]
                  %366 = vst [vmem:[%s296 + $0x88] sm:$0xf] %v365
                  %v367 = vld [vmem:[%s295 + $0x3d4] sm:$0xf]
                  %368 = vst [vmem:[%s296 + $0x8c] sm:$0xf] %v367
                  %v369 = vld [vmem:[%s295 + $0x3f0] sm:$0xf]
                  %370 = vst [vmem:[%s296 + $0x90] sm:$0xf] %v369
                  %v371 = vld [vmem:[%s295 + $0x40c] sm:$0xf]
                  %372 = vst [vmem:[%s296 + $0x94] sm:$0xf] %v371
                  %v373 = vld [vmem:[%s295 + $0x428] sm:$0xf]
                  %374 = vst [vmem:[%s296 + $0x98] sm:$0xf] %v373
                  %v375 = vld [vmem:[%s295 + $0x444] sm:$0xf]
                  %376 = vst [vmem:[%s296 + $0x9c] sm:$0xf] %v375
                  %v377 = vld [vmem:[%s295 + $0x460] sm:$0xf]
                  %378 = vst [vmem:[%s296 + $0xa0] sm:$0xf] %v377
                  %v379 = vld [vmem:[%s295 + $0x47c] sm:$0xf]
                  %380 = vst [vmem:[%s296 + $0xa4] sm:$0xf] %v379
                  %v381 = vld [vmem:[%s295 + $0x498] sm:$0xf]
                  %382 = vst [vmem:[%s296 + $0xa8] sm:$0xf] %v381
                  %v383 = vld [vmem:[%s295 + $0x4b4] sm:$0xf]
                  %384 = vst [vmem:[%s296 + $0xac] sm:$0xf] %v383
                  %v385 = vld [vmem:[%s295 + $0x4d0] sm:$0xf]
                  %386 = vst [vmem:[%s296 + $0xb0] sm:$0xf] %v385
                  %v387 = vld [vmem:[%s295 + $0x4ec] sm:$0xf]
                  %388 = vst [vmem:[%s296 + $0xb4] sm:$0xf] %v387
                  %v389 = vld [vmem:[%s295 + $0x508] sm:$0xf]
                  %390 = vst [vmem:[%s296 + $0xb8] sm:$0xf] %v389
                  %v391 = vld [vmem:[%s295 + $0x524] sm:$0xf]
                  %392 = vst [vmem:[%s296 + $0xbc] sm:$0xf] %v391
                $region63: #{compression_relation_predictor_forward.7} parent=50 // loop_footer
                  %s294 = sadd.s32 1, %s290
                $region64: #{compression_relation_predictor_forward.7} parent=50 // loop_footer_branch
                  %289 = sbr.rel target = $region60
                $region65: #{compression_relation_predictor_forward.7} parent=50 // loop_exit
                  _
              $region51: #{compression_relation_predictor_forward.7} parent=35 // pred_fallthru
                _
            $region36: #{compression_relation_predictor_forward.7} parent=31 // pred_fallthru
              _
            // Predicated region
            $region37: #{compression_relation_predictor_forward.7} parent=31 // pred_check
              _
            $region38: #{compression_relation_predictor_forward.7} parent=31 // pred_check_branch
              %172 = sbr.rel (0) target = $region40
            $region39: #{compression_relation_predictor_forward.7} parent=31 // pred_region
              loop: start=0, step=1, limit=1
              $region41: #{compression_relation_predictor_forward.7} parent=39 // loop_pre_header
                _
              $region42: #{compression_relation_predictor_forward.7} parent=39 // loop_header
                %s175 = sphi 0, %s179
                %p176 = scmp.ge.s32.totalorder %s175, 1
                %s180 = sphi %s166, %s166
                %s181 = sphi %s164, %s164
              $region43: #{compression_relation_predictor_forward.7} parent=39 // loop_header_branch
                %178 = sbr.rel (%p176) target = $region47
              $region44: #{compression_relation_predictor_forward.7} parent=39 // loop_body
                %v182 = vld [vmem:[%s180] sm:$0xf]
                %183 = vst [vmem:[%s181] sm:$0xf] %v182
                %v184 = vld [vmem:[%s180 + $0x1c] sm:$0xf]
                %185 = vst [vmem:[%s181 + $0x4] sm:$0xf] %v184
                %v186 = vld [vmem:[%s180 + $0x38] sm:$0xf]
                %187 = vst [vmem:[%s181 + $0x8] sm:$0xf] %v186
                %v188 = vld [vmem:[%s180 + $0x54] sm:$0xf]
                %189 = vst [vmem:[%s181 + $0xc] sm:$0xf] %v188
                %v190 = vld [vmem:[%s180 + $0x70] sm:$0xf]
                %191 = vst [vmem:[%s181 + $0x10] sm:$0xf] %v190
                %v192 = vld [vmem:[%s180 + $0x8c] sm:$0xf]
                %193 = vst [vmem:[%s181 + $0x14] sm:$0xf] %v192
                %v194 = vld [vmem:[%s180 + $0xa8] sm:$0xf]
                %195 = vst [vmem:[%s181 + $0x18] sm:$0xf] %v194
                %v196 = vld [vmem:[%s180 + $0xc4] sm:$0xf]
                %197 = vst [vmem:[%s181 + $0x1c] sm:$0xf] %v196
                %v198 = vld [vmem:[%s180 + $0xe0] sm:$0xf]
                %199 = vst [vmem:[%s181 + $0x20] sm:$0xf] %v198
                %v200 = vld [vmem:[%s180 + $0xfc] sm:$0xf]
                %201 = vst [vmem:[%s181 + $0x24] sm:$0xf] %v200
                %v202 = vld [vmem:[%s180 + $0x118] sm:$0xf]
                %203 = vst [vmem:[%s181 + $0x28] sm:$0xf] %v202
                %v204 = vld [vmem:[%s180 + $0x134] sm:$0xf]
                %205 = vst [vmem:[%s181 + $0x2c] sm:$0xf] %v204
                %v206 = vld [vmem:[%s180 + $0x150] sm:$0xf]
                %207 = vst [vmem:[%s181 + $0x30] sm:$0xf] %v206
                %v208 = vld [vmem:[%s180 + $0x16c] sm:$0xf]
                %209 = vst [vmem:[%s181 + $0x34] sm:$0xf] %v208
                %v210 = vld [vmem:[%s180 + $0x188] sm:$0xf]
                %211 = vst [vmem:[%s181 + $0x38] sm:$0xf] %v210
                %v212 = vld [vmem:[%s180 + $0x1a4] sm:$0xf]
                %213 = vst [vmem:[%s181 + $0x3c] sm:$0xf] %v212
                %v214 = vld [vmem:[%s180 + $0x1c0] sm:$0xf]
                %215 = vst [vmem:[%s181 + $0x40] sm:$0xf] %v214
                %v216 = vld [vmem:[%s180 + $0x1dc] sm:$0xf]
                %217 = vst [vmem:[%s181 + $0x44] sm:$0xf] %v216
                %v218 = vld [vmem:[%s180 + $0x1f8] sm:$0xf]
                %219 = vst [vmem:[%s181 + $0x48] sm:$0xf] %v218
                %v220 = vld [vmem:[%s180 + $0x214] sm:$0xf]
                %221 = vst [vmem:[%s181 + $0x4c] sm:$0xf] %v220
                %v222 = vld [vmem:[%s180 + $0x230] sm:$0xf]
                %223 = vst [vmem:[%s181 + $0x50] sm:$0xf] %v222
                %v224 = vld [vmem:[%s180 + $0x24c] sm:$0xf]
                %225 = vst [vmem:[%s181 + $0x54] sm:$0xf] %v224
                %v226 = vld [vmem:[%s180 + $0x268] sm:$0xf]
                %227 = vst [vmem:[%s181 + $0x58] sm:$0xf] %v226
                %v228 = vld [vmem:[%s180 + $0x284] sm:$0xf]
                %229 = vst [vmem:[%s181 + $0x5c] sm:$0xf] %v228
                %v230 = vld [vmem:[%s180 + $0x2a0] sm:$0xf]
                %231 = vst [vmem:[%s181 + $0x60] sm:$0xf] %v230
                %v232 = vld [vmem:[%s180 + $0x2bc] sm:$0xf]
                %233 = vst [vmem:[%s181 + $0x64] sm:$0xf] %v232
                %v234 = vld [vmem:[%s180 + $0x2d8] sm:$0xf]
                %235 = vst [vmem:[%s181 + $0x68] sm:$0xf] %v234
                %v236 = vld [vmem:[%s180 + $0x2f4] sm:$0xf]
                %237 = vst [vmem:[%s181 + $0x6c] sm:$0xf] %v236
                %v238 = vld [vmem:[%s180 + $0x310] sm:$0xf]
                %239 = vst [vmem:[%s181 + $0x70] sm:$0xf] %v238
                %v240 = vld [vmem:[%s180 + $0x32c] sm:$0xf]
                %241 = vst [vmem:[%s181 + $0x74] sm:$0xf] %v240
                %v242 = vld [vmem:[%s180 + $0x348] sm:$0xf]
                %243 = vst [vmem:[%s181 + $0x78] sm:$0xf] %v242
                %v244 = vld [vmem:[%s180 + $0x364] sm:$0xf]
                %245 = vst [vmem:[%s181 + $0x7c] sm:$0xf] %v244
                %v246 = vld [vmem:[%s180 + $0x380] sm:$0xf]
                %247 = vst [vmem:[%s181 + $0x80] sm:$0xf] %v246
                %v248 = vld [vmem:[%s180 + $0x39c] sm:$0xf]
                %249 = vst [vmem:[%s181 + $0x84] sm:$0xf] %v248
                %v250 = vld [vmem:[%s180 + $0x3b8] sm:$0xf]
                %251 = vst [vmem:[%s181 + $0x88] sm:$0xf] %v250
                %v252 = vld [vmem:[%s180 + $0x3d4] sm:$0xf]
                %253 = vst [vmem:[%s181 + $0x8c] sm:$0xf] %v252
                %v254 = vld [vmem:[%s180 + $0x3f0] sm:$0xf]
                %255 = vst [vmem:[%s181 + $0x90] sm:$0xf] %v254
                %v256 = vld [vmem:[%s180 + $0x40c] sm:$0xf]
                %257 = vst [vmem:[%s181 + $0x94] sm:$0xf] %v256
                %v258 = vld [vmem:[%s180 + $0x428] sm:$0xf]
                %259 = vst [vmem:[%s181 + $0x98] sm:$0xf] %v258
                %v260 = vld [vmem:[%s180 + $0x444] sm:$0xf]
                %261 = vst [vmem:[%s181 + $0x9c] sm:$0xf] %v260
                %v262 = vld [vmem:[%s180 + $0x460] sm:$0xf]
                %263 = vst [vmem:[%s181 + $0xa0] sm:$0xf] %v262
                %v264 = vld [vmem:[%s180 + $0x47c] sm:$0xf]
                %265 = vst [vmem:[%s181 + $0xa4] sm:$0xf] %v264
                %v266 = vld [vmem:[%s180 + $0x498] sm:$0xf]
                %267 = vst [vmem:[%s181 + $0xa8] sm:$0xf] %v266
                %v268 = vld [vmem:[%s180 + $0x4b4] sm:$0xf]
                %269 = vst [vmem:[%s181 + $0xac] sm:$0xf] %v268
                %v270 = vld [vmem:[%s180 + $0x4d0] sm:$0xf]
                %271 = vst [vmem:[%s181 + $0xb0] sm:$0xf] %v270
                %v272 = vld [vmem:[%s180 + $0x4ec] sm:$0xf]
                %273 = vst [vmem:[%s181 + $0xb4] sm:$0xf] %v272
                %v274 = vld [vmem:[%s180 + $0x508] sm:$0xf]
                %275 = vst [vmem:[%s181 + $0xb8] sm:$0xf] %v274
                %v276 = vld [vmem:[%s180 + $0x524] sm:$0xf]
                %277 = vst [vmem:[%s181 + $0xbc] sm:$0xf] %v276
              $region45: #{compression_relation_predictor_forward.7} parent=39 // loop_footer
                %s179 = sadd.s32 1, %s175
              $region46: #{compression_relation_predictor_forward.7} parent=39 // loop_footer_branch
                %174 = sbr.rel target = $region42
              $region47: #{compression_relation_predictor_forward.7} parent=39 // loop_exit
                _
            $region40: #{compression_relation_predictor_forward.7} parent=31 // pred_fallthru
              _
          $region32: #{compression_relation_predictor_forward.7} parent=27 // pred_fallthru
            _
          %393 = vnop
        $region28: #{compression_relation_predictor_forward.7} parent=19 // pred_fallthru
          _
      $region20: #{compression_relation_predictor_forward.7} parent=5 // pred_fallthru
        _
      %p394 = scmp.le.s32.totalorder 1, %s9
      %p395 = scmp.lt.s32.totalorder %s9, 22
      %p396 = pnand %p394, %p395
      %p397 = pneg %p396
      // Predicated region
      $region66: #{compression_relation_predictor_forward.7} parent=5 // pred_check
        _
      $region67: #{compression_relation_predictor_forward.7} parent=5 // pred_check_branch
        %399 = sbr.rel (%p396) target = $region69
      $region68: #{compression_relation_predictor_forward.7} parent=5 // pred_region
        %s400 = ssub.s32 %s9, 1
        %s401 = sand.u32 %s62, 1
        %s402 = sand.u32 %s62, 1
        %s403 = smul.addr %s402, 192
        %s404 = scalar_lea.vmem [#allocation2], %s403
        // Predicated region
        $region70: #{compression_relation_predictor_forward.7} parent=68 // pred_check
          %p405 = pneg %p75
        $region71: #{compression_relation_predictor_forward.7} parent=68 // pred_check_branch
          %407 = sbr.rel (%p405) target = $region73
        $region72: #{compression_relation_predictor_forward.7} parent=68 // pred_region
          _
        $region73: #{compression_relation_predictor_forward.7} parent=68 // pred_fallthru
          _
        %s408 = smul.u32 16, %s18
        %p409 = scmp.lt.s32.totalorder %s19, 6
        %s410 = scalar_select %p409, %s19, 6
        %p411 = scmp.lt.s32.totalorder %s408, 47
        %s412 = scalar_select %p411, %s408, 47
        %s413 = smul.addr %s412, 3
        %s414 = smul.addr %s410, 144
        %s415 = sadd.s32 %s413, %s414
        %s416 = smul.addr %s415, 4
        %s417 = scalar_lea.vmem %s0, %s416
        %p418 = pneg %p49
        %p419 = pneg %p46
        %s420 = sand.u32 %s62, 1
        %s421 = sand.u32 %s62, 1
        %s422 = smul.addr %s421, 192
        %s423 = scalar_lea.vmem [#allocation2], %s422
        %p424 = pneg %p75
        %p425 = pneg %p72
        %p426 = pneg %p96
        %p427 = pneg %p93
        %p428 = pneg %p122
        %p429 = pneg %p119
        %s430 = smul.u32 16, %s18
        %p431 = scmp.lt.s32.totalorder %s430, 47
        %s432 = scalar_select %p431, %s430, 47
        %s433 = smul.addr %s432, 8
        %s434 = scalar_lea.vmem %s3, %s433
        %s435 = smul.u32 16, %s18
        %p436 = scmp.lt.s32.totalorder %s19, 6
        %s437 = scalar_select %p436, %s19, 6
        %p438 = scmp.lt.s32.totalorder %s435, 47
        %s439 = scalar_select %p438, %s435, 47
        %s440 = smul.addr %s439, 3
        %s441 = smul.addr %s437, 144
        %s442 = sadd.s32 %s440, %s441
        %s443 = smul.addr %s442, 4
        %s444 = scalar_lea.vmem %s0, %s443
        %s445 = smul.u32 16, %s18
        %s446 = smul.u32 16, %s18
        %p447 = scmp.lt.s32.totalorder %s446, 47
        %s448 = scalar_select %p447, %s446, 47
        %s449 = smul.addr %s448, 8
        %s450 = scalar_lea.vmem %s3, %s449
        %s451 = smul.u32 16, %s18
        %p453 = scmp.eq.s32.totalorder %s19, 0
        // Predicated region
        $region74: #{compression_relation_predictor_forward.7} parent=68 // pred_check
          %p454 = pneg %p453
        $region75: #{compression_relation_predictor_forward.7} parent=68 // pred_check_branch
          %456 = sbr.rel (%p454) target = $region77
        $region76: #{compression_relation_predictor_forward.7} parent=68 // pred_region
          %457 = vst [vmem:[%s450] sm:$0xff] 0.0
          %458 = vst [vmem:[%s450 + $0x8] sm:$0xff] 0.0
          %459 = vst [vmem:[%s450 + $0x10] sm:$0xff] 0.0
          %460 = vst [vmem:[%s450 + $0x18] sm:$0xff] 0.0
          %461 = vst [vmem:[%s450 + $0x20] sm:$0xff] 0.0
          %462 = vst [vmem:[%s450 + $0x28] sm:$0xff] 0.0
          %463 = vst [vmem:[%s450 + $0x30] sm:$0xff] 0.0
          %464 = vst [vmem:[%s450 + $0x38] sm:$0xff] 0.0
          %465 = vst [vmem:[%s450 + $0x40] sm:$0xff] 0.0
          %466 = vst [vmem:[%s450 + $0x48] sm:$0xff] 0.0
          %467 = vst [vmem:[%s450 + $0x50] sm:$0xff] 0.0
          %468 = vst [vmem:[%s450 + $0x58] sm:$0xff] 0.0
          %469 = vst [vmem:[%s450 + $0x60] sm:$0xff] 0.0
          %470 = vst [vmem:[%s450 + $0x68] sm:$0xff] 0.0
          %471 = vst [vmem:[%s450 + $0x70] sm:$0xff] 0.0
          %472 = vst [vmem:[%s450 + $0x78] sm:$0xff] 0.0
        $region77: #{compression_relation_predictor_forward.7} parent=68 // pred_fallthru
          _
        %v473 = vld [vmem:[%s450] sm:$0xff]
        %v474 = vld [vmem:[%s450 + $0x8] sm:$0xff]
        %v475 = vld [vmem:[%s450 + $0x10] sm:$0xff]
        %v476 = vld [vmem:[%s450 + $0x18] sm:$0xff]
        %v477 = vld [vmem:[%s450 + $0x20] sm:$0xff]
        %v478 = vld [vmem:[%s450 + $0x28] sm:$0xff]
        %v479 = vld [vmem:[%s450 + $0x30] sm:$0xff]
        %v480 = vld [vmem:[%s450 + $0x38] sm:$0xff]
        %v481 = vld [vmem:[%s450 + $0x40] sm:$0xff]
        %v482 = vld [vmem:[%s450 + $0x48] sm:$0xff]
        %v483 = vld [vmem:[%s450 + $0x50] sm:$0xff]
        %v484 = vld [vmem:[%s450 + $0x58] sm:$0xff]
        %v485 = vld [vmem:[%s450 + $0x60] sm:$0xff]
        %v486 = vld [vmem:[%s450 + $0x68] sm:$0xff]
        %v487 = vld [vmem:[%s450 + $0x70] sm:$0xff]
        %v488 = vld [vmem:[%s450 + $0x78] sm:$0xff]
        %v489 = vld [vmem:[%s444] sm:$0xff]
        %v490 = vld [vmem:[%s444 + $0x8] sm:$0xf]
        %v491 = vld [vmem:[%s444 + $0xc] sm:$0xff]
        %v492 = vld [vmem:[%s444 + $0x14] sm:$0xf]
        %v493 = vld [vmem:[%s444 + $0x18] sm:$0xff]
        %v494 = vld [vmem:[%s444 + $0x20] sm:$0xf]
        %v495 = vld [vmem:[%s444 + $0x24] sm:$0xff]
        %v496 = vld [vmem:[%s444 + $0x2c] sm:$0xf]
        %v497 = vld [vmem:[%s444 + $0x30] sm:$0xff]
        %v498 = vld [vmem:[%s444 + $0x38] sm:$0xf]
        %v499 = vld [vmem:[%s444 + $0x3c] sm:$0xff]
        %v500 = vld [vmem:[%s444 + $0x44] sm:$0xf]
        %v501 = vld [vmem:[%s444 + $0x48] sm:$0xff]
        %v502 = vld [vmem:[%s444 + $0x50] sm:$0xf]
        %v503 = vld [vmem:[%s444 + $0x54] sm:$0xff]
        %v504 = vld [vmem:[%s444 + $0x5c] sm:$0xf]
        %v505 = vld [vmem:[%s444 + $0x60] sm:$0xff]
        %v506 = vld [vmem:[%s444 + $0x68] sm:$0xf]
        %v507 = vld [vmem:[%s444 + $0x6c] sm:$0xff]
        %v508 = vld [vmem:[%s444 + $0x74] sm:$0xf]
        %v509 = vld [vmem:[%s444 + $0x78] sm:$0xff]
        %v510 = vld [vmem:[%s444 + $0x80] sm:$0xf]
        %v511 = vld [vmem:[%s444 + $0x84] sm:$0xff]
        %v512 = vld [vmem:[%s444 + $0x8c] sm:$0xf]
        %v513 = vld [vmem:[%s444 + $0x90] sm:$0xff]
        %v514 = vld [vmem:[%s444 + $0x98] sm:$0xf]
        %v515 = vld [vmem:[%s444 + $0x9c] sm:$0xff]
        %v516 = vld [vmem:[%s444 + $0xa4] sm:$0xf]
        %v517 = vld [vmem:[%s444 + $0xa8] sm:$0xff]
        %v518 = vld [vmem:[%s444 + $0xb0] sm:$0xf]
        %v519 = vld [vmem:[%s444 + $0xb4] sm:$0xff]
        %v520 = vld [vmem:[%s444 + $0xbc] sm:$0xf]
        %v521 = vld [vmem:[%s404] sm:$0xf]
        %v522 = vld [vmem:[%s404 + $0x4] sm:$0xf]
        %v523 = vld [vmem:[%s404 + $0x8] sm:$0xf]
        %v524 = vld [vmem:[%s404 + $0xc] sm:$0xf]
        %v525 = vld [vmem:[%s404 + $0x10] sm:$0xf]
        %v526 = vld [vmem:[%s404 + $0x14] sm:$0xf]
        %v527 = vld [vmem:[%s404 + $0x18] sm:$0xf]
        %v528 = vld [vmem:[%s404 + $0x1c] sm:$0xf]
        %v529 = vld [vmem:[%s404 + $0x20] sm:$0xf]
        %v530 = vld [vmem:[%s404 + $0x24] sm:$0xf]
        %v531 = vld [vmem:[%s404 + $0x28] sm:$0xf]
        %v532 = vld [vmem:[%s404 + $0x2c] sm:$0xf]
        %v533 = vld [vmem:[%s404 + $0x30] sm:$0xf]
        %v534 = vld [vmem:[%s404 + $0x34] sm:$0xf]
        %v535 = vld [vmem:[%s404 + $0x38] sm:$0xf]
        %v536 = vld [vmem:[%s404 + $0x3c] sm:$0xf]
        %v537 = vld [vmem:[%s404 + $0x40] sm:$0xf]
        %v538 = vld [vmem:[%s404 + $0x44] sm:$0xf]
        %v539 = vld [vmem:[%s404 + $0x48] sm:$0xf]
        %v540 = vld [vmem:[%s404 + $0x4c] sm:$0xf]
        %v541 = vld [vmem:[%s404 + $0x50] sm:$0xf]
        %v542 = vld [vmem:[%s404 + $0x54] sm:$0xf]
        %v543 = vld [vmem:[%s404 + $0x58] sm:$0xf]
        %v544 = vld [vmem:[%s404 + $0x5c] sm:$0xf]
        %v545 = vld [vmem:[%s404 + $0x60] sm:$0xf]
        %v546 = vld [vmem:[%s404 + $0x64] sm:$0xf]
        %v547 = vld [vmem:[%s404 + $0x68] sm:$0xf]
        %v548 = vld [vmem:[%s404 + $0x6c] sm:$0xf]
        %v549 = vld [vmem:[%s404 + $0x70] sm:$0xf]
        %v550 = vld [vmem:[%s404 + $0x74] sm:$0xf]
        %v551 = vld [vmem:[%s404 + $0x78] sm:$0xf]
        %v552 = vld [vmem:[%s404 + $0x7c] sm:$0xf]
        %v553 = vld [vmem:[%s404 + $0x80] sm:$0xf]
        %v554 = vld [vmem:[%s404 + $0x84] sm:$0xf]
        %v555 = vld [vmem:[%s404 + $0x88] sm:$0xf]
        %v556 = vld [vmem:[%s404 + $0x8c] sm:$0xf]
        %v557 = vld [vmem:[%s404 + $0x90] sm:$0xf]
        %v558 = vld [vmem:[%s404 + $0x94] sm:$0xf]
        %v559 = vld [vmem:[%s404 + $0x98] sm:$0xf]
        %v560 = vld [vmem:[%s404 + $0x9c] sm:$0xf]
        %v561 = vld [vmem:[%s404 + $0xa0] sm:$0xf]
        %v562 = vld [vmem:[%s404 + $0xa4] sm:$0xf]
        %v563 = vld [vmem:[%s404 + $0xa8] sm:$0xf]
        %v564 = vld [vmem:[%s404 + $0xac] sm:$0xf]
        %v565 = vld [vmem:[%s404 + $0xb0] sm:$0xf]
        %v566 = vld [vmem:[%s404 + $0xb4] sm:$0xf]
        %v567 = vld [vmem:[%s404 + $0xb8] sm:$0xf]
        %v568 = vld [vmem:[%s404 + $0xbc] sm:$0xf]
        %v601 = vunpack.c.l.b16 %v489
        %v602 = vunpack.c.h.b16 %v489
        %v603 = vunpack.c.l.b16 %v490
        %v604 = vunpack.c.l.b16 %v491
        %v605 = vunpack.c.h.b16 %v491
        %v606 = vunpack.c.l.b16 %v492
        %v607 = vunpack.c.l.b16 %v493
        %v608 = vunpack.c.h.b16 %v493
        %v609 = vunpack.c.l.b16 %v494
        %v610 = vunpack.c.l.b16 %v495
        %v611 = vunpack.c.h.b16 %v495
        %v612 = vunpack.c.l.b16 %v496
        %v613 = vunpack.c.l.b16 %v497
        %v614 = vunpack.c.h.b16 %v497
        %v615 = vunpack.c.l.b16 %v498
        %v616 = vunpack.c.l.b16 %v499
        %v617 = vunpack.c.h.b16 %v499
        %v618 = vunpack.c.l.b16 %v500
        %v619 = vunpack.c.l.b16 %v501
        %v620 = vunpack.c.h.b16 %v501
        %v621 = vunpack.c.l.b16 %v502
        %v622 = vunpack.c.l.b16 %v503
        %v623 = vunpack.c.h.b16 %v503
        %v624 = vunpack.c.l.b16 %v504
        %v625 = vunpack.c.l.b16 %v505
        %v626 = vunpack.c.h.b16 %v505
        %v627 = vunpack.c.l.b16 %v506
        %v628 = vunpack.c.l.b16 %v507
        %v629 = vunpack.c.h.b16 %v507
        %v630 = vunpack.c.l.b16 %v508
        %v631 = vunpack.c.l.b16 %v509
        %v632 = vunpack.c.h.b16 %v509
        %v633 = vunpack.c.l.b16 %v510
        %v634 = vunpack.c.l.b16 %v511
        %v635 = vunpack.c.h.b16 %v511
        %v636 = vunpack.c.l.b16 %v512
        %v637 = vunpack.c.l.b16 %v513
        %v638 = vunpack.c.h.b16 %v513
        %v639 = vunpack.c.l.b16 %v514
        %v640 = vunpack.c.l.b16 %v515
        %v641 = vunpack.c.h.b16 %v515
        %v642 = vunpack.c.l.b16 %v516
        %v643 = vunpack.c.l.b16 %v517
        %v644 = vunpack.c.h.b16 %v517
        %v645 = vunpack.c.l.b16 %v518
        %v646 = vunpack.c.l.b16 %v519
        %v647 = vunpack.c.h.b16 %v519
        %v648 = vunpack.c.l.b16 %v520
        %v649 = vpack.c.b16 %v604, %v601
        %v650 = vpack.c.b16 %v605, %v602
        %v651 = vpack.c.b16 %v606, %v603
        %v652 = vpack.c.b16 %v610, %v607
        %v653 = vpack.c.b16 %v611, %v608
        %v654 = vpack.c.b16 %v612, %v609
        %v655 = vpack.c.b16 %v616, %v613
        %v656 = vpack.c.b16 %v617, %v614
        %v657 = vpack.c.b16 %v618, %v615
        %v658 = vpack.c.b16 %v622, %v619
        %v659 = vpack.c.b16 %v623, %v620
        %v660 = vpack.c.b16 %v624, %v621
        %v661 = vpack.c.b16 %v628, %v625
        %v662 = vpack.c.b16 %v629, %v626
        %v663 = vpack.c.b16 %v630, %v627
        %v664 = vpack.c.b16 %v634, %v631
        %v665 = vpack.c.b16 %v635, %v632
        %v666 = vpack.c.b16 %v636, %v633
        %v667 = vpack.c.b16 %v640, %v637
        %v668 = vpack.c.b16 %v641, %v638
        %v669 = vpack.c.b16 %v642, %v639
        %v670 = vpack.c.b16 %v646, %v643
        %v671 = vpack.c.b16 %v647, %v644
        %v672 = vpack.c.b16 %v648, %v645
        %v745 = vunpack.c.l.b16 %v521
        %v746 = vunpack.c.l.b16 %v522
        %v747 = vunpack.c.l.b16 %v523
        %v748 = vunpack.c.l.b16 %v524
        %v749 = vunpack.c.l.b16 %v525
        %v750 = vunpack.c.l.b16 %v526
        %v751 = vunpack.c.l.b16 %v527
        %v752 = vunpack.c.l.b16 %v528
        %v753 = vunpack.c.l.b16 %v529
        %v754 = vunpack.c.l.b16 %v530
        %v755 = vunpack.c.l.b16 %v531
        %v756 = vunpack.c.l.b16 %v532
        %v757 = vunpack.c.l.b16 %v533
        %v758 = vunpack.c.l.b16 %v534
        %v759 = vunpack.c.l.b16 %v535
        %v760 = vunpack.c.l.b16 %v536
        %v761 = vunpack.c.l.b16 %v537
        %v762 = vunpack.c.l.b16 %v538
        %v763 = vunpack.c.l.b16 %v539
        %v764 = vunpack.c.l.b16 %v540
        %v765 = vunpack.c.l.b16 %v541
        %v766 = vunpack.c.l.b16 %v542
        %v767 = vunpack.c.l.b16 %v543
        %v768 = vunpack.c.l.b16 %v544
        %v769 = vunpack.c.l.b16 %v545
        %v770 = vunpack.c.l.b16 %v546
        %v771 = vunpack.c.l.b16 %v547
        %v772 = vunpack.c.l.b16 %v548
        %v773 = vunpack.c.l.b16 %v549
        %v774 = vunpack.c.l.b16 %v550
        %v775 = vunpack.c.l.b16 %v551
        %v776 = vunpack.c.l.b16 %v552
        %v777 = vunpack.c.l.b16 %v553
        %v778 = vunpack.c.l.b16 %v554
        %v779 = vunpack.c.l.b16 %v555
        %v780 = vunpack.c.l.b16 %v556
        %v781 = vunpack.c.l.b16 %v557
        %v782 = vunpack.c.l.b16 %v558
        %v783 = vunpack.c.l.b16 %v559
        %v784 = vunpack.c.l.b16 %v560
        %v785 = vunpack.c.l.b16 %v561
        %v786 = vunpack.c.l.b16 %v562
        %v787 = vunpack.c.l.b16 %v563
        %v788 = vunpack.c.l.b16 %v564
        %v789 = vunpack.c.l.b16 %v565
        %v790 = vunpack.c.l.b16 %v566
        %v791 = vunpack.c.l.b16 %v567
        %v792 = vunpack.c.l.b16 %v568
        %v793 = vpack.c.b16 %v746, %v745
        %v794 = vpack.c.b16 %v748, %v747
        %v795 = vpack.c.b16 %v750, %v749
        %v796 = vpack.c.b16 %v752, %v751
        %v797 = vpack.c.b16 %v754, %v753
        %v798 = vpack.c.b16 %v756, %v755
        %v799 = vpack.c.b16 %v758, %v757
        %v800 = vpack.c.b16 %v760, %v759
        %v801 = vpack.c.b16 %v762, %v761
        %v802 = vpack.c.b16 %v764, %v763
        %v803 = vpack.c.b16 %v766, %v765
        %v804 = vpack.c.b16 %v768, %v767
        %v805 = vpack.c.b16 %v770, %v769
        %v806 = vpack.c.b16 %v772, %v771
        %v807 = vpack.c.b16 %v774, %v773
        %v808 = vpack.c.b16 %v776, %v775
        %v809 = vpack.c.b16 %v778, %v777
        %v810 = vpack.c.b16 %v780, %v779
        %v811 = vpack.c.b16 %v782, %v781
        %v812 = vpack.c.b16 %v784, %v783
        %v813 = vpack.c.b16 %v786, %v785
        %v814 = vpack.c.b16 %v788, %v787
        %v815 = vpack.c.b16 %v790, %v789
        %v816 = vpack.c.b16 %v792, %v791
        %841 = vmatprep.subr.bf16.mxu0 0
        %842 = vmatpush1.bf16.msra.mxu0 %v793
        %843 = vmatprep.subr.bf16.mxu0 0
        %844 = vmatpush1.bf16.msra.mxu0 %v794
        %845 = vmatprep.subr.bf16.mxu0 0
        %846 = vmatpush1.bf16.msra.mxu0 %v795
        %847 = vmatprep.subr.bf16.mxu0 0
        %848 = vmatpush1.bf16.msra.mxu0 %v796
        %849 = vmatprep.subr.bf16.mxu0 0
        %850 = vmatpush1.bf16.msra.mxu0 %v797
        %851 = vmatprep.subr.bf16.mxu0 0
        %852 = vmatpush1.bf16.msra.mxu0 %v798
        %853 = vmatprep.subr.bf16.mxu0 0
        %854 = vmatpush1.bf16.msra.mxu0 %v799
        %855 = vmatprep.subr.bf16.mxu0 0
        %856 = vmatpush1.bf16.msra.mxu0 %v800
        %857 = vmatprep.subr.bf16.mxu0 0
        %858 = vmatpush1.bf16.msra.mxu0 %v801
        %859 = vmatprep.subr.bf16.mxu0 0
        %860 = vmatpush1.bf16.msra.mxu0 %v802
        %861 = vmatprep.subr.bf16.mxu0 0
        %862 = vmatpush1.bf16.msra.mxu0 %v803
        %863 = vmatprep.subr.bf16.mxu0 0
        %864 = vmatpush1.bf16.msra.mxu0 %v804
        %865 = vmatprep.subr.bf16.mxu0 0
        %866 = vmatpush1.bf16.msra.mxu0 %v805
        %867 = vmatprep.subr.bf16.mxu0 0
        %868 = vmatpush1.bf16.msra.mxu0 %v806
        %869 = vmatprep.subr.bf16.mxu0 0
        %870 = vmatpush1.bf16.msra.mxu0 %v807
        %871 = vmatprep.subr.bf16.mxu0 0
        %872 = vmatpush1.bf16.msra.mxu0 %v808
        %873 = vmatprep.mubr.bf16.mxu0 %v650
        %874 = vmatmul.mubr.bf16.gmra.mrb[0].mxu0 %v649
        %v875 = vpop.f32.mrb[0].mxu0
        %v876 = vadd.f32 0.0, %v875
        %v877 = vpop.f32.mrb[0].mxu0
        %v878 = vpop.f32.mrb[0].mxu0
        %v879 = vadd.f32 0.0, %v878
        %v880 = vpop.f32.mrb[0].mxu0
        %881 = vmatprep.mubr.bf16.mxu0 %v653
        %882 = vmatmul.mubr.bf16.gmra.mrb[0].mxu0 %v652
        %v883 = vpop.f32.mrb[0].mxu0
        %v884 = vadd.f32 0.0, %v883
        %v885 = vpop.f32.mrb[0].mxu0
        %v886 = vpop.f32.mrb[0].mxu0
        %v887 = vadd.f32 0.0, %v886
        %v888 = vpop.f32.mrb[0].mxu0
        %889 = vmatprep.mubr.bf16.mxu0 %v656
        %890 = vmatmul.mubr.bf16.gmra.mrb[0].mxu0 %v655
        %v891 = vpop.f32.mrb[0].mxu0
        %v892 = vadd.f32 0.0, %v891
        %v893 = vpop.f32.mrb[0].mxu0
        %v894 = vpop.f32.mrb[0].mxu0
        %v895 = vadd.f32 0.0, %v894
        %v896 = vpop.f32.mrb[0].mxu0
        %897 = vmatprep.mubr.bf16.mxu0 %v659
        %898 = vmatmul.mubr.bf16.gmra.mrb[0].mxu0 %v658
        %v899 = vpop.f32.mrb[0].mxu0
        %v900 = vadd.f32 0.0, %v899
        %v901 = vpop.f32.mrb[0].mxu0
        %v902 = vpop.f32.mrb[0].mxu0
        %v903 = vadd.f32 0.0, %v902
        %v904 = vpop.f32.mrb[0].mxu0
        %905 = vmatprep.mubr.bf16.mxu0 %v662
        %906 = vmatmul.mubr.bf16.gmra.mrb[0].mxu0 %v661
        %v907 = vpop.f32.mrb[0].mxu0
        %v908 = vadd.f32 0.0, %v907
        %v909 = vpop.f32.mrb[0].mxu0
        %v910 = vpop.f32.mrb[0].mxu0
        %v911 = vadd.f32 0.0, %v910
        %v912 = vpop.f32.mrb[0].mxu0
        %913 = vmatprep.mubr.bf16.mxu0 %v665
        %914 = vmatmul.mubr.bf16.gmra.mrb[0].mxu0 %v664
        %v915 = vpop.f32.mrb[0].mxu0
        %v916 = vadd.f32 0.0, %v915
        %v917 = vpop.f32.mrb[0].mxu0
        %v918 = vpop.f32.mrb[0].mxu0
        %v919 = vadd.f32 0.0, %v918
        %v920 = vpop.f32.mrb[0].mxu0
        %921 = vmatprep.mubr.bf16.mxu0 %v668
        %922 = vmatmul.mubr.bf16.gmra.mrb[0].mxu0 %v667
        %v923 = vpop.f32.mrb[0].mxu0
        %v924 = vadd.f32 0.0, %v923
        %v925 = vpop.f32.mrb[0].mxu0
        %v926 = vpop.f32.mrb[0].mxu0
        %v927 = vadd.f32 0.0, %v926
        %v928 = vpop.f32.mrb[0].mxu0
        %929 = vmatprep.mubr.bf16.mxu0 %v671
        %930 = vmatmul.mubr.bf16.gmra.mrb[0].mxu0 %v670
        %v931 = vpop.f32.mrb[0].mxu0
        %v932 = vadd.f32 0.0, %v931
        %v933 = vpop.f32.mrb[0].mxu0
        %v934 = vpop.f32.mrb[0].mxu0
        %v935 = vadd.f32 0.0, %v934
        %v936 = vpop.f32.mrb[0].mxu0
        %937 = vdwg.mxu0
        %938 = vmatprep.subr.bf16.mxu0 0
        %939 = vmatpush1.bf16.msra.mxu0 %v809
        %940 = vmatprep.subr.bf16.mxu0 0
        %941 = vmatpush1.bf16.msra.mxu0 %v810
        %942 = vmatprep.subr.bf16.mxu0 0
        %943 = vmatpush1.bf16.msra.mxu0 %v811
        %944 = vmatprep.subr.bf16.mxu0 0
        %945 = vmatpush1.bf16.msra.mxu0 %v812
        %946 = vmatprep.subr.bf16.mxu0 0
        %947 = vmatpush1.bf16.msra.mxu0 %v813
        %948 = vmatprep.subr.bf16.mxu0 0
        %949 = vmatpush1.bf16.msra.mxu0 %v814
        %950 = vmatprep.subr.bf16.mxu0 0
        %951 = vmatpush1.bf16.msra.mxu0 %v815
        %952 = vmatprep.subr.bf16.mxu0 0
        %953 = vmatpush1.bf16.msra.mxu0 %v816
        %954 = vmatprep.subr.bf16.mxu0 0
        %955 = vmatpush1.bf16.msra.mxu0 0
        %956 = vmatprep.subr.bf16.mxu0 0
        %957 = vmatpush1.bf16.msra.mxu0 0
        %958 = vmatprep.subr.bf16.mxu0 0
        %959 = vmatpush1.bf16.msra.mxu0 0
        %960 = vmatprep.subr.bf16.mxu0 0
        %961 = vmatpush1.bf16.msra.mxu0 0
        %962 = vmatprep.subr.bf16.mxu0 0
        %963 = vmatpush1.bf16.msra.mxu0 0
        %964 = vmatprep.subr.bf16.mxu0 0
        %965 = vmatpush1.bf16.msra.mxu0 0
        %966 = vmatprep.subr.bf16.mxu0 0
        %967 = vmatpush1.bf16.msra.mxu0 0
        %968 = vmatprep.subr.bf16.mxu0 0
        %969 = vmatpush1.bf16.msra.mxu0 0
        %970 = vmatprep.mubr.bf16.mxu0 0
        %971 = vmatmul.mubr.bf16.gmra.mrb[0].mxu0 %v651
        %v972 = vpop.f32.mrb[0].mxu0
        %v973 = vadd.f32 %v876, %v972
        %v974 = vpop.f32.mrb[0].mxu0
        %v975 = vpop.f32.mrb[0].mxu0
        %v976 = vadd.f32 %v879, %v975
        %v977 = vpop.f32.mrb[0].mxu0
        %978 = vmatprep.mubr.bf16.mxu0 0
        %979 = vmatmul.mubr.bf16.gmra.mrb[0].mxu0 %v654
        %v980 = vpop.f32.mrb[0].mxu0
        %v981 = vadd.f32 %v884, %v980
        %v982 = vpop.f32.mrb[0].mxu0
        %v983 = vpop.f32.mrb[0].mxu0
        %v984 = vadd.f32 %v887, %v983
        %v985 = vpop.f32.mrb[0].mxu0
        %986 = vmatprep.mubr.bf16.mxu0 0
        %987 = vmatmul.mubr.bf16.gmra.mrb[0].mxu0 %v657
        %v988 = vpop.f32.mrb[0].mxu0
        %v989 = vadd.f32 %v892, %v988
        %v990 = vpop.f32.mrb[0].mxu0
        %v991 = vpop.f32.mrb[0].mxu0
        %v992 = vadd.f32 %v895, %v991
        %v993 = vpop.f32.mrb[0].mxu0
        %994 = vmatprep.mubr.bf16.mxu0 0
        %995 = vmatmul.mubr.bf16.gmra.mrb[0].mxu0 %v660
        %v996 = vpop.f32.mrb[0].mxu0
        %v997 = vadd.f32 %v900, %v996
        %v998 = vpop.f32.mrb[0].mxu0
        %v999 = vpop.f32.mrb[0].mxu0
        %v1000 = vadd.f32 %v903, %v999
        %v1001 = vpop.f32.mrb[0].mxu0
        %1002 = vmatprep.mubr.bf16.mxu0 0
        %1003 = vmatmul.mubr.bf16.gmra.mrb[0].mxu0 %v663
        %v1004 = vpop.f32.mrb[0].mxu0
        %v1005 = vadd.f32 %v908, %v1004
        %v1006 = vpop.f32.mrb[0].mxu0
        %v1007 = vpop.f32.mrb[0].mxu0
        %v1008 = vadd.f32 %v911, %v1007
        %v1009 = vpop.f32.mrb[0].mxu0
        %1010 = vmatprep.mubr.bf16.mxu0 0
        %1011 = vmatmul.mubr.bf16.gmra.mrb[0].mxu0 %v666
        %v1012 = vpop.f32.mrb[0].mxu0
        %v1013 = vadd.f32 %v916, %v1012
        %v1014 = vpop.f32.mrb[0].mxu0
        %v1015 = vpop.f32.mrb[0].mxu0
        %v1016 = vadd.f32 %v919, %v1015
        %v1017 = vpop.f32.mrb[0].mxu0
        %1018 = vmatprep.mubr.bf16.mxu0 0
        %1019 = vmatmul.mubr.bf16.gmra.mrb[0].mxu0 %v669
        %v1020 = vpop.f32.mrb[0].mxu0
        %v1021 = vadd.f32 %v924, %v1020
        %v1022 = vpop.f32.mrb[0].mxu0
        %v1023 = vpop.f32.mrb[0].mxu0
        %v1024 = vadd.f32 %v927, %v1023
        %v1025 = vpop.f32.mrb[0].mxu0
        %1026 = vmatprep.mubr.bf16.mxu0 0
        %1027 = vmatmul.mubr.bf16.gmra.mrb[0].mxu0 %v672
        %v1028 = vpop.f32.mrb[0].mxu0
        %v1029 = vadd.f32 %v932, %v1028
        %v1030 = vpop.f32.mrb[0].mxu0
        %v1031 = vpop.f32.mrb[0].mxu0
        %v1032 = vadd.f32 %v935, %v1031
        %v1033 = vpop.f32.mrb[0].mxu0
        %1034 = vdwg.mxu0
        %v1035 = vadd.f32 %v473, %v973
        %v1036 = vadd.f32 %v474, %v976
        %v1037 = vadd.f32 %v475, %v981
        %v1038 = vadd.f32 %v476, %v984
        %v1039 = vadd.f32 %v477, %v989
        %v1040 = vadd.f32 %v478, %v992
        %v1041 = vadd.f32 %v479, %v997
        %v1042 = vadd.f32 %v480, %v1000
        %v1043 = vadd.f32 %v481, %v1005
        %v1044 = vadd.f32 %v482, %v1008
        %v1045 = vadd.f32 %v483, %v1013
        %v1046 = vadd.f32 %v484, %v1016
        %v1047 = vadd.f32 %v485, %v1021
        %v1048 = vadd.f32 %v486, %v1024
        %v1049 = vadd.f32 %v487, %v1029
        %v1050 = vadd.f32 %v488, %v1032
        %1051 = vst [vmem:[%s450] sm:$0xff] %v1035
        %1052 = vst [vmem:[%s450 + $0x8] sm:$0xff] %v1036
        %1053 = vst [vmem:[%s450 + $0x10] sm:$0xff] %v1037
        %1054 = vst [vmem:[%s450 + $0x18] sm:$0xff] %v1038
        %1055 = vst [vmem:[%s450 + $0x20] sm:$0xff] %v1039
        %1056 = vst [vmem:[%s450 + $0x28] sm:$0xff] %v1040
        %1057 = vst [vmem:[%s450 + $0x30] sm:$0xff] %v1041
        %1058 = vst [vmem:[%s450 + $0x38] sm:$0xff] %v1042
        %1059 = vst [vmem:[%s450 + $0x40] sm:$0xff] %v1043
        %1060 = vst [vmem:[%s450 + $0x48] sm:$0xff] %v1044
        %1061 = vst [vmem:[%s450 + $0x50] sm:$0xff] %v1045
        %1062 = vst [vmem:[%s450 + $0x58] sm:$0xff] %v1046
        %1063 = vst [vmem:[%s450 + $0x60] sm:$0xff] %v1047
        %1064 = vst [vmem:[%s450 + $0x68] sm:$0xff] %v1048
        %1065 = vst [vmem:[%s450 + $0x70] sm:$0xff] %v1049
        %1066 = vst [vmem:[%s450 + $0x78] sm:$0xff] %v1050
        %p1067 = scmp.eq.s32.totalorder %s19, 6
        // Predicated region
        $region78: #{compression_relation_predictor_forward.7} parent=68 // pred_check
          %p1068 = pneg %p1067
        $region79: #{compression_relation_predictor_forward.7} parent=68 // pred_check_branch
          %1070 = sbr.rel (%p1068) target = $region81
        $region80: #{compression_relation_predictor_forward.7} parent=68 // pred_region
          %v1071 = vld [vmem:[%s450] sm:$0xff]
          %v1072 = vld [vmem:[%s450 + $0x8] sm:$0xff]
          %v1073 = vld [vmem:[%s450 + $0x10] sm:$0xff]
          %v1074 = vld [vmem:[%s450 + $0x18] sm:$0xff]
          %v1075 = vld [vmem:[%s450 + $0x20] sm:$0xff]
          %v1076 = vld [vmem:[%s450 + $0x28] sm:$0xff]
          %v1077 = vld [vmem:[%s450 + $0x30] sm:$0xff]
          %v1078 = vld [vmem:[%s450 + $0x38] sm:$0xff]
          %v1079 = vld [vmem:[%s450 + $0x40] sm:$0xff]
          %v1080 = vld [vmem:[%s450 + $0x48] sm:$0xff]
          %v1081 = vld [vmem:[%s450 + $0x50] sm:$0xff]
          %v1082 = vld [vmem:[%s450 + $0x58] sm:$0xff]
          %v1083 = vld [vmem:[%s450 + $0x60] sm:$0xff]
          %v1084 = vld [vmem:[%s450 + $0x68] sm:$0xff]
          %v1085 = vld [vmem:[%s450 + $0x70] sm:$0xff]
          %v1086 = vld [vmem:[%s450 + $0x78] sm:$0xff]
          %v1087 = vld [vmem:[%s2] sm:$0x1]
          %v1089 = vlaneseq
          %v1090 = vshrl.u32 %v1089, 7
          %v1091 = vsub.s32 0, %v1090
          %v1092 = vrot.slane %v1087, %v1091
          %v1094 = vadd.f32 %v1071, %v1092
          %v1095 = vadd.f32 %v1072, %v1092
          %v1096 = vadd.f32 %v1073, %v1092
          %v1097 = vadd.f32 %v1074, %v1092
          %v1098 = vadd.f32 %v1075, %v1092
          %v1099 = vadd.f32 %v1076, %v1092
          %v1100 = vadd.f32 %v1077, %v1092
          %v1101 = vadd.f32 %v1078, %v1092
          %v1102 = vadd.f32 %v1079, %v1092
          %v1103 = vadd.f32 %v1080, %v1092
          %v1104 = vadd.f32 %v1081, %v1092
          %v1105 = vadd.f32 %v1082, %v1092
          %v1106 = vadd.f32 %v1083, %v1092
          %v1107 = vadd.f32 %v1084, %v1092
          %v1108 = vadd.f32 %v1085, %v1092
          %v1109 = vadd.f32 %v1086, %v1092
          %1110 = vst [vmem:[%s450] sm:$0xff] %v1094
          %1111 = vst [vmem:[%s450 + $0x8] sm:$0xff] %v1095
          %1112 = vst [vmem:[%s450 + $0x10] sm:$0xff] %v1096
          %1113 = vst [vmem:[%s450 + $0x18] sm:$0xff] %v1097
          %1114 = vst [vmem:[%s450 + $0x20] sm:$0xff] %v1098
          %1115 = vst [vmem:[%s450 + $0x28] sm:$0xff] %v1099
          %1116 = vst [vmem:[%s450 + $0x30] sm:$0xff] %v1100
          %1117 = vst [vmem:[%s450 + $0x38] sm:$0xff] %v1101
          %1118 = vst [vmem:[%s450 + $0x40] sm:$0xff] %v1102
          %1119 = vst [vmem:[%s450 + $0x48] sm:$0xff] %v1103
          %1120 = vst [vmem:[%s450 + $0x50] sm:$0xff] %v1104
          %1121 = vst [vmem:[%s450 + $0x58] sm:$0xff] %v1105
          %1122 = vst [vmem:[%s450 + $0x60] sm:$0xff] %v1106
          %1123 = vst [vmem:[%s450 + $0x68] sm:$0xff] %v1107
          %1124 = vst [vmem:[%s450 + $0x70] sm:$0xff] %v1108
          %1125 = vst [vmem:[%s450 + $0x78] sm:$0xff] %v1109
        $region81: #{compression_relation_predictor_forward.7} parent=68 // pred_fallthru
          _
        %s1126 = smul.u32 16, %s18
        %p1127 = scmp.lt.s32.totalorder %s1126, 47
        %s1128 = scalar_select %p1127, %s1126, 47
        %s1129 = smul.addr %s1128, 8
        %s1130 = scalar_lea.vmem %s3, %s1129
        // Predicated region
        $region82: #{compression_relation_predictor_forward.7} parent=68 // pred_check
          %p1131 = pneg %p119
        $region83: #{compression_relation_predictor_forward.7} parent=68 // pred_check_branch
          %1133 = sbr.rel (%p1131) target = $region85
        $region84: #{compression_relation_predictor_forward.7} parent=68 // pred_region
          %s1134 = smul.u32 16, %s18
        $region85: #{compression_relation_predictor_forward.7} parent=68 // pred_fallthru
          _
      $region69: #{compression_relation_predictor_forward.7} parent=5 // pred_fallthru
        _
      %p1135 = scmp.le.s32.totalorder 2, %s9
      // Predicated region
      $region86: #{compression_relation_predictor_forward.7} parent=5 // pred_check
        %p1136 = pneg %p1135
      $region87: #{compression_relation_predictor_forward.7} parent=5 // pred_check_branch
        %1138 = sbr.rel (%p1136) target = $region89
      $region88: #{compression_relation_predictor_forward.7} parent=5 // pred_region
        %s1139 = ssub.s32 %s9, 2
        // Predicated region
        $region90: #{compression_relation_predictor_forward.7} parent=88 // pred_check
          %p1140 = pneg %p125
        $region91: #{compression_relation_predictor_forward.7} parent=88 // pred_check_branch
          %1142 = sbr.rel (%p1140) target = $region93
        $region92: #{compression_relation_predictor_forward.7} parent=88 // pred_region
          %s1143 = smul.u32 16, %s20
          %p1144 = scmp.lt.s32.totalorder %s1143, 47
          %s1145 = scalar_select %p1144, %s1143, 47
          %s1146 = smul.addr %s1145, 8
          %s1147 = scalar_lea.vmem %s3, %s1146
        $region93: #{compression_relation_predictor_forward.7} parent=88 // pred_fallthru
          _
      $region89: #{compression_relation_predictor_forward.7} parent=5 // pred_fallthru
        _
    $region6: #{compression_relation_predictor_forward.7} parent=1 // loop_footer
      %s13 = sadd.s32 1, %s9
    $region7: #{compression_relation_predictor_forward.7} parent=1 // loop_footer_branch
      %8 = sbr.rel target = $region3
    $region8: #{compression_relation_predictor_forward.7} parent=1 // loop_exit
      _

// kernel: compression_relation_predictor_forward.6
$region0: #{compression_relation_predictor_forward.6}
  #allocation0 [shape = 'u32[]', space=smem, size = 0x4, offset = 0x4, fixed_abs, tag = 'smem constant byte address 0x4 - core index']
  #allocation1 [shape = 'u32[144,128]{1,0:T(1,128)}', space=vmem, size = 0x12000, scoped, tag = 'internal scratch']
  %s0 = inlined_call_operand.hbm [shape: f32[384,128], index: 0, kind: input, shape index: {}]
  %s1 = inlined_call_operand.hbm [shape: f32[1,128], index: 1, kind: input, shape index: {}]
  %s2 = inlined_call_operand.hbm [shape: f32[128,128], index: 2, kind: input, shape index: {}]
  %s3 = inlined_call_operand.hbm [shape: f32[1,128], index: 3, kind: input, shape index: {}]
  %s4 = inlined_call_operand.vmem [shape: f32[128,896], index: 4, kind: input, shape index: {}]
  %s5 = inlined_call_operand.vmem [shape: bf16[384,896], index: 5, kind: output, shape index: {}]
  %s6 = sld [smem:[#allocation0]]
  $region69: #{compression_relation_predictor_forward.6} parent=0
    _
  %s8 = ssub.s32 1, %s6
  %s9 = scalar_select 0, %s8, %s6
  $region1: #{compression_relation_predictor_forward.6} parent=0
    #allocation2 [shape = 'u8[131072]{0}', space=vmem, size = 0x20000, scoped, tag = 'input window, operand 0']
    #allocation3 [shape = 's32[2]{0}', space=sflag, size = 0x8, scoped, tag = 'scoped memory for compression_relation_predictor_forward.6']
    #allocation4 [shape = 'u8[512]{0}', space=vmem, size = 0x400, scoped, tag = 'input window, operand 1, single buffered']
    #allocation5 [shape = 's32[1]{0}', space=sflag, size = 0x4, scoped, tag = 'scoped memory for compression_relation_predictor_forward.6']
    #allocation6 [shape = 'u8[65536]{0}', space=vmem, size = 0x10000, scoped, tag = 'input window, operand 2, single buffered']
    #allocation7 [shape = 'u8[512]{0}', space=vmem, size = 0x400, scoped, tag = 'input window, operand 3, single buffered']
    #allocation8 [shape = 's32[1]{0}', space=sflag, size = 0x4, scoped, tag = 'scoped memory for compression_relation_predictor_forward.6']
    %10 = vsyncpa [#allocation3], 0
    %s11 = scalar_lea.sflag [#allocation3], 1
    %12 = vsyncpa %s11, 0
    %13 = vsyncpa [#allocation5], 0
    %14 = vsyncpa [#allocation8], 0
    loop: start=0, step=1, limit=5
    $region2: #{compression_relation_predictor_forward.6} parent=1 // loop_pre_header
      _
    $region3: #{compression_relation_predictor_forward.6} parent=1 // loop_header
      %s16 = sphi 0, %s20
      %p17 = scmp.ge.s32.totalorder %s16, 5
      %s26 = sphi 0, %s28
      %s29 = sphi 0, %s26
      %s30 = sphi 0, %s29
      %s46 = sphi 0, %s30
      %s50 = sphi 0, %s50
      %s52 = sphi 0, %s50
      %s53 = sphi 0, %s52
      %s67 = sphi 0, %s53
      %s71 = sphi 0, %s71
      %s73 = sphi 0, %s71
      %s74 = sphi 0, %s73
      %s88 = sphi 0, %s74
      %s92 = sphi 0, %s92
      %s94 = sphi 0, %s92
      %s95 = sphi 0, %s94
      %s109 = sphi 0, %s95
      %s113 = sphi 0, %s113
      %s115 = sphi 0, %s113
      %s116 = sphi 0, %s115
      %s130 = sphi 0, %s116
      %s136 = sphi 0, %s138
      %s139 = sphi 0, %s136
      %s140 = sphi 0, %s139
      %s156 = sphi 0, %s140
    $region4: #{compression_relation_predictor_forward.6} parent=1 // loop_header_branch
      %19 = sbr.rel (%p17) target = $region8
    $region5: #{compression_relation_predictor_forward.6} parent=1 // loop_body
      %s21 = ssub.s32 %s16, 1
      %s22 = ssub.s32 %s16, 2
      %s23 = sadd.s32 %s16, 1
      %s24 = ssub.s32 %s16, %s23
      %p25 = scmp.eq.s32.totalorder %s24, 0
      %s27 = sadd.s32 %s26, 1
      %s28 = scalar_select %p25, %s26, %s27
      %p31 = pneg %p25
      %p32 = scmp.eq.s32.totalorder %s16, 2
      %p33 = por %p31, %p32
      %p34 = scmp.ne.s32.totalorder %s26, %s29
      %p35 = scmp.eq.s32.totalorder %s16, 0
      %p36 = por %p34, %p35
      %p37 = scmp.ne.s32.totalorder %s26, %s29
      %p38 = scmp.eq.s32.totalorder %s21, 2
      %p39 = por %p37, %p38
      %p40 = scmp.ne.s32.totalorder %s29, %s30
      %p41 = scmp.eq.s32.totalorder %s21, 0
      %p42 = por %p40, %p41
      %p43 = scmp.ne.s32.totalorder %s29, %s30
      %p44 = scmp.eq.s32.totalorder %s22, 2
      %p45 = por %p43, %p44
      %p47 = scmp.ne.s32.totalorder %s30, %s46
      %p48 = scmp.eq.s32.totalorder %s22, 0
      %p49 = por %p47, %p48
      %s51 = sadd.s32 %s50, 1
      %p54 = scmp.eq.s32.totalorder %s16, 2
      %p55 = scmp.ne.s32.totalorder %s50, %s52
      %p56 = scmp.eq.s32.totalorder %s16, 0
      %p57 = por %p55, %p56
      %p58 = scmp.ne.s32.totalorder %s50, %s52
      %p59 = scmp.eq.s32.totalorder %s21, 2
      %p60 = por %p58, %p59
      %p61 = scmp.ne.s32.totalorder %s52, %s53
      %p62 = scmp.eq.s32.totalorder %s21, 0
      %p63 = por %p61, %p62
      %p64 = scmp.ne.s32.totalorder %s52, %s53
      %p65 = scmp.eq.s32.totalorder %s22, 2
      %p66 = por %p64, %p65
      %p68 = scmp.ne.s32.totalorder %s53, %s67
      %p69 = scmp.eq.s32.totalorder %s22, 0
      %p70 = por %p68, %p69
      %s72 = sadd.s32 %s71, 1
      %p75 = scmp.eq.s32.totalorder %s16, 2
      %p76 = scmp.ne.s32.totalorder %s71, %s73
      %p77 = scmp.eq.s32.totalorder %s16, 0
      %p78 = por %p76, %p77
      %p79 = scmp.ne.s32.totalorder %s71, %s73
      %p80 = scmp.eq.s32.totalorder %s21, 2
      %p81 = por %p79, %p80
      %p82 = scmp.ne.s32.totalorder %s73, %s74
      %p83 = scmp.eq.s32.totalorder %s21, 0
      %p84 = por %p82, %p83
      %p85 = scmp.ne.s32.totalorder %s73, %s74
      %p86 = scmp.eq.s32.totalorder %s22, 2
      %p87 = por %p85, %p86
      %p89 = scmp.ne.s32.totalorder %s74, %s88
      %p90 = scmp.eq.s32.totalorder %s22, 0
      %p91 = por %p89, %p90
      %s93 = sadd.s32 %s92, 1
      %p96 = scmp.eq.s32.totalorder %s16, 2
      %p97 = scmp.ne.s32.totalorder %s92, %s94
      %p98 = scmp.eq.s32.totalorder %s16, 0
      %p99 = por %p97, %p98
      %p100 = scmp.ne.s32.totalorder %s92, %s94
      %p101 = scmp.eq.s32.totalorder %s21, 2
      %p102 = por %p100, %p101
      %p103 = scmp.ne.s32.totalorder %s94, %s95
      %p104 = scmp.eq.s32.totalorder %s21, 0
      %p105 = por %p103, %p104
      %p106 = scmp.ne.s32.totalorder %s94, %s95
      %p107 = scmp.eq.s32.totalorder %s22, 2
      %p108 = por %p106, %p107
      %p110 = scmp.ne.s32.totalorder %s95, %s109
      %p111 = scmp.eq.s32.totalorder %s22, 0
      %p112 = por %p110, %p111
      %s114 = sadd.s32 %s113, 1
      %p117 = scmp.eq.s32.totalorder %s16, 2
      %p118 = scmp.ne.s32.totalorder %s113, %s115
      %p119 = scmp.eq.s32.totalorder %s16, 0
      %p120 = por %p118, %p119
      %p121 = scmp.ne.s32.totalorder %s113, %s115
      %p122 = scmp.eq.s32.totalorder %s21, 2
      %p123 = por %p121, %p122
      %p124 = scmp.ne.s32.totalorder %s115, %s116
      %p125 = scmp.eq.s32.totalorder %s21, 0
      %p126 = por %p124, %p125
      %p127 = scmp.ne.s32.totalorder %s115, %s116
      %p128 = scmp.eq.s32.totalorder %s22, 2
      %p129 = por %p127, %p128
      %p131 = scmp.ne.s32.totalorder %s116, %s130
      %p132 = scmp.eq.s32.totalorder %s22, 0
      %p133 = por %p131, %p132
      %s134 = ssub.s32 %s16, %s23
      %p135 = scmp.eq.s32.totalorder %s134, 0
      %s137 = sadd.s32 %s136, 1
      %s138 = scalar_select %p135, %s136, %s137
      %p141 = pneg %p135
      %p142 = scmp.eq.s32.totalorder %s16, 2
      %p143 = por %p141, %p142
      %p144 = scmp.ne.s32.totalorder %s136, %s139
      %p145 = scmp.eq.s32.totalorder %s16, 0
      %p146 = por %p144, %p145
      %p147 = scmp.ne.s32.totalorder %s136, %s139
      %p148 = scmp.eq.s32.totalorder %s21, 2
      %p149 = por %p147, %p148
      %p150 = scmp.ne.s32.totalorder %s139, %s140
      %p151 = scmp.eq.s32.totalorder %s21, 0
      %p152 = por %p150, %p151
      %p153 = scmp.ne.s32.totalorder %s139, %s140
      %p154 = scmp.eq.s32.totalorder %s22, 2
      %p155 = por %p153, %p154
      %p157 = scmp.ne.s32.totalorder %s140, %s156
      %p158 = scmp.eq.s32.totalorder %s22, 0
      %p159 = por %p157, %p158
      %p160 = scmp.le.s32.totalorder 1, %s16
      %p161 = scmp.lt.s32.totalorder %s16, 4
      %p162 = pnand %p160, %p161
      %p163 = pneg %p162
      // Predicated region
      $region9: #{compression_relation_predictor_forward.6} parent=5 // pred_check
        _
      $region10: #{compression_relation_predictor_forward.6} parent=5 // pred_check_branch
        %165 = sbr.rel (%p162) target = $region12
      $region11: #{compression_relation_predictor_forward.6} parent=5 // pred_region
        %s166 = ssub.s32 %s16, 1
        // Predicated region
        $region13: #{compression_relation_predictor_forward.6} parent=11 // pred_check
          %p167 = pneg %p63
        $region14: #{compression_relation_predictor_forward.6} parent=11 // pred_check_branch
          %169 = sbr.rel (%p167) target = $region16
        $region15: #{compression_relation_predictor_forward.6} parent=11 // pred_region
          %s171 = ssub.s32 16, 16
          %172 = vsyncadd [#allocation5], %s171
          %s174 = sshll.u32 [#allocation4], 4
          %s175 = int_to_ptr.vmem [resolvable:$true] %s174
          %177 = dma.hbm_to_vmem [thread:$0]  %s1, 16, %s175, [#allocation5]
        $region16: #{compression_relation_predictor_forward.6} parent=11 // pred_fallthru
          _
        // Predicated region
        $region17: #{compression_relation_predictor_forward.6} parent=11 // pred_check
          %p178 = pneg %p84
        $region18: #{compression_relation_predictor_forward.6} parent=11 // pred_check_branch
          %180 = sbr.rel (%p178) target = $region20
        $region19: #{compression_relation_predictor_forward.6} parent=11 // pred_region
          %s182 = ssub.s32 2048, 2048
          %183 = vsyncadd [#allocation5], %s182
          %s184 = sshll.u32 [#allocation6], 4
          %s185 = int_to_ptr.vmem [resolvable:$true] %s184
          %190 = dma.hbm_to_vmem [thread:$0]  %s2, 2048, %s185, [#allocation5], 128, 128, 8
        $region20: #{compression_relation_predictor_forward.6} parent=11 // pred_fallthru
          _
        // Predicated region
        $region21: #{compression_relation_predictor_forward.6} parent=11 // pred_check
          %p191 = pneg %p105
        $region22: #{compression_relation_predictor_forward.6} parent=11 // pred_check_branch
          %193 = sbr.rel (%p191) target = $region24
        $region23: #{compression_relation_predictor_forward.6} parent=11 // pred_region
          %s195 = ssub.s32 16, 16
          %196 = vsyncadd [#allocation8], %s195
          %s198 = sshll.u32 [#allocation7], 4
          %s199 = int_to_ptr.vmem [resolvable:$true] %s198
          %201 = dma.hbm_to_vmem [thread:$0]  %s3, 16, %s199, [#allocation8]
        $region24: #{compression_relation_predictor_forward.6} parent=11 // pred_fallthru
          _
        // Predicated region
        $region25: #{compression_relation_predictor_forward.6} parent=11 // pred_check
          %p202 = pneg %p126
        $region26: #{compression_relation_predictor_forward.6} parent=11 // pred_check_branch
          %204 = sbr.rel (%p202) target = $region28
        $region27: #{compression_relation_predictor_forward.6} parent=11 // pred_region
          _
        $region28: #{compression_relation_predictor_forward.6} parent=11 // pred_fallthru
          _
      $region12: #{compression_relation_predictor_forward.6} parent=5 // pred_fallthru
        _
      %p205 = scmp.lt.s32.totalorder %s16, 3
      // Predicated region
      $region29: #{compression_relation_predictor_forward.6} parent=5 // pred_check
        %p206 = pneg %p205
      $region30: #{compression_relation_predictor_forward.6} parent=5 // pred_check_branch
        %208 = sbr.rel (%p206) target = $region32
      $region31: #{compression_relation_predictor_forward.6} parent=5 // pred_region
        // Predicated region
        $region33: #{compression_relation_predictor_forward.6} parent=31 // pred_check
          %p209 = pneg %p36
        $region34: #{compression_relation_predictor_forward.6} parent=31 // pred_check_branch
          %211 = sbr.rel (%p209) target = $region36
        $region35: #{compression_relation_predictor_forward.6} parent=31 // pred_region
          %s212 = sand.u32 %s26, 1
          %s213 = scalar_lea.sflag [#allocation3], %s212
          %s214 = sand.u32 %s26, 1
          %s215 = smul.addr %s214, 128
          %s216 = scalar_lea.vmem [#allocation2], %s215
          %s217 = smul.u32 16, %s16
          %s219 = ssub.s32 2048, 2048
          %220 = vsyncadd %s213, %s219
          %s221 = smul.addr %s217, 128
          %s222 = scalar_lea.hbm %s0, %s221
          %s223 = sshll.u32 %s216, 4
          %s224 = int_to_ptr.vmem [resolvable:$true] %s223
          %229 = dma.hbm_to_vmem [thread:$0]  %s222, 2048, %s224, %s213, 128, 128, 8
        $region36: #{compression_relation_predictor_forward.6} parent=31 // pred_fallthru
          _
      $region32: #{compression_relation_predictor_forward.6} parent=5 // pred_fallthru
        _
      %p230 = scmp.le.s32.totalorder 1, %s16
      %p231 = scmp.lt.s32.totalorder %s16, 4
      %p232 = pnand %p230, %p231
      %p233 = pneg %p232
      // Predicated region
      $region37: #{compression_relation_predictor_forward.6} parent=5 // pred_check
        _
      $region38: #{compression_relation_predictor_forward.6} parent=5 // pred_check_branch
        %235 = sbr.rel (%p232) target = $region40
      $region39: #{compression_relation_predictor_forward.6} parent=5 // pred_region
        %s236 = ssub.s32 %s16, 1
        %s237 = sand.u32 %s29, 1
        %s238 = scalar_lea.sflag [#allocation3], %s237
        %s239 = sand.u32 %s29, 1
        %s240 = smul.addr %s239, 128
        %s241 = scalar_lea.vmem [#allocation2], %s240
        // Predicated region
        $region41: #{compression_relation_predictor_forward.6} parent=39 // pred_check
          %p242 = pneg %p42
        $region42: #{compression_relation_predictor_forward.6} parent=39 // pred_check_branch
          %244 = sbr.rel (%p242) target = $region44
        $region43: #{compression_relation_predictor_forward.6} parent=39 // pred_region
          %245 = dma.done %s238, 2048
        $region44: #{compression_relation_predictor_forward.6} parent=39 // pred_fallthru
          _
        // Predicated region
        $region45: #{compression_relation_predictor_forward.6} parent=39 // pred_check
          %p246 = pneg %p63
        $region46: #{compression_relation_predictor_forward.6} parent=39 // pred_check_branch
          %248 = sbr.rel (%p246) target = $region48
        $region47: #{compression_relation_predictor_forward.6} parent=39 // pred_region
          %249 = dma.done [#allocation5], 16
        $region48: #{compression_relation_predictor_forward.6} parent=39 // pred_fallthru
          _
        // Predicated region
        $region49: #{compression_relation_predictor_forward.6} parent=39 // pred_check
          %p250 = pneg %p84
        $region50: #{compression_relation_predictor_forward.6} parent=39 // pred_check_branch
          %252 = sbr.rel (%p250) target = $region52
        $region51: #{compression_relation_predictor_forward.6} parent=39 // pred_region
          %253 = dma.done [#allocation5], 2048
        $region52: #{compression_relation_predictor_forward.6} parent=39 // pred_fallthru
          _
        // Predicated region
        $region53: #{compression_relation_predictor_forward.6} parent=39 // pred_check
          %p254 = pneg %p105
        $region54: #{compression_relation_predictor_forward.6} parent=39 // pred_check_branch
          %256 = sbr.rel (%p254) target = $region56
        $region55: #{compression_relation_predictor_forward.6} parent=39 // pred_region
          %257 = dma.done [#allocation8], 16
        $region56: #{compression_relation_predictor_forward.6} parent=39 // pred_fallthru
          _
        %s258 = sand.u32 %s29, 1
        %s259 = scalar_lea.sflag [#allocation3], %s258
        %s260 = sand.u32 %s29, 1
        %s261 = smul.addr %s260, 128
        %s262 = scalar_lea.vmem [#allocation2], %s261
        %p263 = pneg %p42
        %p264 = pneg %p39
        %p265 = pneg %p63
        %p266 = pneg %p60
        %p267 = pneg %p84
        %p268 = pneg %p81
        %p269 = pneg %p105
        %p270 = pneg %p102
        %p271 = pneg %p126
        %p272 = pneg %p123
        %p273 = pneg %p152
        %p274 = pneg %p149
        %s275 = smul.u32 16, %s21
        %p276 = scmp.lt.s32.totalorder %s275, 47
        %s277 = scalar_select %p276, %s275, 47
        %s278 = smul.addr %s277, 7
        %s279 = smul.addr %s278, 4
        %s280 = scalar_lea.vmem %s5, %s279
        %s281 = smul.u32 16, %s21
        %s282 = smul.u32 16, %s21
        %p283 = scmp.lt.s32.totalorder %s282, 47
        %s284 = scalar_select %p283, %s282, 47
        %s285 = smul.addr %s284, 7
        %s286 = smul.addr %s285, 4
        %s287 = scalar_lea.vmem %s5, %s286
        %s288 = smul.u32 16, %s21
        %v289 = vld [vmem:[%s241] sm:$0xff]
        %v290 = vld [vmem:[%s241 + $0x8] sm:$0xff]
        %v291 = vld [vmem:[%s241 + $0x10] sm:$0xff]
        %v292 = vld [vmem:[%s241 + $0x18] sm:$0xff]
        %v293 = vld [vmem:[%s241 + $0x20] sm:$0xff]
        %v294 = vld [vmem:[%s241 + $0x28] sm:$0xff]
        %v295 = vld [vmem:[%s241 + $0x30] sm:$0xff]
        %v296 = vld [vmem:[%s241 + $0x38] sm:$0xff]
        %v297 = vld [vmem:[%s241 + $0x40] sm:$0xff]
        %v298 = vld [vmem:[%s241 + $0x48] sm:$0xff]
        %v299 = vld [vmem:[%s241 + $0x50] sm:$0xff]
        %v300 = vld [vmem:[%s241 + $0x58] sm:$0xff]
        %v301 = vld [vmem:[%s241 + $0x60] sm:$0xff]
        %v302 = vld [vmem:[%s241 + $0x68] sm:$0xff]
        %v303 = vld [vmem:[%s241 + $0x70] sm:$0xff]
        %v304 = vld [vmem:[%s241 + $0x78] sm:$0xff]
        %v305 = vld [vmem:[#allocation4] sm:$0x1]
        %v307 = vlaneseq
        %v308 = vshrl.u32 %v307, 7
        %v309 = vsub.s32 0, %v308
        %v310 = vrot.slane %v305, %v309
        %v312 = vadd.f32 %v289, %v310
        %v313 = vadd.f32 %v290, %v310
        %v314 = vadd.f32 %v291, %v310
        %v315 = vadd.f32 %v292, %v310
        %v316 = vadd.f32 %v293, %v310
        %v317 = vadd.f32 %v294, %v310
        %v318 = vadd.f32 %v295, %v310
        %v319 = vadd.f32 %v296, %v310
        %v320 = vadd.f32 %v297, %v310
        %v321 = vadd.f32 %v298, %v310
        %v322 = vadd.f32 %v299, %v310
        %v323 = vadd.f32 %v300, %v310
        %v324 = vadd.f32 %v301, %v310
        %v325 = vadd.f32 %v302, %v310
        %v326 = vadd.f32 %v303, %v310
        %v327 = vadd.f32 %v304, %v310
        %v328 = vmax.f32 %v312, 0.0
        %v329 = vmax.f32 %v313, 0.0
        %v330 = vmax.f32 %v314, 0.0
        %v331 = vmax.f32 %v315, 0.0
        %v332 = vmax.f32 %v316, 0.0
        %v333 = vmax.f32 %v317, 0.0
        %v334 = vmax.f32 %v318, 0.0
        %v335 = vmax.f32 %v319, 0.0
        %v336 = vmax.f32 %v320, 0.0
        %v337 = vmax.f32 %v321, 0.0
        %v338 = vmax.f32 %v322, 0.0
        %v339 = vmax.f32 %v323, 0.0
        %v340 = vmax.f32 %v324, 0.0
        %v341 = vmax.f32 %v325, 0.0
        %v342 = vmax.f32 %v326, 0.0
        %v343 = vmax.f32 %v327, 0.0
        %v344 = vld [vmem:[#allocation6] sm:$0xff]
        %v345 = vld [vmem:[#allocation6 + $0x8] sm:$0xff]
        %v346 = vld [vmem:[#allocation6 + $0x10] sm:$0xff]
        %v347 = vld [vmem:[#allocation6 + $0x18] sm:$0xff]
        %v348 = vld [vmem:[#allocation6 + $0x20] sm:$0xff]
        %v349 = vld [vmem:[#allocation6 + $0x28] sm:$0xff]
        %v350 = vld [vmem:[#allocation6 + $0x30] sm:$0xff]
        %v351 = vld [vmem:[#allocation6 + $0x38] sm:$0xff]
        %v352 = vld [vmem:[#allocation6 + $0x40] sm:$0xff]
        %v353 = vld [vmem:[#allocation6 + $0x48] sm:$0xff]
        %v354 = vld [vmem:[#allocation6 + $0x50] sm:$0xff]
        %v355 = vld [vmem:[#allocation6 + $0x58] sm:$0xff]
        %v356 = vld [vmem:[#allocation6 + $0x60] sm:$0xff]
        %v357 = vld [vmem:[#allocation6 + $0x68] sm:$0xff]
        %v358 = vld [vmem:[#allocation6 + $0x70] sm:$0xff]
        %v359 = vld [vmem:[#allocation6 + $0x78] sm:$0xff]
        %v360 = vld [vmem:[#allocation7] sm:$0x1]
        %v362 = vlaneseq
        %v363 = vshrl.u32 %v362, 7
        %v364 = vsub.s32 0, %v363
        %v365 = vrot.slane %v360, %v364
        %367 = vmatprep.subr.mxu0 0.0
        %368 = vmatpush1.msra.mxu0 %v344
        %369 = vmatprep.subr.mxu0 0.0
        %370 = vmatpush1.msra.mxu0 %v345
        %371 = vmatprep.subr.mxu0 0.0
        %372 = vmatpush1.msra.mxu0 %v346
        %373 = vmatprep.subr.mxu0 0.0
        %374 = vmatpush1.msra.mxu0 %v347
        %375 = vmatprep.subr.mxu0 0.0
        %376 = vmatpush1.msra.mxu0 %v348
        %377 = vmatprep.subr.mxu0 0.0
        %378 = vmatpush1.msra.mxu0 %v349
        %379 = vmatprep.subr.mxu0 0.0
        %380 = vmatpush1.msra.mxu0 %v350
        %381 = vmatprep.subr.mxu0 0.0
        %382 = vmatpush1.msra.mxu0 %v351
        %383 = vmatprep.subr.mxu0 0.0
        %384 = vmatpush1.msra.mxu0 %v352
        %385 = vmatprep.subr.mxu0 0.0
        %386 = vmatpush1.msra.mxu0 %v353
        %387 = vmatprep.subr.mxu0 0.0
        %388 = vmatpush1.msra.mxu0 %v354
        %389 = vmatprep.subr.mxu0 0.0
        %390 = vmatpush1.msra.mxu0 %v355
        %391 = vmatprep.subr.mxu0 0.0
        %392 = vmatpush1.msra.mxu0 %v356
        %393 = vmatprep.subr.mxu0 0.0
        %394 = vmatpush1.msra.mxu0 %v357
        %395 = vmatprep.subr.mxu0 0.0
        %396 = vmatpush1.msra.mxu0 %v358
        %397 = vmatprep.subr.mxu0 0.0
        %398 = vmatpush1.msra.mxu0 %v359
        %399 = vmatprep.subr.mxu0 0.0
        %400 = vmatpush1.msra.mxu0 0.0
        %401 = vmatprep.subr.mxu0 0.0
        %402 = vmatpush1.msra.mxu0 0.0
        %403 = vmatprep.subr.mxu0 0.0
        %404 = vmatpush1.msra.mxu0 0.0
        %405 = vmatprep.subr.mxu0 0.0
        %406 = vmatpush1.msra.mxu0 0.0
        %407 = vmatprep.subr.mxu0 0.0
        %408 = vmatpush1.msra.mxu0 0.0
        %409 = vmatprep.subr.mxu0 0.0
        %410 = vmatpush1.msra.mxu0 0.0
        %411 = vmatprep.subr.mxu0 0.0
        %412 = vmatpush1.msra.mxu0 0.0
        %413 = vmatprep.subr.mxu0 0.0
        %414 = vmatpush1.msra.mxu0 0.0
        %415 = vmatprep.subr.mxu0 0.0
        %416 = vmatpush1.msra.mxu0 0.0
        %417 = vmatprep.subr.mxu0 0.0
        %418 = vmatpush1.msra.mxu0 0.0
        %419 = vmatprep.subr.mxu0 0.0
        %420 = vmatpush1.msra.mxu0 0.0
        %421 = vmatprep.subr.mxu0 0.0
        %422 = vmatpush1.msra.mxu0 0.0
        %423 = vmatprep.subr.mxu0 0.0
        %424 = vmatpush1.msra.mxu0 0.0
        %425 = vmatprep.subr.mxu0 0.0
        %426 = vmatpush1.msra.mxu0 0.0
        %427 = vmatprep.subr.mxu0 0.0
        %428 = vmatpush1.msra.mxu0 0.0
        %429 = vmatprep.subr.mxu0 0.0
        %430 = vmatpush1.msra.mxu0 0.0
        %431 = vmatprep.mubr.f32.mxu0 0.0
        %432 = vmatmul.mubr.f32.gmra.mrb[0].mxu0 %v328
        %v433 = vpop.f32.mrb[0].mxu0
        %v434 = vadd.f32 %v365, %v433
        %v435 = vpop.f32.mrb[0].mxu0
        %436 = vmatprep.mubr.f32.mxu0 0.0
        %437 = vmatmul.mubr.f32.gmra.mrb[0].mxu0 %v329
        %v438 = vpop.f32.mrb[0].mxu0
        %v439 = vadd.f32 %v365, %v438
        %v440 = vpop.f32.mrb[0].mxu0
        %441 = vmatprep.mubr.f32.mxu0 0.0
        %442 = vmatmul.mubr.f32.gmra.mrb[0].mxu0 %v330
        %v443 = vpop.f32.mrb[0].mxu0
        %v444 = vadd.f32 %v365, %v443
        %v445 = vpop.f32.mrb[0].mxu0
        %446 = vmatprep.mubr.f32.mxu0 0.0
        %447 = vmatmul.mubr.f32.gmra.mrb[0].mxu0 %v331
        %v448 = vpop.f32.mrb[0].mxu0
        %v449 = vadd.f32 %v365, %v448
        %v450 = vpop.f32.mrb[0].mxu0
        %451 = vmatprep.mubr.f32.mxu0 0.0
        %452 = vmatmul.mubr.f32.gmra.mrb[0].mxu0 %v332
        %v453 = vpop.f32.mrb[0].mxu0
        %v454 = vadd.f32 %v365, %v453
        %v455 = vpop.f32.mrb[0].mxu0
        %456 = vmatprep.mubr.f32.mxu0 0.0
        %457 = vmatmul.mubr.f32.gmra.mrb[0].mxu0 %v333
        %v458 = vpop.f32.mrb[0].mxu0
        %v459 = vadd.f32 %v365, %v458
        %v460 = vpop.f32.mrb[0].mxu0
        %461 = vmatprep.mubr.f32.mxu0 0.0
        %462 = vmatmul.mubr.f32.gmra.mrb[0].mxu0 %v334
        %v463 = vpop.f32.mrb[0].mxu0
        %v464 = vadd.f32 %v365, %v463
        %v465 = vpop.f32.mrb[0].mxu0
        %466 = vmatprep.mubr.f32.mxu0 0.0
        %467 = vmatmul.mubr.f32.gmra.mrb[0].mxu0 %v335
        %v468 = vpop.f32.mrb[0].mxu0
        %v469 = vadd.f32 %v365, %v468
        %v470 = vpop.f32.mrb[0].mxu0
        %471 = vmatprep.mubr.f32.mxu0 0.0
        %472 = vmatmul.mubr.f32.gmra.mrb[0].mxu0 %v336
        %v473 = vpop.f32.mrb[0].mxu0
        %v474 = vadd.f32 %v365, %v473
        %v475 = vpop.f32.mrb[0].mxu0
        %476 = vmatprep.mubr.f32.mxu0 0.0
        %477 = vmatmul.mubr.f32.gmra.mrb[0].mxu0 %v337
        %v478 = vpop.f32.mrb[0].mxu0
        %v479 = vadd.f32 %v365, %v478
        %v480 = vpop.f32.mrb[0].mxu0
        %481 = vmatprep.mubr.f32.mxu0 0.0
        %482 = vmatmul.mubr.f32.gmra.mrb[0].mxu0 %v338
        %v483 = vpop.f32.mrb[0].mxu0
        %v484 = vadd.f32 %v365, %v483
        %v485 = vpop.f32.mrb[0].mxu0
        %486 = vmatprep.mubr.f32.mxu0 0.0
        %487 = vmatmul.mubr.f32.gmra.mrb[0].mxu0 %v339
        %v488 = vpop.f32.mrb[0].mxu0
        %v489 = vadd.f32 %v365, %v488
        %v490 = vpop.f32.mrb[0].mxu0
        %491 = vmatprep.mubr.f32.mxu0 0.0
        %492 = vmatmul.mubr.f32.gmra.mrb[0].mxu0 %v340
        %v493 = vpop.f32.mrb[0].mxu0
        %v494 = vadd.f32 %v365, %v493
        %v495 = vpop.f32.mrb[0].mxu0
        %496 = vmatprep.mubr.f32.mxu0 0.0
        %497 = vmatmul.mubr.f32.gmra.mrb[0].mxu0 %v341
        %v498 = vpop.f32.mrb[0].mxu0
        %v499 = vadd.f32 %v365, %v498
        %v500 = vpop.f32.mrb[0].mxu0
        %501 = vmatprep.mubr.f32.mxu0 0.0
        %502 = vmatmul.mubr.f32.gmra.mrb[0].mxu0 %v342
        %v503 = vpop.f32.mrb[0].mxu0
        %v504 = vadd.f32 %v365, %v503
        %v505 = vpop.f32.mrb[0].mxu0
        %506 = vmatprep.mubr.f32.mxu0 0.0
        %507 = vmatmul.mubr.f32.gmra.mrb[0].mxu0 %v343
        %v508 = vpop.f32.mrb[0].mxu0
        %v509 = vadd.f32 %v365, %v508
        %v510 = vpop.f32.mrb[0].mxu0
        %511 = vdwg.mxu0
        %v512 = vld [vmem:[%s4] sm:$0xff]
        %v513 = vld [vmem:[%s4 + $0x8] sm:$0xff]
        %v514 = vld [vmem:[%s4 + $0x10] sm:$0xff]
        %v515 = vld [vmem:[%s4 + $0x18] sm:$0xff]
        %v516 = vld [vmem:[%s4 + $0x20] sm:$0xff]
        %v517 = vld [vmem:[%s4 + $0x28] sm:$0xff]
        %v518 = vld [vmem:[%s4 + $0x30] sm:$0xff]
        %v519 = vld [vmem:[%s4 + $0x38] sm:$0xff]
        %v520 = vld [vmem:[%s4 + $0x40] sm:$0xff]
        %v521 = vld [vmem:[%s4 + $0x48] sm:$0xff]
        %v522 = vld [vmem:[%s4 + $0x50] sm:$0xff]
        %v523 = vld [vmem:[%s4 + $0x58] sm:$0xff]
        %v524 = vld [vmem:[%s4 + $0x60] sm:$0xff]
        %v525 = vld [vmem:[%s4 + $0x68] sm:$0xff]
        %v526 = vld [vmem:[%s4 + $0x70] sm:$0xff]
        %v527 = vld [vmem:[%s4 + $0x78] sm:$0xff]
        %v528 = vld [vmem:[%s4 + $0x80] sm:$0xff]
        %v529 = vld [vmem:[%s4 + $0x88] sm:$0xff]
        %v530 = vld [vmem:[%s4 + $0x90] sm:$0xff]
        %v531 = vld [vmem:[%s4 + $0x98] sm:$0xff]
        %v532 = vld [vmem:[%s4 + $0xa0] sm:$0xff]
        %v533 = vld [vmem:[%s4 + $0xa8] sm:$0xff]
        %v534 = vld [vmem:[%s4 + $0xb0] sm:$0xff]
        %v535 = vld [vmem:[%s4 + $0xb8] sm:$0xff]
        %v536 = vld [vmem:[%s4 + $0xc0] sm:$0xff]
        %v537 = vld [vmem:[%s4 + $0xc8] sm:$0xff]
        %v538 = vld [vmem:[%s4 + $0xd0] sm:$0xff]
        %v539 = vld [vmem:[%s4 + $0xd8] sm:$0xff]
        %v540 = vld [vmem:[%s4 + $0xe0] sm:$0xff]
        %v541 = vld [vmem:[%s4 + $0xe8] sm:$0xff]
        %v542 = vld [vmem:[%s4 + $0xf0] sm:$0xff]
        %v543 = vld [vmem:[%s4 + $0xf8] sm:$0xff]
        %v544 = vld [vmem:[%s4 + $0x100] sm:$0xff]
        %v545 = vld [vmem:[%s4 + $0x108] sm:$0xff]
        %v546 = vld [vmem:[%s4 + $0x110] sm:$0xff]
        %v547 = vld [vmem:[%s4 + $0x118] sm:$0xff]
        %v548 = vld [vmem:[%s4 + $0x120] sm:$0xff]
        %v549 = vld [vmem:[%s4 + $0x128] sm:$0xff]
        %v550 = vld [vmem:[%s4 + $0x130] sm:$0xff]
        %v551 = vld [vmem:[%s4 + $0x138] sm:$0xff]
        %v552 = vld [vmem:[%s4 + $0x140] sm:$0xff]
        %v553 = vld [vmem:[%s4 + $0x148] sm:$0xff]
        %v554 = vld [vmem:[%s4 + $0x150] sm:$0xff]
        %v555 = vld [vmem:[%s4 + $0x158] sm:$0xff]
        %v556 = vld [vmem:[%s4 + $0x160] sm:$0xff]
        %v557 = vld [vmem:[%s4 + $0x168] sm:$0xff]
        %v558 = vld [vmem:[%s4 + $0x170] sm:$0xff]
        %v559 = vld [vmem:[%s4 + $0x178] sm:$0xff]
        %v560 = vld [vmem:[%s4 + $0x180] sm:$0xff]
        %v561 = vld [vmem:[%s4 + $0x188] sm:$0xff]
        %v562 = vld [vmem:[%s4 + $0x190] sm:$0xff]
        %v563 = vld [vmem:[%s4 + $0x198] sm:$0xff]
        %v564 = vld [vmem:[%s4 + $0x1a0] sm:$0xff]
        %v565 = vld [vmem:[%s4 + $0x1a8] sm:$0xff]
        %v566 = vld [vmem:[%s4 + $0x1b0] sm:$0xff]
        %v567 = vld [vmem:[%s4 + $0x1b8] sm:$0xff]
        %v568 = vld [vmem:[%s4 + $0x1c0] sm:$0xff]
        %v569 = vld [vmem:[%s4 + $0x1c8] sm:$0xff]
        %v570 = vld [vmem:[%s4 + $0x1d0] sm:$0xff]
        %v571 = vld [vmem:[%s4 + $0x1d8] sm:$0xff]
        %v572 = vld [vmem:[%s4 + $0x1e0] sm:$0xff]
        %v573 = vld [vmem:[%s4 + $0x1e8] sm:$0xff]
        %v574 = vld [vmem:[%s4 + $0x1f0] sm:$0xff]
        %v575 = vld [vmem:[%s4 + $0x1f8] sm:$0xff]
        %v576 = vld [vmem:[%s4 + $0x200] sm:$0xff]
        %v577 = vld [vmem:[%s4 + $0x208] sm:$0xff]
        %v578 = vld [vmem:[%s4 + $0x210] sm:$0xff]
        %v579 = vld [vmem:[%s4 + $0x218] sm:$0xff]
        %v580 = vld [vmem:[%s4 + $0x220] sm:$0xff]
        %v581 = vld [vmem:[%s4 + $0x228] sm:$0xff]
        %v582 = vld [vmem:[%s4 + $0x230] sm:$0xff]
        %v583 = vld [vmem:[%s4 + $0x238] sm:$0xff]
        %v584 = vld [vmem:[%s4 + $0x240] sm:$0xff]
        %v585 = vld [vmem:[%s4 + $0x248] sm:$0xff]
        %v586 = vld [vmem:[%s4 + $0x250] sm:$0xff]
        %v587 = vld [vmem:[%s4 + $0x258] sm:$0xff]
        %v588 = vld [vmem:[%s4 + $0x260] sm:$0xff]
        %v589 = vld [vmem:[%s4 + $0x268] sm:$0xff]
        %v590 = vld [vmem:[%s4 + $0x270] sm:$0xff]
        %v591 = vld [vmem:[%s4 + $0x278] sm:$0xff]
        %v592 = vld [vmem:[%s4 + $0x280] sm:$0xff]
        %v593 = vld [vmem:[%s4 + $0x288] sm:$0xff]
        %v594 = vld [vmem:[%s4 + $0x290] sm:$0xff]
        %v595 = vld [vmem:[%s4 + $0x298] sm:$0xff]
        %v596 = vld [vmem:[%s4 + $0x2a0] sm:$0xff]
        %v597 = vld [vmem:[%s4 + $0x2a8] sm:$0xff]
        %v598 = vld [vmem:[%s4 + $0x2b0] sm:$0xff]
        %v599 = vld [vmem:[%s4 + $0x2b8] sm:$0xff]
        %v600 = vld [vmem:[%s4 + $0x2c0] sm:$0xff]
        %v601 = vld [vmem:[%s4 + $0x2c8] sm:$0xff]
        %v602 = vld [vmem:[%s4 + $0x2d0] sm:$0xff]
        %v603 = vld [vmem:[%s4 + $0x2d8] sm:$0xff]
        %v604 = vld [vmem:[%s4 + $0x2e0] sm:$0xff]
        %v605 = vld [vmem:[%s4 + $0x2e8] sm:$0xff]
        %v606 = vld [vmem:[%s4 + $0x2f0] sm:$0xff]
        %v607 = vld [vmem:[%s4 + $0x2f8] sm:$0xff]
        %v608 = vld [vmem:[%s4 + $0x300] sm:$0xff]
        %v609 = vld [vmem:[%s4 + $0x308] sm:$0xff]
        %v610 = vld [vmem:[%s4 + $0x310] sm:$0xff]
        %v611 = vld [vmem:[%s4 + $0x318] sm:$0xff]
        %v612 = vld [vmem:[%s4 + $0x320] sm:$0xff]
        %v613 = vld [vmem:[%s4 + $0x328] sm:$0xff]
        %v614 = vld [vmem:[%s4 + $0x330] sm:$0xff]
        %v615 = vld [vmem:[%s4 + $0x338] sm:$0xff]
        %v616 = vld [vmem:[%s4 + $0x340] sm:$0xff]
        %v617 = vld [vmem:[%s4 + $0x348] sm:$0xff]
        %v618 = vld [vmem:[%s4 + $0x350] sm:$0xff]
        %v619 = vld [vmem:[%s4 + $0x358] sm:$0xff]
        %v620 = vld [vmem:[%s4 + $0x360] sm:$0xff]
        %v621 = vld [vmem:[%s4 + $0x368] sm:$0xff]
        %v622 = vld [vmem:[%s4 + $0x370] sm:$0xff]
        %v623 = vld [vmem:[%s4 + $0x378] sm:$0xff]
        %624 = vmatprep.subr.mxu0 %v513
        %625 = vmatpush1.msra.mxu0 %v512
        %626 = vmatprep.subr.mxu0 %v520
        %627 = vmatpush1.msra.mxu0 %v519
        %628 = vmatprep.subr.mxu0 %v527
        %629 = vmatpush1.msra.mxu0 %v526
        %630 = vmatprep.subr.mxu0 %v534
        %631 = vmatpush1.msra.mxu0 %v533
        %632 = vmatprep.subr.mxu0 %v541
        %633 = vmatpush1.msra.mxu0 %v540
        %634 = vmatprep.subr.mxu0 %v548
        %635 = vmatpush1.msra.mxu0 %v547
        %636 = vmatprep.subr.mxu0 %v555
        %637 = vmatpush1.msra.mxu0 %v554
        %638 = vmatprep.subr.mxu0 %v562
        %639 = vmatpush1.msra.mxu0 %v561
        %640 = vmatprep.subr.mxu0 %v569
        %641 = vmatpush1.msra.mxu0 %v568
        %642 = vmatprep.subr.mxu0 %v576
        %643 = vmatpush1.msra.mxu0 %v575
        %644 = vmatprep.subr.mxu0 %v583
        %645 = vmatpush1.msra.mxu0 %v582
        %646 = vmatprep.subr.mxu0 %v590
        %647 = vmatpush1.msra.mxu0 %v589
        %648 = vmatprep.subr.mxu0 %v597
        %649 = vmatpush1.msra.mxu0 %v596
        %650 = vmatprep.subr.mxu0 %v604
        %651 = vmatpush1.msra.mxu0 %v603
        %652 = vmatprep.subr.mxu0 %v611
        %653 = vmatpush1.msra.mxu0 %v610
        %654 = vmatprep.subr.mxu0 %v618
        %655 = vmatpush1.msra.mxu0 %v617
        %656 = vmatprep.subr.mxu0 0.0
        %657 = vmatpush1.msra.mxu0 0.0
        %658 = vmatprep.subr.mxu0 0.0
        %659 = vmatpush1.msra.mxu0 0.0
        %660 = vmatprep.subr.mxu0 0.0
        %661 = vmatpush1.msra.mxu0 0.0
        %662 = vmatprep.subr.mxu0 0.0
        %663 = vmatpush1.msra.mxu0 0.0
        %664 = vmatprep.subr.mxu0 0.0
        %665 = vmatpush1.msra.mxu0 0.0
        %666 = vmatprep.subr.mxu0 0.0
        %667 = vmatpush1.msra.mxu0 0.0
        %668 = vmatprep.subr.mxu0 0.0
        %669 = vmatpush1.msra.mxu0 0.0
        %670 = vmatprep.subr.mxu0 0.0
        %671 = vmatpush1.msra.mxu0 0.0
        %672 = vmatprep.subr.mxu0 0.0
        %673 = vmatpush1.msra.mxu0 0.0
        %674 = vmatprep.subr.mxu0 0.0
        %675 = vmatpush1.msra.mxu0 0.0
        %676 = vmatprep.subr.mxu0 0.0
        %677 = vmatpush1.msra.mxu0 0.0
        %678 = vmatprep.subr.mxu0 0.0
        %679 = vmatpush1.msra.mxu0 0.0
        %680 = vmatprep.subr.mxu0 0.0
        %681 = vmatpush1.msra.mxu0 0.0
        %682 = vmatprep.subr.mxu0 0.0
        %683 = vmatpush1.msra.mxu0 0.0
        %684 = vmatprep.subr.mxu0 0.0
        %685 = vmatpush1.msra.mxu0 0.0
        %686 = vmatprep.subr.mxu0 0.0
        %687 = vmatpush1.msra.mxu0 0.0
        %688 = vmatprep.mubr.f32.mxu0 0.0
        %689 = vmatmul.mubr.f32.gmra.mrb[0].mxu0 %v434
        %v690 = vpop.f32.mrb[0].mxu0
        %v691 = vadd.f32 0.0, %v690
        %v692 = vpop.f32.mrb[0].mxu0
        %v693 = vadd.f32 0.0, %v692
        %694 = vmatprep.mubr.f32.mxu0 0.0
        %695 = vmatmul.mubr.f32.gmra.mrb[0].mxu0 %v439
        %v696 = vpop.f32.mrb[0].mxu0
        %v697 = vadd.f32 0.0, %v696
        %v698 = vpop.f32.mrb[0].mxu0
        %v699 = vadd.f32 0.0, %v698
        %700 = vmatprep.mubr.f32.mxu0 0.0
        %701 = vmatmul.mubr.f32.gmra.mrb[0].mxu0 %v444
        %v702 = vpop.f32.mrb[0].mxu0
        %v703 = vadd.f32 0.0, %v702
        %v704 = vpop.f32.mrb[0].mxu0
        %v705 = vadd.f32 0.0, %v704
        %706 = vmatprep.mubr.f32.mxu0 0.0
        %707 = vmatmul.mubr.f32.gmra.mrb[0].mxu0 %v449
        %v708 = vpop.f32.mrb[0].mxu0
        %v709 = vadd.f32 0.0, %v708
        %v710 = vpop.f32.mrb[0].mxu0
        %v711 = vadd.f32 0.0, %v710
        %712 = vmatprep.mubr.f32.mxu0 0.0
        %713 = vmatmul.mubr.f32.gmra.mrb[0].mxu0 %v454
        %v714 = vpop.f32.mrb[0].mxu0
        %v715 = vadd.f32 0.0, %v714
        %v716 = vpop.f32.mrb[0].mxu0
        %v717 = vadd.f32 0.0, %v716
        %718 = vmatprep.mubr.f32.mxu0 0.0
        %719 = vmatmul.mubr.f32.gmra.mrb[0].mxu0 %v459
        %v720 = vpop.f32.mrb[0].mxu0
        %v721 = vadd.f32 0.0, %v720
        %v722 = vpop.f32.mrb[0].mxu0
        %v723 = vadd.f32 0.0, %v722
        %724 = vmatprep.mubr.f32.mxu0 0.0
        %725 = vmatmul.mubr.f32.gmra.mrb[0].mxu0 %v464
        %v726 = vpop.f32.mrb[0].mxu0
        %v727 = vadd.f32 0.0, %v726
        %v728 = vpop.f32.mrb[0].mxu0
        %v729 = vadd.f32 0.0, %v728
        %730 = vmatprep.mubr.f32.mxu0 0.0
        %731 = vmatmul.mubr.f32.gmra.mrb[0].mxu0 %v469
        %v732 = vpop.f32.mrb[0].mxu0
        %v733 = vadd.f32 0.0, %v732
        %v734 = vpop.f32.mrb[0].mxu0
        %v735 = vadd.f32 0.0, %v734
        %736 = vmatprep.mubr.f32.mxu0 0.0
        %737 = vmatmul.mubr.f32.gmra.mrb[0].mxu0 %v474
        %v738 = vpop.f32.mrb[0].mxu0
        %v739 = vadd.f32 0.0, %v738
        %v740 = vpop.f32.mrb[0].mxu0
        %v741 = vadd.f32 0.0, %v740
        %742 = vmatprep.mubr.f32.mxu0 0.0
        %743 = vmatmul.mubr.f32.gmra.mrb[0].mxu0 %v479
        %v744 = vpop.f32.mrb[0].mxu0
        %v745 = vadd.f32 0.0, %v744
        %v746 = vpop.f32.mrb[0].mxu0
        %v747 = vadd.f32 0.0, %v746
        %748 = vmatprep.mubr.f32.mxu0 0.0
        %749 = vmatmul.mubr.f32.gmra.mrb[0].mxu0 %v484
        %v750 = vpop.f32.mrb[0].mxu0
        %v751 = vadd.f32 0.0, %v750
        %v752 = vpop.f32.mrb[0].mxu0
        %v753 = vadd.f32 0.0, %v752
        %754 = vmatprep.mubr.f32.mxu0 0.0
        %755 = vmatmul.mubr.f32.gmra.mrb[0].mxu0 %v489
        %v756 = vpop.f32.mrb[0].mxu0
        %v757 = vadd.f32 0.0, %v756
        %v758 = vpop.f32.mrb[0].mxu0
        %v759 = vadd.f32 0.0, %v758
        %760 = vmatprep.mubr.f32.mxu0 0.0
        %761 = vmatmul.mubr.f32.gmra.mrb[0].mxu0 %v494
        %v762 = vpop.f32.mrb[0].mxu0
        %v763 = vadd.f32 0.0, %v762
        %v764 = vpop.f32.mrb[0].mxu0
        %v765 = vadd.f32 0.0, %v764
        %766 = vmatprep.mubr.f32.mxu0 0.0
        %767 = vmatmul.mubr.f32.gmra.mrb[0].mxu0 %v499
        %v768 = vpop.f32.mrb[0].mxu0
        %v769 = vadd.f32 0.0, %v768
        %v770 = vpop.f32.mrb[0].mxu0
        %v771 = vadd.f32 0.0, %v770
        %772 = vmatprep.mubr.f32.mxu0 0.0
        %773 = vmatmul.mubr.f32.gmra.mrb[0].mxu0 %v504
        %v774 = vpop.f32.mrb[0].mxu0
        %v775 = vadd.f32 0.0, %v774
        %v776 = vpop.f32.mrb[0].mxu0
        %v777 = vadd.f32 0.0, %v776
        %778 = vmatprep.mubr.f32.mxu0 0.0
        %779 = vmatmul.mubr.f32.gmra.mrb[0].mxu0 %v509
        %v780 = vpop.f32.mrb[0].mxu0
        %v781 = vadd.f32 0.0, %v780
        %v782 = vpop.f32.mrb[0].mxu0
        %v783 = vadd.f32 0.0, %v782
        %784 = vdwg.mxu0
        %785 = vmatprep.subr.mxu0 %v515
        %786 = vmatpush1.msra.mxu0 %v514
        %787 = vmatprep.subr.mxu0 %v522
        %788 = vmatpush1.msra.mxu0 %v521
        %789 = vmatprep.subr.mxu0 %v529
        %790 = vmatpush1.msra.mxu0 %v528
        %791 = vmatprep.subr.mxu0 %v536
        %792 = vmatpush1.msra.mxu0 %v535
        %793 = vmatprep.subr.mxu0 %v543
        %794 = vmatpush1.msra.mxu0 %v542
        %795 = vmatprep.subr.mxu0 %v550
        %796 = vmatpush1.msra.mxu0 %v549
        %797 = vmatprep.subr.mxu0 %v557
        %798 = vmatpush1.msra.mxu0 %v556
        %799 = vmatprep.subr.mxu0 %v564
        %800 = vmatpush1.msra.mxu0 %v563
        %801 = vmatprep.subr.mxu0 %v571
        %802 = vmatpush1.msra.mxu0 %v570
        %803 = vmatprep.subr.mxu0 %v578
        %804 = vmatpush1.msra.mxu0 %v577
        %805 = vmatprep.subr.mxu0 %v585
        %806 = vmatpush1.msra.mxu0 %v584
        %807 = vmatprep.subr.mxu0 %v592
        %808 = vmatpush1.msra.mxu0 %v591
        %809 = vmatprep.subr.mxu0 %v599
        %810 = vmatpush1.msra.mxu0 %v598
        %811 = vmatprep.subr.mxu0 %v606
        %812 = vmatpush1.msra.mxu0 %v605
        %813 = vmatprep.subr.mxu0 %v613
        %814 = vmatpush1.msra.mxu0 %v612
        %815 = vmatprep.subr.mxu0 %v620
        %816 = vmatpush1.msra.mxu0 %v619
        %817 = vmatprep.subr.mxu0 0.0
        %818 = vmatpush1.msra.mxu0 0.0
        %819 = vmatprep.subr.mxu0 0.0
        %820 = vmatpush1.msra.mxu0 0.0
        %821 = vmatprep.subr.mxu0 0.0
        %822 = vmatpush1.msra.mxu0 0.0
        %823 = vmatprep.subr.mxu0 0.0
        %824 = vmatpush1.msra.mxu0 0.0
        %825 = vmatprep.subr.mxu0 0.0
        %826 = vmatpush1.msra.mxu0 0.0
        %827 = vmatprep.subr.mxu0 0.0
        %828 = vmatpush1.msra.mxu0 0.0
        %829 = vmatprep.subr.mxu0 0.0
        %830 = vmatpush1.msra.mxu0 0.0
        %831 = vmatprep.subr.mxu0 0.0
        %832 = vmatpush1.msra.mxu0 0.0
        %833 = vmatprep.subr.mxu0 0.0
        %834 = vmatpush1.msra.mxu0 0.0
        %835 = vmatprep.subr.mxu0 0.0
        %836 = vmatpush1.msra.mxu0 0.0
        %837 = vmatprep.subr.mxu0 0.0
        %838 = vmatpush1.msra.mxu0 0.0
        %839 = vmatprep.subr.mxu0 0.0
        %840 = vmatpush1.msra.mxu0 0.0
        %841 = vmatprep.subr.mxu0 0.0
        %842 = vmatpush1.msra.mxu0 0.0
        %843 = vmatprep.subr.mxu0 0.0
        %844 = vmatpush1.msra.mxu0 0.0
        %845 = vmatprep.subr.mxu0 0.0
        %846 = vmatpush1.msra.mxu0 0.0
        %847 = vmatprep.subr.mxu0 0.0
        %848 = vmatpush1.msra.mxu0 0.0
        %849 = vmatprep.mubr.f32.mxu0 0.0
        %850 = vmatmul.mubr.f32.gmra.mrb[0].mxu0 %v434
        %v851 = vpop.f32.mrb[0].mxu0
        %v852 = vadd.f32 0.0, %v851
        %v853 = vpop.f32.mrb[0].mxu0
        %v854 = vadd.f32 0.0, %v853
        %855 = vmatprep.mubr.f32.mxu0 0.0
        %856 = vmatmul.mubr.f32.gmra.mrb[0].mxu0 %v439
        %v857 = vpop.f32.mrb[0].mxu0
        %v858 = vadd.f32 0.0, %v857
        %v859 = vpop.f32.mrb[0].mxu0
        %v860 = vadd.f32 0.0, %v859
        %861 = vmatprep.mubr.f32.mxu0 0.0
        %862 = vmatmul.mubr.f32.gmra.mrb[0].mxu0 %v444
        %v863 = vpop.f32.mrb[0].mxu0
        %v864 = vadd.f32 0.0, %v863
        %v865 = vpop.f32.mrb[0].mxu0
        %v866 = vadd.f32 0.0, %v865
        %867 = vmatprep.mubr.f32.mxu0 0.0
        %868 = vmatmul.mubr.f32.gmra.mrb[0].mxu0 %v449
        %v869 = vpop.f32.mrb[0].mxu0
        %v870 = vadd.f32 0.0, %v869
        %v871 = vpop.f32.mrb[0].mxu0
        %v872 = vadd.f32 0.0, %v871
        %873 = vmatprep.mubr.f32.mxu0 0.0
        %874 = vmatmul.mubr.f32.gmra.mrb[0].mxu0 %v454
        %v875 = vpop.f32.mrb[0].mxu0
        %v876 = vadd.f32 0.0, %v875
        %v877 = vpop.f32.mrb[0].mxu0
        %v878 = vadd.f32 0.0, %v877
        %879 = vmatprep.mubr.f32.mxu0 0.0
        %880 = vmatmul.mubr.f32.gmra.mrb[0].mxu0 %v459
        %v881 = vpop.f32.mrb[0].mxu0
        %v882 = vadd.f32 0.0, %v881
        %v883 = vpop.f32.mrb[0].mxu0
        %v884 = vadd.f32 0.0, %v883
        %885 = vmatprep.mubr.f32.mxu0 0.0
        %886 = vmatmul.mubr.f32.gmra.mrb[0].mxu0 %v464
        %v887 = vpop.f32.mrb[0].mxu0
        %v888 = vadd.f32 0.0, %v887
        %v889 = vpop.f32.mrb[0].mxu0
        %v890 = vadd.f32 0.0, %v889
        %891 = vmatprep.mubr.f32.mxu0 0.0
        %892 = vmatmul.mubr.f32.gmra.mrb[0].mxu0 %v469
        %v893 = vpop.f32.mrb[0].mxu0
        %v894 = vadd.f32 0.0, %v893
        %v895 = vpop.f32.mrb[0].mxu0
        %v896 = vadd.f32 0.0, %v895
        %897 = vmatprep.mubr.f32.mxu0 0.0
        %898 = vmatmul.mubr.f32.gmra.mrb[0].mxu0 %v474
        %v899 = vpop.f32.mrb[0].mxu0
        %v900 = vadd.f32 0.0, %v899
        %v901 = vpop.f32.mrb[0].mxu0
        %v902 = vadd.f32 0.0, %v901
        %903 = vmatprep.mubr.f32.mxu0 0.0
        %904 = vmatmul.mubr.f32.gmra.mrb[0].mxu0 %v479
        %v905 = vpop.f32.mrb[0].mxu0
        %v906 = vadd.f32 0.0, %v905
        %v907 = vpop.f32.mrb[0].mxu0
        %v908 = vadd.f32 0.0, %v907
        %909 = vmatprep.mubr.f32.mxu0 0.0
        %910 = vmatmul.mubr.f32.gmra.mrb[0].mxu0 %v484
        %v911 = vpop.f32.mrb[0].mxu0
        %v912 = vadd.f32 0.0, %v911
        %v913 = vpop.f32.mrb[0].mxu0
        %v914 = vadd.f32 0.0, %v913
        %915 = vmatprep.mubr.f32.mxu0 0.0
        %916 = vmatmul.mubr.f32.gmra.mrb[0].mxu0 %v489
        %v917 = vpop.f32.mrb[0].mxu0
        %v918 = vadd.f32 0.0, %v917
        %v919 = vpop.f32.mrb[0].mxu0
        %v920 = vadd.f32 0.0, %v919
        %921 = vmatprep.mubr.f32.mxu0 0.0
        %922 = vmatmul.mubr.f32.gmra.mrb[0].mxu0 %v494
        %v923 = vpop.f32.mrb[0].mxu0
        %v924 = vadd.f32 0.0, %v923
        %v925 = vpop.f32.mrb[0].mxu0
        %v926 = vadd.f32 0.0, %v925
        %927 = vmatprep.mubr.f32.mxu0 0.0
        %928 = vmatmul.mubr.f32.gmra.mrb[0].mxu0 %v499
        %v929 = vpop.f32.mrb[0].mxu0
        %v930 = vadd.f32 0.0, %v929
        %v931 = vpop.f32.mrb[0].mxu0
        %v932 = vadd.f32 0.0, %v931
        %933 = vmatprep.mubr.f32.mxu0 0.0
        %934 = vmatmul.mubr.f32.gmra.mrb[0].mxu0 %v504
        %v935 = vpop.f32.mrb[0].mxu0
        %v936 = vadd.f32 0.0, %v935
        %v937 = vpop.f32.mrb[0].mxu0
        %v938 = vadd.f32 0.0, %v937
        %939 = vmatprep.mubr.f32.mxu0 0.0
        %940 = vmatmul.mubr.f32.gmra.mrb[0].mxu0 %v509
        %v941 = vpop.f32.mrb[0].mxu0
        %v942 = vadd.f32 0.0, %v941
        %v943 = vpop.f32.mrb[0].mxu0
        %v944 = vadd.f32 0.0, %v943
        %945 = vdwg.mxu0
        %946 = vmatprep.subr.mxu0 %v517
        %947 = vmatpush1.msra.mxu0 %v516
        %948 = vmatprep.subr.mxu0 %v524
        %949 = vmatpush1.msra.mxu0 %v523
        %950 = vmatprep.subr.mxu0 %v531
        %951 = vmatpush1.msra.mxu0 %v530
        %952 = vmatprep.subr.mxu0 %v538
        %953 = vmatpush1.msra.mxu0 %v537
        %954 = vmatprep.subr.mxu0 %v545
        %955 = vmatpush1.msra.mxu0 %v544
        %956 = vmatprep.subr.mxu0 %v552
        %957 = vmatpush1.msra.mxu0 %v551
        %958 = vmatprep.subr.mxu0 %v559
        %959 = vmatpush1.msra.mxu0 %v558
        %960 = vmatprep.subr.mxu0 %v566
        %961 = vmatpush1.msra.mxu0 %v565
        %962 = vmatprep.subr.mxu0 %v573
        %963 = vmatpush1.msra.mxu0 %v572
        %964 = vmatprep.subr.mxu0 %v580
        %965 = vmatpush1.msra.mxu0 %v579
        %966 = vmatprep.subr.mxu0 %v587
        %967 = vmatpush1.msra.mxu0 %v586
        %968 = vmatprep.subr.mxu0 %v594
        %969 = vmatpush1.msra.mxu0 %v593
        %970 = vmatprep.subr.mxu0 %v601
        %971 = vmatpush1.msra.mxu0 %v600
        %972 = vmatprep.subr.mxu0 %v608
        %973 = vmatpush1.msra.mxu0 %v607
        %974 = vmatprep.subr.mxu0 %v615
        %975 = vmatpush1.msra.mxu0 %v614
        %976 = vmatprep.subr.mxu0 %v622
        %977 = vmatpush1.msra.mxu0 %v621
        %978 = vmatprep.subr.mxu0 0.0
        %979 = vmatpush1.msra.mxu0 0.0
        %980 = vmatprep.subr.mxu0 0.0
        %981 = vmatpush1.msra.mxu0 0.0
        %982 = vmatprep.subr.mxu0 0.0
        %983 = vmatpush1.msra.mxu0 0.0
        %984 = vmatprep.subr.mxu0 0.0
        %985 = vmatpush1.msra.mxu0 0.0
        %986 = vmatprep.subr.mxu0 0.0
        %987 = vmatpush1.msra.mxu0 0.0
        %988 = vmatprep.subr.mxu0 0.0
        %989 = vmatpush1.msra.mxu0 0.0
        %990 = vmatprep.subr.mxu0 0.0
        %991 = vmatpush1.msra.mxu0 0.0
        %992 = vmatprep.subr.mxu0 0.0
        %993 = vmatpush1.msra.mxu0 0.0
        %994 = vmatprep.subr.mxu0 0.0
        %995 = vmatpush1.msra.mxu0 0.0
        %996 = vmatprep.subr.mxu0 0.0
        %997 = vmatpush1.msra.mxu0 0.0
        %998 = vmatprep.subr.mxu0 0.0
        %999 = vmatpush1.msra.mxu0 0.0
        %1000 = vmatprep.subr.mxu0 0.0
        %1001 = vmatpush1.msra.mxu0 0.0
        %1002 = vmatprep.subr.mxu0 0.0
        %1003 = vmatpush1.msra.mxu0 0.0
        %1004 = vmatprep.subr.mxu0 0.0
        %1005 = vmatpush1.msra.mxu0 0.0
        %1006 = vmatprep.subr.mxu0 0.0
        %1007 = vmatpush1.msra.mxu0 0.0
        %1008 = vmatprep.subr.mxu0 0.0
        %1009 = vmatpush1.msra.mxu0 0.0
        %1010 = vmatprep.mubr.f32.mxu0 0.0
        %1011 = vmatmul.mubr.f32.gmra.mrb[0].mxu0 %v434
        %v1012 = vpop.f32.mrb[0].mxu0
        %v1013 = vadd.f32 0.0, %v1012
        %v1014 = vpop.f32.mrb[0].mxu0
        %v1015 = vadd.f32 0.0, %v1014
        %1016 = vmatprep.mubr.f32.mxu0 0.0
        %1017 = vmatmul.mubr.f32.gmra.mrb[0].mxu0 %v439
        %v1018 = vpop.f32.mrb[0].mxu0
        %v1019 = vadd.f32 0.0, %v1018
        %v1020 = vpop.f32.mrb[0].mxu0
        %v1021 = vadd.f32 0.0, %v1020
        %1022 = vmatprep.mubr.f32.mxu0 0.0
        %1023 = vmatmul.mubr.f32.gmra.mrb[0].mxu0 %v444
        %v1024 = vpop.f32.mrb[0].mxu0
        %v1025 = vadd.f32 0.0, %v1024
        %v1026 = vpop.f32.mrb[0].mxu0
        %v1027 = vadd.f32 0.0, %v1026
        %1028 = vmatprep.mubr.f32.mxu0 0.0
        %1029 = vmatmul.mubr.f32.gmra.mrb[0].mxu0 %v449
        %v1030 = vpop.f32.mrb[0].mxu0
        %v1031 = vadd.f32 0.0, %v1030
        %v1032 = vpop.f32.mrb[0].mxu0
        %v1033 = vadd.f32 0.0, %v1032
        %1034 = vmatprep.mubr.f32.mxu0 0.0
        %1035 = vmatmul.mubr.f32.gmra.mrb[0].mxu0 %v454
        %v1036 = vpop.f32.mrb[0].mxu0
        %v1037 = vadd.f32 0.0, %v1036
        %v1038 = vpop.f32.mrb[0].mxu0
        %v1039 = vadd.f32 0.0, %v1038
        %1040 = vmatprep.mubr.f32.mxu0 0.0
        %1041 = vmatmul.mubr.f32.gmra.mrb[0].mxu0 %v459
        %v1042 = vpop.f32.mrb[0].mxu0
        %v1043 = vadd.f32 0.0, %v1042
        %v1044 = vpop.f32.mrb[0].mxu0
        %v1045 = vadd.f32 0.0, %v1044
        %1046 = vmatprep.mubr.f32.mxu0 0.0
        %1047 = vmatmul.mubr.f32.gmra.mrb[0].mxu0 %v464
        %v1048 = vpop.f32.mrb[0].mxu0
        %v1049 = vadd.f32 0.0, %v1048
        %v1050 = vpop.f32.mrb[0].mxu0
        %v1051 = vadd.f32 0.0, %v1050
        %1052 = vmatprep.mubr.f32.mxu0 0.0
        %1053 = vmatmul.mubr.f32.gmra.mrb[0].mxu0 %v469
        %v1054 = vpop.f32.mrb[0].mxu0
        %v1055 = vadd.f32 0.0, %v1054
        %v1056 = vpop.f32.mrb[0].mxu0
        %v1057 = vadd.f32 0.0, %v1056
        %1058 = vmatprep.mubr.f32.mxu0 0.0
        %1059 = vmatmul.mubr.f32.gmra.mrb[0].mxu0 %v474
        %v1060 = vpop.f32.mrb[0].mxu0
        %v1061 = vadd.f32 0.0, %v1060
        %v1062 = vpop.f32.mrb[0].mxu0
        %v1063 = vadd.f32 0.0, %v1062
        %1064 = vmatprep.mubr.f32.mxu0 0.0
        %1065 = vmatmul.mubr.f32.gmra.mrb[0].mxu0 %v479
        %v1066 = vpop.f32.mrb[0].mxu0
        %v1067 = vadd.f32 0.0, %v1066
        %v1068 = vpop.f32.mrb[0].mxu0
        %v1069 = vadd.f32 0.0, %v1068
        %1070 = vmatprep.mubr.f32.mxu0 0.0
        %1071 = vmatmul.mubr.f32.gmra.mrb[0].mxu0 %v484
        %v1072 = vpop.f32.mrb[0].mxu0
        %v1073 = vadd.f32 0.0, %v1072
        %v1074 = vpop.f32.mrb[0].mxu0
        %v1075 = vadd.f32 0.0, %v1074
        %1076 = vmatprep.mubr.f32.mxu0 0.0
        %1077 = vmatmul.mubr.f32.gmra.mrb[0].mxu0 %v489
        %v1078 = vpop.f32.mrb[0].mxu0
        %v1079 = vadd.f32 0.0, %v1078
        %v1080 = vpop.f32.mrb[0].mxu0
        %v1081 = vadd.f32 0.0, %v1080
        %1082 = vmatprep.mubr.f32.mxu0 0.0
        %1083 = vmatmul.mubr.f32.gmra.mrb[0].mxu0 %v494
        %v1084 = vpop.f32.mrb[0].mxu0
        %v1085 = vadd.f32 0.0, %v1084
        %v1086 = vpop.f32.mrb[0].mxu0
        %v1087 = vadd.f32 0.0, %v1086
        %1088 = vmatprep.mubr.f32.mxu0 0.0
        %1089 = vmatmul.mubr.f32.gmra.mrb[0].mxu0 %v499
        %v1090 = vpop.f32.mrb[0].mxu0
        %v1091 = vadd.f32 0.0, %v1090
        %v1092 = vpop.f32.mrb[0].mxu0
        %v1093 = vadd.f32 0.0, %v1092
        %1094 = vmatprep.mubr.f32.mxu0 0.0
        %1095 = vmatmul.mubr.f32.gmra.mrb[0].mxu0 %v504
        %v1096 = vpop.f32.mrb[0].mxu0
        %v1097 = vadd.f32 0.0, %v1096
        %v1098 = vpop.f32.mrb[0].mxu0
        %v1099 = vadd.f32 0.0, %v1098
        %1100 = vmatprep.mubr.f32.mxu0 0.0
        %1101 = vmatmul.mubr.f32.gmra.mrb[0].mxu0 %v509
        %v1102 = vpop.f32.mrb[0].mxu0
        %v1103 = vadd.f32 0.0, %v1102
        %v1104 = vpop.f32.mrb[0].mxu0
        %v1105 = vadd.f32 0.0, %v1104
        %1106 = vdwg.mxu0
        %1107 = vmatprep.subr.mxu0 0.0
        %1108 = vmatpush1.msra.mxu0 %v518
        %1109 = vmatprep.subr.mxu0 0.0
        %1110 = vmatpush1.msra.mxu0 %v525
        %1111 = vmatprep.subr.mxu0 0.0
        %1112 = vmatpush1.msra.mxu0 %v532
        %1113 = vmatprep.subr.mxu0 0.0
        %1114 = vmatpush1.msra.mxu0 %v539
        %1115 = vmatprep.subr.mxu0 0.0
        %1116 = vmatpush1.msra.mxu0 %v546
        %1117 = vmatprep.subr.mxu0 0.0
        %1118 = vmatpush1.msra.mxu0 %v553
        %1119 = vmatprep.subr.mxu0 0.0
        %1120 = vmatpush1.msra.mxu0 %v560
        %1121 = vmatprep.subr.mxu0 0.0
        %1122 = vmatpush1.msra.mxu0 %v567
        %1123 = vmatprep.subr.mxu0 0.0
        %1124 = vmatpush1.msra.mxu0 %v574
        %1125 = vmatprep.subr.mxu0 0.0
        %1126 = vmatpush1.msra.mxu0 %v581
        %1127 = vmatprep.subr.mxu0 0.0
        %1128 = vmatpush1.msra.mxu0 %v588
        %1129 = vmatprep.subr.mxu0 0.0
        %1130 = vmatpush1.msra.mxu0 %v595
        %1131 = vmatprep.subr.mxu0 0.0
        %1132 = vmatpush1.msra.mxu0 %v602
        %1133 = vmatprep.subr.mxu0 0.0
        %1134 = vmatpush1.msra.mxu0 %v609
        %1135 = vmatprep.subr.mxu0 0.0
        %1136 = vmatpush1.msra.mxu0 %v616
        %1137 = vmatprep.subr.mxu0 0.0
        %1138 = vmatpush1.msra.mxu0 %v623
        %1139 = vmatprep.subr.mxu0 0.0
        %1140 = vmatpush1.msra.mxu0 0.0
        %1141 = vmatprep.subr.mxu0 0.0
        %1142 = vmatpush1.msra.mxu0 0.0
        %1143 = vmatprep.subr.mxu0 0.0
        %1144 = vmatpush1.msra.mxu0 0.0
        %1145 = vmatprep.subr.mxu0 0.0
        %1146 = vmatpush1.msra.mxu0 0.0
        %1147 = vmatprep.subr.mxu0 0.0
        %1148 = vmatpush1.msra.mxu0 0.0
        %1149 = vmatprep.subr.mxu0 0.0
        %1150 = vmatpush1.msra.mxu0 0.0
        %1151 = vmatprep.subr.mxu0 0.0
        %1152 = vmatpush1.msra.mxu0 0.0
        %1153 = vmatprep.subr.mxu0 0.0
        %1154 = vmatpush1.msra.mxu0 0.0
        %1155 = vmatprep.subr.mxu0 0.0
        %1156 = vmatpush1.msra.mxu0 0.0
        %1157 = vmatprep.subr.mxu0 0.0
        %1158 = vmatpush1.msra.mxu0 0.0
        %1159 = vmatprep.subr.mxu0 0.0
        %1160 = vmatpush1.msra.mxu0 0.0
        %1161 = vmatprep.subr.mxu0 0.0
        %1162 = vmatpush1.msra.mxu0 0.0
        %1163 = vmatprep.subr.mxu0 0.0
        %1164 = vmatpush1.msra.mxu0 0.0
        %1165 = vmatprep.subr.mxu0 0.0
        %1166 = vmatpush1.msra.mxu0 0.0
        %1167 = vmatprep.subr.mxu0 0.0
        %1168 = vmatpush1.msra.mxu0 0.0
        %1169 = vmatprep.subr.mxu0 0.0
        %1170 = vmatpush1.msra.mxu0 0.0
        %1171 = vmatprep.mubr.f32.mxu0 0.0
        %1172 = vmatmul.mubr.f32.gmra.mrb[0].mxu0 %v434
        %v1173 = vpop.f32.mrb[0].mxu0
        %v1174 = vadd.f32 0.0, %v1173
        %v1175 = vpop.f32.mrb[0].mxu0
        %1176 = vmatprep.mubr.f32.mxu0 0.0
        %1177 = vmatmul.mubr.f32.gmra.mrb[0].mxu0 %v439
        %v1178 = vpop.f32.mrb[0].mxu0
        %v1179 = vadd.f32 0.0, %v1178
        %v1180 = vpop.f32.mrb[0].mxu0
        %1181 = vmatprep.mubr.f32.mxu0 0.0
        %1182 = vmatmul.mubr.f32.gmra.mrb[0].mxu0 %v444
        %v1183 = vpop.f32.mrb[0].mxu0
        %v1184 = vadd.f32 0.0, %v1183
        %v1185 = vpop.f32.mrb[0].mxu0
        %1186 = vmatprep.mubr.f32.mxu0 0.0
        %1187 = vmatmul.mubr.f32.gmra.mrb[0].mxu0 %v449
        %v1188 = vpop.f32.mrb[0].mxu0
        %v1189 = vadd.f32 0.0, %v1188
        %v1190 = vpop.f32.mrb[0].mxu0
        %1191 = vmatprep.mubr.f32.mxu0 0.0
        %1192 = vmatmul.mubr.f32.gmra.mrb[0].mxu0 %v454
        %v1193 = vpop.f32.mrb[0].mxu0
        %v1194 = vadd.f32 0.0, %v1193
        %v1195 = vpop.f32.mrb[0].mxu0
        %1196 = vmatprep.mubr.f32.mxu0 0.0
        %1197 = vmatmul.mubr.f32.gmra.mrb[0].mxu0 %v459
        %v1198 = vpop.f32.mrb[0].mxu0
        %v1199 = vadd.f32 0.0, %v1198
        %v1200 = vpop.f32.mrb[0].mxu0
        %1201 = vmatprep.mubr.f32.mxu0 0.0
        %1202 = vmatmul.mubr.f32.gmra.mrb[0].mxu0 %v464
        %v1203 = vpop.f32.mrb[0].mxu0
        %v1204 = vadd.f32 0.0, %v1203
        %v1205 = vpop.f32.mrb[0].mxu0
        %1206 = vmatprep.mubr.f32.mxu0 0.0
        %1207 = vmatmul.mubr.f32.gmra.mrb[0].mxu0 %v469
        %v1208 = vpop.f32.mrb[0].mxu0
        %v1209 = vadd.f32 0.0, %v1208
        %v1210 = vpop.f32.mrb[0].mxu0
        %1211 = vmatprep.mubr.f32.mxu0 0.0
        %1212 = vmatmul.mubr.f32.gmra.mrb[0].mxu0 %v474
        %v1213 = vpop.f32.mrb[0].mxu0
        %v1214 = vadd.f32 0.0, %v1213
        %v1215 = vpop.f32.mrb[0].mxu0
        %1216 = vmatprep.mubr.f32.mxu0 0.0
        %1217 = vmatmul.mubr.f32.gmra.mrb[0].mxu0 %v479
        %v1218 = vpop.f32.mrb[0].mxu0
        %v1219 = vadd.f32 0.0, %v1218
        %v1220 = vpop.f32.mrb[0].mxu0
        %1221 = vmatprep.mubr.f32.mxu0 0.0
        %1222 = vmatmul.mubr.f32.gmra.mrb[0].mxu0 %v484
        %v1223 = vpop.f32.mrb[0].mxu0
        %v1224 = vadd.f32 0.0, %v1223
        %v1225 = vpop.f32.mrb[0].mxu0
        %1226 = vmatprep.mubr.f32.mxu0 0.0
        %1227 = vmatmul.mubr.f32.gmra.mrb[0].mxu0 %v489
        %v1228 = vpop.f32.mrb[0].mxu0
        %v1229 = vadd.f32 0.0, %v1228
        %v1230 = vpop.f32.mrb[0].mxu0
        %1231 = vmatprep.mubr.f32.mxu0 0.0
        %1232 = vmatmul.mubr.f32.gmra.mrb[0].mxu0 %v494
        %v1233 = vpop.f32.mrb[0].mxu0
        %v1234 = vadd.f32 0.0, %v1233
        %v1235 = vpop.f32.mrb[0].mxu0
        %1236 = vmatprep.mubr.f32.mxu0 0.0
        %1237 = vmatmul.mubr.f32.gmra.mrb[0].mxu0 %v499
        %v1238 = vpop.f32.mrb[0].mxu0
        %v1239 = vadd.f32 0.0, %v1238
        %v1240 = vpop.f32.mrb[0].mxu0
        %1241 = vmatprep.mubr.f32.mxu0 0.0
        %1242 = vmatmul.mubr.f32.gmra.mrb[0].mxu0 %v504
        %v1243 = vpop.f32.mrb[0].mxu0
        %v1244 = vadd.f32 0.0, %v1243
        %v1245 = vpop.f32.mrb[0].mxu0
        %1246 = vmatprep.mubr.f32.mxu0 0.0
        %1247 = vmatmul.mubr.f32.gmra.mrb[0].mxu0 %v509
        %v1248 = vpop.f32.mrb[0].mxu0
        %v1249 = vadd.f32 0.0, %v1248
        %v1250 = vpop.f32.mrb[0].mxu0
        %1251 = vdwg.mxu0
        %v1252 = vpack.c.bf16 %v697, %v691
        %v1253 = vpack.c.bf16 %v699, %v693
        %v1254 = vpack.c.bf16 %v858, %v852
        %v1255 = vpack.c.bf16 %v860, %v854
        %v1256 = vpack.c.bf16 %v1019, %v1013
        %v1257 = vpack.c.bf16 %v1021, %v1015
        %v1258 = vpack.c.bf16 %v1179, %v1174
        %v1259 = vpack.c.bf16 %v709, %v703
        %v1260 = vpack.c.bf16 %v711, %v705
        %v1261 = vpack.c.bf16 %v870, %v864
        %v1262 = vpack.c.bf16 %v872, %v866
        %v1263 = vpack.c.bf16 %v1031, %v1025
        %v1264 = vpack.c.bf16 %v1033, %v1027
        %v1265 = vpack.c.bf16 %v1189, %v1184
        %v1266 = vpack.c.bf16 %v721, %v715
        %v1267 = vpack.c.bf16 %v723, %v717
        %v1268 = vpack.c.bf16 %v882, %v876
        %v1269 = vpack.c.bf16 %v884, %v878
        %v1270 = vpack.c.bf16 %v1043, %v1037
        %v1271 = vpack.c.bf16 %v1045, %v1039
        %v1272 = vpack.c.bf16 %v1199, %v1194
        %v1273 = vpack.c.bf16 %v733, %v727
        %v1274 = vpack.c.bf16 %v735, %v729
        %v1275 = vpack.c.bf16 %v894, %v888
        %v1276 = vpack.c.bf16 %v896, %v890
        %v1277 = vpack.c.bf16 %v1055, %v1049
        %v1278 = vpack.c.bf16 %v1057, %v1051
        %v1279 = vpack.c.bf16 %v1209, %v1204
        %v1280 = vpack.c.bf16 %v745, %v739
        %v1281 = vpack.c.bf16 %v747, %v741
        %v1282 = vpack.c.bf16 %v906, %v900
        %v1283 = vpack.c.bf16 %v908, %v902
        %v1284 = vpack.c.bf16 %v1067, %v1061
        %v1285 = vpack.c.bf16 %v1069, %v1063
        %v1286 = vpack.c.bf16 %v1219, %v1214
        %v1287 = vpack.c.bf16 %v757, %v751
        %v1288 = vpack.c.bf16 %v759, %v753
        %v1289 = vpack.c.bf16 %v918, %v912
        %v1290 = vpack.c.bf16 %v920, %v914
        %v1291 = vpack.c.bf16 %v1079, %v1073
        %v1292 = vpack.c.bf16 %v1081, %v1075
        %v1293 = vpack.c.bf16 %v1229, %v1224
        %v1294 = vpack.c.bf16 %v769, %v763
        %v1295 = vpack.c.bf16 %v771, %v765
        %v1296 = vpack.c.bf16 %v930, %v924
        %v1297 = vpack.c.bf16 %v932, %v926
        %v1298 = vpack.c.bf16 %v1091, %v1085
        %v1299 = vpack.c.bf16 %v1093, %v1087
        %v1300 = vpack.c.bf16 %v1239, %v1234
        %v1301 = vpack.c.bf16 %v781, %v775
        %v1302 = vpack.c.bf16 %v783, %v777
        %v1303 = vpack.c.bf16 %v942, %v936
        %v1304 = vpack.c.bf16 %v944, %v938
        %v1305 = vpack.c.bf16 %v1103, %v1097
        %v1306 = vpack.c.bf16 %v1105, %v1099
        %v1307 = vpack.c.bf16 %v1249, %v1244
        %v1364 = vunpack.c.l.b16 %v1252
        %v1365 = vunpack.c.l.b16 %v1253
        %v1366 = vunpack.c.l.b16 %v1254
        %v1367 = vunpack.c.l.b16 %v1255
        %v1368 = vunpack.c.l.b16 %v1256
        %v1369 = vunpack.c.l.b16 %v1257
        %v1370 = vunpack.c.l.b16 %v1258
        %v1371 = vunpack.c.h.b16 %v1252
        %v1372 = vunpack.c.h.b16 %v1253
        %v1373 = vunpack.c.h.b16 %v1254
        %v1374 = vunpack.c.h.b16 %v1255
        %v1375 = vunpack.c.h.b16 %v1256
        %v1376 = vunpack.c.h.b16 %v1257
        %v1377 = vunpack.c.h.b16 %v1258
        %v1378 = vunpack.c.l.b16 %v1259
        %v1379 = vunpack.c.l.b16 %v1260
        %v1380 = vunpack.c.l.b16 %v1261
        %v1381 = vunpack.c.l.b16 %v1262
        %v1382 = vunpack.c.l.b16 %v1263
        %v1383 = vunpack.c.l.b16 %v1264
        %v1384 = vunpack.c.l.b16 %v1265
        %v1385 = vunpack.c.h.b16 %v1259
        %v1386 = vunpack.c.h.b16 %v1260
        %v1387 = vunpack.c.h.b16 %v1261
        %v1388 = vunpack.c.h.b16 %v1262
        %v1389 = vunpack.c.h.b16 %v1263
        %v1390 = vunpack.c.h.b16 %v1264
        %v1391 = vunpack.c.h.b16 %v1265
        %v1392 = vunpack.c.l.b16 %v1266
        %v1393 = vunpack.c.l.b16 %v1267
        %v1394 = vunpack.c.l.b16 %v1268
        %v1395 = vunpack.c.l.b16 %v1269
        %v1396 = vunpack.c.l.b16 %v1270
        %v1397 = vunpack.c.l.b16 %v1271
        %v1398 = vunpack.c.l.b16 %v1272
        %v1399 = vunpack.c.h.b16 %v1266
        %v1400 = vunpack.c.h.b16 %v1267
        %v1401 = vunpack.c.h.b16 %v1268
        %v1402 = vunpack.c.h.b16 %v1269
        %v1403 = vunpack.c.h.b16 %v1270
        %v1404 = vunpack.c.h.b16 %v1271
        %v1405 = vunpack.c.h.b16 %v1272
        %v1406 = vunpack.c.l.b16 %v1273
        %v1407 = vunpack.c.l.b16 %v1274
        %v1408 = vunpack.c.l.b16 %v1275
        %v1409 = vunpack.c.l.b16 %v1276
        %v1410 = vunpack.c.l.b16 %v1277
        %v1411 = vunpack.c.l.b16 %v1278
        %v1412 = vunpack.c.l.b16 %v1279
        %v1413 = vunpack.c.h.b16 %v1273
        %v1414 = vunpack.c.h.b16 %v1274
        %v1415 = vunpack.c.h.b16 %v1275
        %v1416 = vunpack.c.h.b16 %v1276
        %v1417 = vunpack.c.h.b16 %v1277
        %v1418 = vunpack.c.h.b16 %v1278
        %v1419 = vunpack.c.h.b16 %v1279
        %v1420 = vunpack.c.l.b16 %v1280
        %v1421 = vunpack.c.l.b16 %v1281
        %v1422 = vunpack.c.l.b16 %v1282
        %v1423 = vunpack.c.l.b16 %v1283
        %v1424 = vunpack.c.l.b16 %v1284
        %v1425 = vunpack.c.l.b16 %v1285
        %v1426 = vunpack.c.l.b16 %v1286
        %v1427 = vunpack.c.h.b16 %v1280
        %v1428 = vunpack.c.h.b16 %v1281
        %v1429 = vunpack.c.h.b16 %v1282
        %v1430 = vunpack.c.h.b16 %v1283
        %v1431 = vunpack.c.h.b16 %v1284
        %v1432 = vunpack.c.h.b16 %v1285
        %v1433 = vunpack.c.h.b16 %v1286
        %v1434 = vunpack.c.l.b16 %v1287
        %v1435 = vunpack.c.l.b16 %v1288
        %v1436 = vunpack.c.l.b16 %v1289
        %v1437 = vunpack.c.l.b16 %v1290
        %v1438 = vunpack.c.l.b16 %v1291
        %v1439 = vunpack.c.l.b16 %v1292
        %v1440 = vunpack.c.l.b16 %v1293
        %v1441 = vunpack.c.h.b16 %v1287
        %v1442 = vunpack.c.h.b16 %v1288
        %v1443 = vunpack.c.h.b16 %v1289
        %v1444 = vunpack.c.h.b16 %v1290
        %v1445 = vunpack.c.h.b16 %v1291
        %v1446 = vunpack.c.h.b16 %v1292
        %v1447 = vunpack.c.h.b16 %v1293
        %v1448 = vunpack.c.l.b16 %v1294
        %v1449 = vunpack.c.l.b16 %v1295
        %v1450 = vunpack.c.l.b16 %v1296
        %v1451 = vunpack.c.l.b16 %v1297
        %v1452 = vunpack.c.l.b16 %v1298
        %v1453 = vunpack.c.l.b16 %v1299
        %v1454 = vunpack.c.l.b16 %v1300
        %v1455 = vunpack.c.h.b16 %v1294
        %v1456 = vunpack.c.h.b16 %v1295
        %v1457 = vunpack.c.h.b16 %v1296
        %v1458 = vunpack.c.h.b16 %v1297
        %v1459 = vunpack.c.h.b16 %v1298
        %v1460 = vunpack.c.h.b16 %v1299
        %v1461 = vunpack.c.h.b16 %v1300
        %v1462 = vunpack.c.l.b16 %v1301
        %v1463 = vunpack.c.l.b16 %v1302
        %v1464 = vunpack.c.l.b16 %v1303
        %v1465 = vunpack.c.l.b16 %v1304
        %v1466 = vunpack.c.l.b16 %v1305
        %v1467 = vunpack.c.l.b16 %v1306
        %v1468 = vunpack.c.l.b16 %v1307
        %v1469 = vunpack.c.h.b16 %v1301
        %v1470 = vunpack.c.h.b16 %v1302
        %v1471 = vunpack.c.h.b16 %v1303
        %v1472 = vunpack.c.h.b16 %v1304
        %v1473 = vunpack.c.h.b16 %v1305
        %v1474 = vunpack.c.h.b16 %v1306
        %v1475 = vunpack.c.h.b16 %v1307
        %v1476 = vpack.c.b16 %v1365, %v1364
        %v1477 = vpack.c.b16 %v1367, %v1366
        %v1478 = vpack.c.b16 %v1369, %v1368
        %v1479 = vpack.c.b16 %v1370, %v1370
        %v1480 = vpack.c.b16 %v1372, %v1371
        %v1481 = vpack.c.b16 %v1374, %v1373
        %v1482 = vpack.c.b16 %v1376, %v1375
        %v1483 = vpack.c.b16 %v1377, %v1377
        %v1484 = vpack.c.b16 %v1379, %v1378
        %v1485 = vpack.c.b16 %v1381, %v1380
        %v1486 = vpack.c.b16 %v1383, %v1382
        %v1487 = vpack.c.b16 %v1384, %v1384
        %v1488 = vpack.c.b16 %v1386, %v1385
        %v1489 = vpack.c.b16 %v1388, %v1387
        %v1490 = vpack.c.b16 %v1390, %v1389
        %v1491 = vpack.c.b16 %v1391, %v1391
        %v1492 = vpack.c.b16 %v1393, %v1392
        %v1493 = vpack.c.b16 %v1395, %v1394
        %v1494 = vpack.c.b16 %v1397, %v1396
        %v1495 = vpack.c.b16 %v1398, %v1398
        %v1496 = vpack.c.b16 %v1400, %v1399
        %v1497 = vpack.c.b16 %v1402, %v1401
        %v1498 = vpack.c.b16 %v1404, %v1403
        %v1499 = vpack.c.b16 %v1405, %v1405
        %v1500 = vpack.c.b16 %v1407, %v1406
        %v1501 = vpack.c.b16 %v1409, %v1408
        %v1502 = vpack.c.b16 %v1411, %v1410
        %v1503 = vpack.c.b16 %v1412, %v1412
        %v1504 = vpack.c.b16 %v1414, %v1413
        %v1505 = vpack.c.b16 %v1416, %v1415
        %v1506 = vpack.c.b16 %v1418, %v1417
        %v1507 = vpack.c.b16 %v1419, %v1419
        %v1508 = vpack.c.b16 %v1421, %v1420
        %v1509 = vpack.c.b16 %v1423, %v1422
        %v1510 = vpack.c.b16 %v1425, %v1424
        %v1511 = vpack.c.b16 %v1426, %v1426
        %v1512 = vpack.c.b16 %v1428, %v1427
        %v1513 = vpack.c.b16 %v1430, %v1429
        %v1514 = vpack.c.b16 %v1432, %v1431
        %v1515 = vpack.c.b16 %v1433, %v1433
        %v1516 = vpack.c.b16 %v1435, %v1434
        %v1517 = vpack.c.b16 %v1437, %v1436
        %v1518 = vpack.c.b16 %v1439, %v1438
        %v1519 = vpack.c.b16 %v1440, %v1440
        %v1520 = vpack.c.b16 %v1442, %v1441
        %v1521 = vpack.c.b16 %v1444, %v1443
        %v1522 = vpack.c.b16 %v1446, %v1445
        %v1523 = vpack.c.b16 %v1447, %v1447
        %v1524 = vpack.c.b16 %v1449, %v1448
        %v1525 = vpack.c.b16 %v1451, %v1450
        %v1526 = vpack.c.b16 %v1453, %v1452
        %v1527 = vpack.c.b16 %v1454, %v1454
        %v1528 = vpack.c.b16 %v1456, %v1455
        %v1529 = vpack.c.b16 %v1458, %v1457
        %v1530 = vpack.c.b16 %v1460, %v1459
        %v1531 = vpack.c.b16 %v1461, %v1461
        %v1532 = vpack.c.b16 %v1463, %v1462
        %v1533 = vpack.c.b16 %v1465, %v1464
        %v1534 = vpack.c.b16 %v1467, %v1466
        %v1535 = vpack.c.b16 %v1468, %v1468
        %v1536 = vpack.c.b16 %v1470, %v1469
        %v1537 = vpack.c.b16 %v1472, %v1471
        %v1538 = vpack.c.b16 %v1474, %v1473
        %v1539 = vpack.c.b16 %v1475, %v1475
        %1604 = vst [vmem:[%s287] sm:$0xff] %v1476
        %1605 = vst [vmem:[%s287 + $0x8] sm:$0xff] %v1477
        %1606 = vst [vmem:[%s287 + $0x10] sm:$0xff] %v1478
        %1607 = vst [vmem:[%s287 + $0x18] sm:$0xf] %v1479
        %1608 = vst [vmem:[%s287 + $0x1c] sm:$0xff] %v1480
        %1609 = vst [vmem:[%s287 + $0x24] sm:$0xff] %v1481
        %1610 = vst [vmem:[%s287 + $0x2c] sm:$0xff] %v1482
        %1611 = vst [vmem:[%s287 + $0x34] sm:$0xf] %v1483
        %1612 = vst [vmem:[%s287 + $0x38] sm:$0xff] %v1484
        %1613 = vst [vmem:[%s287 + $0x40] sm:$0xff] %v1485
        %1614 = vst [vmem:[%s287 + $0x48] sm:$0xff] %v1486
        %1615 = vst [vmem:[%s287 + $0x50] sm:$0xf] %v1487
        %1616 = vst [vmem:[%s287 + $0x54] sm:$0xff] %v1488
        %1617 = vst [vmem:[%s287 + $0x5c] sm:$0xff] %v1489
        %1618 = vst [vmem:[%s287 + $0x64] sm:$0xff] %v1490
        %1619 = vst [vmem:[%s287 + $0x6c] sm:$0xf] %v1491
        %1620 = vst [vmem:[%s287 + $0x70] sm:$0xff] %v1492
        %1621 = vst [vmem:[%s287 + $0x78] sm:$0xff] %v1493
        %1622 = vst [vmem:[%s287 + $0x80] sm:$0xff] %v1494
        %1623 = vst [vmem:[%s287 + $0x88] sm:$0xf] %v1495
        %1624 = vst [vmem:[%s287 + $0x8c] sm:$0xff] %v1496
        %1625 = vst [vmem:[%s287 + $0x94] sm:$0xff] %v1497
        %1626 = vst [vmem:[%s287 + $0x9c] sm:$0xff] %v1498
        %1627 = vst [vmem:[%s287 + $0xa4] sm:$0xf] %v1499
        %1628 = vst [vmem:[%s287 + $0xa8] sm:$0xff] %v1500
        %1629 = vst [vmem:[%s287 + $0xb0] sm:$0xff] %v1501
        %1630 = vst [vmem:[%s287 + $0xb8] sm:$0xff] %v1502
        %1631 = vst [vmem:[%s287 + $0xc0] sm:$0xf] %v1503
        %1632 = vst [vmem:[%s287 + $0xc4] sm:$0xff] %v1504
        %1633 = vst [vmem:[%s287 + $0xcc] sm:$0xff] %v1505
        %1634 = vst [vmem:[%s287 + $0xd4] sm:$0xff] %v1506
        %1635 = vst [vmem:[%s287 + $0xdc] sm:$0xf] %v1507
        %1636 = vst [vmem:[%s287 + $0xe0] sm:$0xff] %v1508
        %1637 = vst [vmem:[%s287 + $0xe8] sm:$0xff] %v1509
        %1638 = vst [vmem:[%s287 + $0xf0] sm:$0xff] %v1510
        %1639 = vst [vmem:[%s287 + $0xf8] sm:$0xf] %v1511
        %1640 = vst [vmem:[%s287 + $0xfc] sm:$0xff] %v1512
        %1641 = vst [vmem:[%s287 + $0x104] sm:$0xff] %v1513
        %1642 = vst [vmem:[%s287 + $0x10c] sm:$0xff] %v1514
        %1643 = vst [vmem:[%s287 + $0x114] sm:$0xf] %v1515
        %1644 = vst [vmem:[%s287 + $0x118] sm:$0xff] %v1516
        %1645 = vst [vmem:[%s287 + $0x120] sm:$0xff] %v1517
        %1646 = vst [vmem:[%s287 + $0x128] sm:$0xff] %v1518
        %1647 = vst [vmem:[%s287 + $0x130] sm:$0xf] %v1519
        %1648 = vst [vmem:[%s287 + $0x134] sm:$0xff] %v1520
        %1649 = vst [vmem:[%s287 + $0x13c] sm:$0xff] %v1521
        %1650 = vst [vmem:[%s287 + $0x144] sm:$0xff] %v1522
        %1651 = vst [vmem:[%s287 + $0x14c] sm:$0xf] %v1523
        %1652 = vst [vmem:[%s287 + $0x150] sm:$0xff] %v1524
        %1653 = vst [vmem:[%s287 + $0x158] sm:$0xff] %v1525
        %1654 = vst [vmem:[%s287 + $0x160] sm:$0xff] %v1526
        %1655 = vst [vmem:[%s287 + $0x168] sm:$0xf] %v1527
        %1656 = vst [vmem:[%s287 + $0x16c] sm:$0xff] %v1528
        %1657 = vst [vmem:[%s287 + $0x174] sm:$0xff] %v1529
        %1658 = vst [vmem:[%s287 + $0x17c] sm:$0xff] %v1530
        %1659 = vst [vmem:[%s287 + $0x184] sm:$0xf] %v1531
        %1660 = vst [vmem:[%s287 + $0x188] sm:$0xff] %v1532
        %1661 = vst [vmem:[%s287 + $0x190] sm:$0xff] %v1533
        %1662 = vst [vmem:[%s287 + $0x198] sm:$0xff] %v1534
        %1663 = vst [vmem:[%s287 + $0x1a0] sm:$0xf] %v1535
        %1664 = vst [vmem:[%s287 + $0x1a4] sm:$0xff] %v1536
        %1665 = vst [vmem:[%s287 + $0x1ac] sm:$0xff] %v1537
        %1666 = vst [vmem:[%s287 + $0x1b4] sm:$0xff] %v1538
        %1667 = vst [vmem:[%s287 + $0x1bc] sm:$0xf] %v1539
        %s1668 = smul.u32 16, %s21
        %p1669 = scmp.lt.s32.totalorder %s1668, 47
        %s1670 = scalar_select %p1669, %s1668, 47
        %s1671 = smul.addr %s1670, 7
        %s1672 = smul.addr %s1671, 4
        %s1673 = scalar_lea.vmem %s5, %s1672
        // Predicated region
        $region57: #{compression_relation_predictor_forward.6} parent=39 // pred_check
          %p1674 = pneg %p149
        $region58: #{compression_relation_predictor_forward.6} parent=39 // pred_check_branch
          %1676 = sbr.rel (%p1674) target = $region60
        $region59: #{compression_relation_predictor_forward.6} parent=39 // pred_region
          %s1677 = smul.u32 16, %s21
        $region60: #{compression_relation_predictor_forward.6} parent=39 // pred_fallthru
          _
      $region40: #{compression_relation_predictor_forward.6} parent=5 // pred_fallthru
        _
      %p1678 = scmp.le.s32.totalorder 2, %s16
      // Predicated region
      $region61: #{compression_relation_predictor_forward.6} parent=5 // pred_check
        %p1679 = pneg %p1678
      $region62: #{compression_relation_predictor_forward.6} parent=5 // pred_check_branch
        %1681 = sbr.rel (%p1679) target = $region64
      $region63: #{compression_relation_predictor_forward.6} parent=5 // pred_region
        %s1682 = ssub.s32 %s16, 2
        // Predicated region
        $region65: #{compression_relation_predictor_forward.6} parent=63 // pred_check
          %p1683 = pneg %p155
        $region66: #{compression_relation_predictor_forward.6} parent=63 // pred_check_branch
          %1685 = sbr.rel (%p1683) target = $region68
        $region67: #{compression_relation_predictor_forward.6} parent=63 // pred_region
          %s1686 = smul.u32 16, %s22
          %p1687 = scmp.lt.s32.totalorder %s1686, 47
          %s1688 = scalar_select %p1687, %s1686, 47
          %s1689 = smul.addr %s1688, 7
          %s1690 = smul.addr %s1689, 4
          %s1691 = scalar_lea.vmem %s5, %s1690
        $region68: #{compression_relation_predictor_forward.6} parent=63 // pred_fallthru
          _
      $region64: #{compression_relation_predictor_forward.6} parent=5 // pred_fallthru
        _
    $region6: #{compression_relation_predictor_forward.6} parent=1 // loop_footer
      %s20 = sadd.s32 1, %s16
    $region7: #{compression_relation_predictor_forward.6} parent=1 // loop_footer_branch
      %15 = sbr.rel target = $region3
    $region8: #{compression_relation_predictor_forward.6} parent=1 // loop_exit
      _
    %1692 = vsyncpa [#allocation3], 1
    %s1693 = scalar_lea.sflag [#allocation3], 1
    %1694 = vsyncpa %s1693, 1
    %1695 = vsyncpa [#allocation5], 1
    %1696 = vsyncpa [#allocation8], 1

// kernel: compression_relation_predictor_forward.10
$region0: #{compression_relation_predictor_forward.10}
  #allocation0 [shape = 'u32[]', space=smem, size = 0x4, offset = 0x4, fixed_abs, tag = 'smem constant byte address 0x4 - core index']
  #allocation1 [shape = 'u32[144,128]{1,0:T(1,128)}', space=vmem, size = 0x12000, scoped, tag = 'internal scratch']
  %s0 = inlined_call_operand.vmem [shape: f32[384,128], index: 0, kind: input, shape index: {}]
  %s1 = inlined_call_operand.vmem [shape: f32[384,128], index: 1, kind: input, shape index: {}]
  %s2 = inlined_call_operand.vmem [shape: f32[128,128], index: 2, kind: input, shape index: {}]
  %s3 = inlined_call_operand.vmem [shape: f32[1,128], index: 3, kind: input, shape index: {}]
  %s4 = inlined_call_operand.vmem [shape: f32[384,128], index: 4, kind: output, shape index: {}]
  %s5 = sld [smem:[#allocation0]]
  $region49: #{compression_relation_predictor_forward.10} parent=0
    _
  %s7 = ssub.s32 1, %s5
  %s8 = scalar_select 0, %s7, %s5
  loop: start=0, step=1, limit=5
  $region2: #{compression_relation_predictor_forward.10} parent=0 // loop_pre_header
    _
  $region3: #{compression_relation_predictor_forward.10} parent=0 // loop_header
    %s10 = sphi 0, %s14
    %p11 = scmp.ge.s32.totalorder %s10, 5
    %s20 = sphi 0, %s22
    %s23 = sphi 0, %s20
    %s24 = sphi 0, %s23
    %s40 = sphi 0, %s24
    %s46 = sphi 0, %s48
    %s49 = sphi 0, %s46
    %s50 = sphi 0, %s49
    %s66 = sphi 0, %s50
    %s70 = sphi 0, %s70
    %s72 = sphi 0, %s70
    %s73 = sphi 0, %s72
    %s87 = sphi 0, %s73
    %s91 = sphi 0, %s91
    %s93 = sphi 0, %s91
    %s94 = sphi 0, %s93
    %s108 = sphi 0, %s94
    %s114 = sphi 0, %s116
    %s117 = sphi 0, %s114
    %s118 = sphi 0, %s117
    %s134 = sphi 0, %s118
  $region4: #{compression_relation_predictor_forward.10} parent=0 // loop_header_branch
    %13 = sbr.rel (%p11) target = $region8
  $region5: #{compression_relation_predictor_forward.10} parent=0 // loop_body
    %s15 = ssub.s32 %s10, 1
    %s16 = ssub.s32 %s10, 2
    %s17 = sadd.s32 %s10, 1
    %s18 = ssub.s32 %s10, %s17
    %p19 = scmp.eq.s32.totalorder %s18, 0
    %s21 = sadd.s32 %s20, 1
    %s22 = scalar_select %p19, %s20, %s21
    %p25 = pneg %p19
    %p26 = scmp.eq.s32.totalorder %s10, 2
    %p27 = por %p25, %p26
    %p28 = scmp.ne.s32.totalorder %s20, %s23
    %p29 = scmp.eq.s32.totalorder %s10, 0
    %p30 = por %p28, %p29
    %p31 = scmp.ne.s32.totalorder %s20, %s23
    %p32 = scmp.eq.s32.totalorder %s15, 2
    %p33 = por %p31, %p32
    %p34 = scmp.ne.s32.totalorder %s23, %s24
    %p35 = scmp.eq.s32.totalorder %s15, 0
    %p36 = por %p34, %p35
    %p37 = scmp.ne.s32.totalorder %s23, %s24
    %p38 = scmp.eq.s32.totalorder %s16, 2
    %p39 = por %p37, %p38
    %p41 = scmp.ne.s32.totalorder %s24, %s40
    %p42 = scmp.eq.s32.totalorder %s16, 0
    %p43 = por %p41, %p42
    %s44 = ssub.s32 %s10, %s17
    %p45 = scmp.eq.s32.totalorder %s44, 0
    %s47 = sadd.s32 %s46, 1
    %s48 = scalar_select %p45, %s46, %s47
    %p51 = pneg %p45
    %p52 = scmp.eq.s32.totalorder %s10, 2
    %p53 = por %p51, %p52
    %p54 = scmp.ne.s32.totalorder %s46, %s49
    %p55 = scmp.eq.s32.totalorder %s10, 0
    %p56 = por %p54, %p55
    %p57 = scmp.ne.s32.totalorder %s46, %s49
    %p58 = scmp.eq.s32.totalorder %s15, 2
    %p59 = por %p57, %p58
    %p60 = scmp.ne.s32.totalorder %s49, %s50
    %p61 = scmp.eq.s32.totalorder %s15, 0
    %p62 = por %p60, %p61
    %p63 = scmp.ne.s32.totalorder %s49, %s50
    %p64 = scmp.eq.s32.totalorder %s16, 2
    %p65 = por %p63, %p64
    %p67 = scmp.ne.s32.totalorder %s50, %s66
    %p68 = scmp.eq.s32.totalorder %s16, 0
    %p69 = por %p67, %p68
    %s71 = sadd.s32 %s70, 1
    %p74 = scmp.eq.s32.totalorder %s10, 2
    %p75 = scmp.ne.s32.totalorder %s70, %s72
    %p76 = scmp.eq.s32.totalorder %s10, 0
    %p77 = por %p75, %p76
    %p78 = scmp.ne.s32.totalorder %s70, %s72
    %p79 = scmp.eq.s32.totalorder %s15, 2
    %p80 = por %p78, %p79
    %p81 = scmp.ne.s32.totalorder %s72, %s73
    %p82 = scmp.eq.s32.totalorder %s15, 0
    %p83 = por %p81, %p82
    %p84 = scmp.ne.s32.totalorder %s72, %s73
    %p85 = scmp.eq.s32.totalorder %s16, 2
    %p86 = por %p84, %p85
    %p88 = scmp.ne.s32.totalorder %s73, %s87
    %p89 = scmp.eq.s32.totalorder %s16, 0
    %p90 = por %p88, %p89
    %s92 = sadd.s32 %s91, 1
    %p95 = scmp.eq.s32.totalorder %s10, 2
    %p96 = scmp.ne.s32.totalorder %s91, %s93
    %p97 = scmp.eq.s32.totalorder %s10, 0
    %p98 = por %p96, %p97
    %p99 = scmp.ne.s32.totalorder %s91, %s93
    %p100 = scmp.eq.s32.totalorder %s15, 2
    %p101 = por %p99, %p100
    %p102 = scmp.ne.s32.totalorder %s93, %s94
    %p103 = scmp.eq.s32.totalorder %s15, 0
    %p104 = por %p102, %p103
    %p105 = scmp.ne.s32.totalorder %s93, %s94
    %p106 = scmp.eq.s32.totalorder %s16, 2
    %p107 = por %p105, %p106
    %p109 = scmp.ne.s32.totalorder %s94, %s108
    %p110 = scmp.eq.s32.totalorder %s16, 0
    %p111 = por %p109, %p110
    %s112 = ssub.s32 %s10, %s17
    %p113 = scmp.eq.s32.totalorder %s112, 0
    %s115 = sadd.s32 %s114, 1
    %s116 = scalar_select %p113, %s114, %s115
    %p119 = pneg %p113
    %p120 = scmp.eq.s32.totalorder %s10, 2
    %p121 = por %p119, %p120
    %p122 = scmp.ne.s32.totalorder %s114, %s117
    %p123 = scmp.eq.s32.totalorder %s10, 0
    %p124 = por %p122, %p123
    %p125 = scmp.ne.s32.totalorder %s114, %s117
    %p126 = scmp.eq.s32.totalorder %s15, 2
    %p127 = por %p125, %p126
    %p128 = scmp.ne.s32.totalorder %s117, %s118
    %p129 = scmp.eq.s32.totalorder %s15, 0
    %p130 = por %p128, %p129
    %p131 = scmp.ne.s32.totalorder %s117, %s118
    %p132 = scmp.eq.s32.totalorder %s16, 2
    %p133 = por %p131, %p132
    %p135 = scmp.ne.s32.totalorder %s118, %s134
    %p136 = scmp.eq.s32.totalorder %s16, 0
    %p137 = por %p135, %p136
    %p138 = scmp.le.s32.totalorder 1, %s10
    %p139 = scmp.lt.s32.totalorder %s10, 4
    %p140 = pnand %p138, %p139
    %p141 = pneg %p140
    // Predicated region
    $region9: #{compression_relation_predictor_forward.10} parent=5 // pred_check
      _
    $region10: #{compression_relation_predictor_forward.10} parent=5 // pred_check_branch
      %143 = sbr.rel (%p140) target = $region12
    $region11: #{compression_relation_predictor_forward.10} parent=5 // pred_region
      %s144 = ssub.s32 %s10, 1
      // Predicated region
      $region13: #{compression_relation_predictor_forward.10} parent=11 // pred_check
        %p145 = pneg %p83
      $region14: #{compression_relation_predictor_forward.10} parent=11 // pred_check_branch
        %147 = sbr.rel (%p145) target = $region16
      $region15: #{compression_relation_predictor_forward.10} parent=11 // pred_region
        _
      $region16: #{compression_relation_predictor_forward.10} parent=11 // pred_fallthru
        _
      // Predicated region
      $region17: #{compression_relation_predictor_forward.10} parent=11 // pred_check
        %p148 = pneg %p104
      $region18: #{compression_relation_predictor_forward.10} parent=11 // pred_check_branch
        %150 = sbr.rel (%p148) target = $region20
      $region19: #{compression_relation_predictor_forward.10} parent=11 // pred_region
        _
      $region20: #{compression_relation_predictor_forward.10} parent=11 // pred_fallthru
        _
    $region12: #{compression_relation_predictor_forward.10} parent=5 // pred_fallthru
      _
    %p151 = scmp.lt.s32.totalorder %s10, 3
    // Predicated region
    $region21: #{compression_relation_predictor_forward.10} parent=5 // pred_check
      %p152 = pneg %p151
    $region22: #{compression_relation_predictor_forward.10} parent=5 // pred_check_branch
      %154 = sbr.rel (%p152) target = $region24
    $region23: #{compression_relation_predictor_forward.10} parent=5 // pred_region
      // Predicated region
      $region25: #{compression_relation_predictor_forward.10} parent=23 // pred_check
        %p155 = pneg %p30
      $region26: #{compression_relation_predictor_forward.10} parent=23 // pred_check_branch
        %157 = sbr.rel (%p155) target = $region28
      $region27: #{compression_relation_predictor_forward.10} parent=23 // pred_region
        %s158 = smul.u32 16, %s10
        %p159 = scmp.lt.s32.totalorder %s158, 47
        %s160 = scalar_select %p159, %s158, 47
        %s161 = smul.addr %s160, 8
        %s162 = scalar_lea.vmem %s0, %s161
        %s163 = smul.u32 16, %s10
      $region28: #{compression_relation_predictor_forward.10} parent=23 // pred_fallthru
        _
      // Predicated region
      $region29: #{compression_relation_predictor_forward.10} parent=23 // pred_check
        %p164 = pneg %p56
      $region30: #{compression_relation_predictor_forward.10} parent=23 // pred_check_branch
        %166 = sbr.rel (%p164) target = $region32
      $region31: #{compression_relation_predictor_forward.10} parent=23 // pred_region
        %s167 = smul.u32 16, %s10
        %p168 = scmp.lt.s32.totalorder %s167, 47
        %s169 = scalar_select %p168, %s167, 47
        %s170 = smul.addr %s169, 8
        %s171 = scalar_lea.vmem %s1, %s170
        %s172 = smul.u32 16, %s10
      $region32: #{compression_relation_predictor_forward.10} parent=23 // pred_fallthru
        _
    $region24: #{compression_relation_predictor_forward.10} parent=5 // pred_fallthru
      _
    %p173 = scmp.le.s32.totalorder 1, %s10
    %p174 = scmp.lt.s32.totalorder %s10, 4
    %p175 = pnand %p173, %p174
    %p176 = pneg %p175
    // Predicated region
    $region33: #{compression_relation_predictor_forward.10} parent=5 // pred_check
      _
    $region34: #{compression_relation_predictor_forward.10} parent=5 // pred_check_branch
      %178 = sbr.rel (%p175) target = $region36
    $region35: #{compression_relation_predictor_forward.10} parent=5 // pred_region
      %s179 = ssub.s32 %s10, 1
      %s180 = smul.u32 16, %s15
      %p181 = scmp.lt.s32.totalorder %s180, 47
      %s182 = scalar_select %p181, %s180, 47
      %s183 = smul.addr %s182, 8
      %s184 = scalar_lea.vmem %s0, %s183
      %p185 = pneg %p36
      %p186 = pneg %p33
      %s187 = smul.u32 16, %s15
      %p188 = scmp.lt.s32.totalorder %s187, 47
      %s189 = scalar_select %p188, %s187, 47
      %s190 = smul.addr %s189, 8
      %s191 = scalar_lea.vmem %s1, %s190
      %p192 = pneg %p62
      %p193 = pneg %p59
      %p194 = pneg %p83
      %p195 = pneg %p80
      %p196 = pneg %p104
      %p197 = pneg %p101
      %p198 = pneg %p130
      %p199 = pneg %p127
      %s200 = smul.u32 16, %s15
      %p201 = scmp.lt.s32.totalorder %s200, 47
      %s202 = scalar_select %p201, %s200, 47
      %s203 = smul.addr %s202, 8
      %s204 = scalar_lea.vmem %s4, %s203
      %s205 = smul.u32 16, %s15
      %p206 = scmp.lt.s32.totalorder %s205, 47
      %s207 = scalar_select %p206, %s205, 47
      %s208 = smul.addr %s207, 8
      %s209 = scalar_lea.vmem %s0, %s208
      %s210 = smul.u32 16, %s15
      %s211 = smul.u32 16, %s15
      %p212 = scmp.lt.s32.totalorder %s211, 47
      %s213 = scalar_select %p212, %s211, 47
      %s214 = smul.addr %s213, 8
      %s215 = scalar_lea.vmem %s1, %s214
      %s216 = smul.u32 16, %s15
      %s217 = smul.u32 16, %s15
      %p218 = scmp.lt.s32.totalorder %s217, 47
      %s219 = scalar_select %p218, %s217, 47
      %s220 = smul.addr %s219, 8
      %s221 = scalar_lea.vmem %s4, %s220
      %s222 = smul.u32 16, %s15
      %v223 = vld [vmem:[%s209] sm:$0xff]
      %v224 = vld [vmem:[%s209 + $0x8] sm:$0xff]
      %v225 = vld [vmem:[%s209 + $0x10] sm:$0xff]
      %v226 = vld [vmem:[%s209 + $0x18] sm:$0xff]
      %v227 = vld [vmem:[%s209 + $0x20] sm:$0xff]
      %v228 = vld [vmem:[%s209 + $0x28] sm:$0xff]
      %v229 = vld [vmem:[%s209 + $0x30] sm:$0xff]
      %v230 = vld [vmem:[%s209 + $0x38] sm:$0xff]
      %v231 = vld [vmem:[%s209 + $0x40] sm:$0xff]
      %v232 = vld [vmem:[%s209 + $0x48] sm:$0xff]
      %v233 = vld [vmem:[%s209 + $0x50] sm:$0xff]
      %v234 = vld [vmem:[%s209 + $0x58] sm:$0xff]
      %v235 = vld [vmem:[%s209 + $0x60] sm:$0xff]
      %v236 = vld [vmem:[%s209 + $0x68] sm:$0xff]
      %v237 = vld [vmem:[%s209 + $0x70] sm:$0xff]
      %v238 = vld [vmem:[%s209 + $0x78] sm:$0xff]
      %v239 = vld [vmem:[%s215] sm:$0xff]
      %v240 = vld [vmem:[%s215 + $0x8] sm:$0xff]
      %v241 = vld [vmem:[%s215 + $0x10] sm:$0xff]
      %v242 = vld [vmem:[%s215 + $0x18] sm:$0xff]
      %v243 = vld [vmem:[%s215 + $0x20] sm:$0xff]
      %v244 = vld [vmem:[%s215 + $0x28] sm:$0xff]
      %v245 = vld [vmem:[%s215 + $0x30] sm:$0xff]
      %v246 = vld [vmem:[%s215 + $0x38] sm:$0xff]
      %v247 = vld [vmem:[%s215 + $0x40] sm:$0xff]
      %v248 = vld [vmem:[%s215 + $0x48] sm:$0xff]
      %v249 = vld [vmem:[%s215 + $0x50] sm:$0xff]
      %v250 = vld [vmem:[%s215 + $0x58] sm:$0xff]
      %v251 = vld [vmem:[%s215 + $0x60] sm:$0xff]
      %v252 = vld [vmem:[%s215 + $0x68] sm:$0xff]
      %v253 = vld [vmem:[%s215 + $0x70] sm:$0xff]
      %v254 = vld [vmem:[%s215 + $0x78] sm:$0xff]
      %v255 = vld [vmem:[%s2] sm:$0xff]
      %v256 = vld [vmem:[%s2 + $0x8] sm:$0xff]
      %v257 = vld [vmem:[%s2 + $0x10] sm:$0xff]
      %v258 = vld [vmem:[%s2 + $0x18] sm:$0xff]
      %v259 = vld [vmem:[%s2 + $0x20] sm:$0xff]
      %v260 = vld [vmem:[%s2 + $0x28] sm:$0xff]
      %v261 = vld [vmem:[%s2 + $0x30] sm:$0xff]
      %v262 = vld [vmem:[%s2 + $0x38] sm:$0xff]
      %v263 = vld [vmem:[%s2 + $0x40] sm:$0xff]
      %v264 = vld [vmem:[%s2 + $0x48] sm:$0xff]
      %v265 = vld [vmem:[%s2 + $0x50] sm:$0xff]
      %v266 = vld [vmem:[%s2 + $0x58] sm:$0xff]
      %v267 = vld [vmem:[%s2 + $0x60] sm:$0xff]
      %v268 = vld [vmem:[%s2 + $0x68] sm:$0xff]
      %v269 = vld [vmem:[%s2 + $0x70] sm:$0xff]
      %v270 = vld [vmem:[%s2 + $0x78] sm:$0xff]
      %v271 = vld [vmem:[%s3] sm:$0x1]
      %v273 = vlaneseq
      %v274 = vshrl.u32 %v273, 7
      %v275 = vsub.s32 0, %v274
      %v276 = vrot.slane %v271, %v275
      %278 = vmatprep.subr.mxu0 0.0
      %279 = vmatpush1.msra.mxu0 %v255
      %280 = vmatprep.subr.mxu0 0.0
      %281 = vmatpush1.msra.mxu0 %v256
      %282 = vmatprep.subr.mxu0 0.0
      %283 = vmatpush1.msra.mxu0 %v257
      %284 = vmatprep.subr.mxu0 0.0
      %285 = vmatpush1.msra.mxu0 %v258
      %286 = vmatprep.subr.mxu0 0.0
      %287 = vmatpush1.msra.mxu0 %v259
      %288 = vmatprep.subr.mxu0 0.0
      %289 = vmatpush1.msra.mxu0 %v260
      %290 = vmatprep.subr.mxu0 0.0
      %291 = vmatpush1.msra.mxu0 %v261
      %292 = vmatprep.subr.mxu0 0.0
      %293 = vmatpush1.msra.mxu0 %v262
      %294 = vmatprep.subr.mxu0 0.0
      %295 = vmatpush1.msra.mxu0 %v263
      %296 = vmatprep.subr.mxu0 0.0
      %297 = vmatpush1.msra.mxu0 %v264
      %298 = vmatprep.subr.mxu0 0.0
      %299 = vmatpush1.msra.mxu0 %v265
      %300 = vmatprep.subr.mxu0 0.0
      %301 = vmatpush1.msra.mxu0 %v266
      %302 = vmatprep.subr.mxu0 0.0
      %303 = vmatpush1.msra.mxu0 %v267
      %304 = vmatprep.subr.mxu0 0.0
      %305 = vmatpush1.msra.mxu0 %v268
      %306 = vmatprep.subr.mxu0 0.0
      %307 = vmatpush1.msra.mxu0 %v269
      %308 = vmatprep.subr.mxu0 0.0
      %309 = vmatpush1.msra.mxu0 %v270
      %310 = vmatprep.subr.mxu0 0.0
      %311 = vmatpush1.msra.mxu0 0.0
      %312 = vmatprep.subr.mxu0 0.0
      %313 = vmatpush1.msra.mxu0 0.0
      %314 = vmatprep.subr.mxu0 0.0
      %315 = vmatpush1.msra.mxu0 0.0
      %316 = vmatprep.subr.mxu0 0.0
      %317 = vmatpush1.msra.mxu0 0.0
      %318 = vmatprep.subr.mxu0 0.0
      %319 = vmatpush1.msra.mxu0 0.0
      %320 = vmatprep.subr.mxu0 0.0
      %321 = vmatpush1.msra.mxu0 0.0
      %322 = vmatprep.subr.mxu0 0.0
      %323 = vmatpush1.msra.mxu0 0.0
      %324 = vmatprep.subr.mxu0 0.0
      %325 = vmatpush1.msra.mxu0 0.0
      %326 = vmatprep.subr.mxu0 0.0
      %327 = vmatpush1.msra.mxu0 0.0
      %328 = vmatprep.subr.mxu0 0.0
      %329 = vmatpush1.msra.mxu0 0.0
      %330 = vmatprep.subr.mxu0 0.0
      %331 = vmatpush1.msra.mxu0 0.0
      %332 = vmatprep.subr.mxu0 0.0
      %333 = vmatpush1.msra.mxu0 0.0
      %334 = vmatprep.subr.mxu0 0.0
      %335 = vmatpush1.msra.mxu0 0.0
      %336 = vmatprep.subr.mxu0 0.0
      %337 = vmatpush1.msra.mxu0 0.0
      %338 = vmatprep.subr.mxu0 0.0
      %339 = vmatpush1.msra.mxu0 0.0
      %340 = vmatprep.subr.mxu0 0.0
      %341 = vmatpush1.msra.mxu0 0.0
      %342 = vmatprep.mubr.f32.mxu0 0.0
      %343 = vmatmul.mubr.f32.gmra.mrb[0].mxu0 %v239
      %v344 = vpop.f32.mrb[0].mxu0
      %v345 = vadd.f32 %v276, %v344
      %v346 = vpop.f32.mrb[0].mxu0
      %347 = vmatprep.mubr.f32.mxu0 0.0
      %348 = vmatmul.mubr.f32.gmra.mrb[0].mxu0 %v240
      %v349 = vpop.f32.mrb[0].mxu0
      %v350 = vadd.f32 %v276, %v349
      %v351 = vpop.f32.mrb[0].mxu0
      %352 = vmatprep.mubr.f32.mxu0 0.0
      %353 = vmatmul.mubr.f32.gmra.mrb[0].mxu0 %v241
      %v354 = vpop.f32.mrb[0].mxu0
      %v355 = vadd.f32 %v276, %v354
      %v356 = vpop.f32.mrb[0].mxu0
      %357 = vmatprep.mubr.f32.mxu0 0.0
      %358 = vmatmul.mubr.f32.gmra.mrb[0].mxu0 %v242
      %v359 = vpop.f32.mrb[0].mxu0
      %v360 = vadd.f32 %v276, %v359
      %v361 = vpop.f32.mrb[0].mxu0
      %362 = vmatprep.mubr.f32.mxu0 0.0
      %363 = vmatmul.mubr.f32.gmra.mrb[0].mxu0 %v243
      %v364 = vpop.f32.mrb[0].mxu0
      %v365 = vadd.f32 %v276, %v364
      %v366 = vpop.f32.mrb[0].mxu0
      %367 = vmatprep.mubr.f32.mxu0 0.0
      %368 = vmatmul.mubr.f32.gmra.mrb[0].mxu0 %v244
      %v369 = vpop.f32.mrb[0].mxu0
      %v370 = vadd.f32 %v276, %v369
      %v371 = vpop.f32.mrb[0].mxu0
      %372 = vmatprep.mubr.f32.mxu0 0.0
      %373 = vmatmul.mubr.f32.gmra.mrb[0].mxu0 %v245
      %v374 = vpop.f32.mrb[0].mxu0
      %v375 = vadd.f32 %v276, %v374
      %v376 = vpop.f32.mrb[0].mxu0
      %377 = vmatprep.mubr.f32.mxu0 0.0
      %378 = vmatmul.mubr.f32.gmra.mrb[0].mxu0 %v246
      %v379 = vpop.f32.mrb[0].mxu0
      %v380 = vadd.f32 %v276, %v379
      %v381 = vpop.f32.mrb[0].mxu0
      %382 = vmatprep.mubr.f32.mxu0 0.0
      %383 = vmatmul.mubr.f32.gmra.mrb[0].mxu0 %v247
      %v384 = vpop.f32.mrb[0].mxu0
      %v385 = vadd.f32 %v276, %v384
      %v386 = vpop.f32.mrb[0].mxu0
      %387 = vmatprep.mubr.f32.mxu0 0.0
      %388 = vmatmul.mubr.f32.gmra.mrb[0].mxu0 %v248
      %v389 = vpop.f32.mrb[0].mxu0
      %v390 = vadd.f32 %v276, %v389
      %v391 = vpop.f32.mrb[0].mxu0
      %392 = vmatprep.mubr.f32.mxu0 0.0
      %393 = vmatmul.mubr.f32.gmra.mrb[0].mxu0 %v249
      %v394 = vpop.f32.mrb[0].mxu0
      %v395 = vadd.f32 %v276, %v394
      %v396 = vpop.f32.mrb[0].mxu0
      %397 = vmatprep.mubr.f32.mxu0 0.0
      %398 = vmatmul.mubr.f32.gmra.mrb[0].mxu0 %v250
      %v399 = vpop.f32.mrb[0].mxu0
      %v400 = vadd.f32 %v276, %v399
      %v401 = vpop.f32.mrb[0].mxu0
      %402 = vmatprep.mubr.f32.mxu0 0.0
      %403 = vmatmul.mubr.f32.gmra.mrb[0].mxu0 %v251
      %v404 = vpop.f32.mrb[0].mxu0
      %v405 = vadd.f32 %v276, %v404
      %v406 = vpop.f32.mrb[0].mxu0
      %407 = vmatprep.mubr.f32.mxu0 0.0
      %408 = vmatmul.mubr.f32.gmra.mrb[0].mxu0 %v252
      %v409 = vpop.f32.mrb[0].mxu0
      %v410 = vadd.f32 %v276, %v409
      %v411 = vpop.f32.mrb[0].mxu0
      %412 = vmatprep.mubr.f32.mxu0 0.0
      %413 = vmatmul.mubr.f32.gmra.mrb[0].mxu0 %v253
      %v414 = vpop.f32.mrb[0].mxu0
      %v415 = vadd.f32 %v276, %v414
      %v416 = vpop.f32.mrb[0].mxu0
      %417 = vmatprep.mubr.f32.mxu0 0.0
      %418 = vmatmul.mubr.f32.gmra.mrb[0].mxu0 %v254
      %v419 = vpop.f32.mrb[0].mxu0
      %v420 = vadd.f32 %v276, %v419
      %v421 = vpop.f32.mrb[0].mxu0
      %422 = vdwg.mxu0
      %v423 = vadd.f32 %v223, %v345
      %v424 = vadd.f32 %v224, %v350
      %v425 = vadd.f32 %v225, %v355
      %v426 = vadd.f32 %v226, %v360
      %v427 = vadd.f32 %v227, %v365
      %v428 = vadd.f32 %v228, %v370
      %v429 = vadd.f32 %v229, %v375
      %v430 = vadd.f32 %v230, %v380
      %v431 = vadd.f32 %v231, %v385
      %v432 = vadd.f32 %v232, %v390
      %v433 = vadd.f32 %v233, %v395
      %v434 = vadd.f32 %v234, %v400
      %v435 = vadd.f32 %v235, %v405
      %v436 = vadd.f32 %v236, %v410
      %v437 = vadd.f32 %v237, %v415
      %v438 = vadd.f32 %v238, %v420
      %439 = vst [vmem:[%s221] sm:$0xff] %v423
      %440 = vst [vmem:[%s221 + $0x8] sm:$0xff] %v424
      %441 = vst [vmem:[%s221 + $0x10] sm:$0xff] %v425
      %442 = vst [vmem:[%s221 + $0x18] sm:$0xff] %v426
      %443 = vst [vmem:[%s221 + $0x20] sm:$0xff] %v427
      %444 = vst [vmem:[%s221 + $0x28] sm:$0xff] %v428
      %445 = vst [vmem:[%s221 + $0x30] sm:$0xff] %v429
      %446 = vst [vmem:[%s221 + $0x38] sm:$0xff] %v430
      %447 = vst [vmem:[%s221 + $0x40] sm:$0xff] %v431
      %448 = vst [vmem:[%s221 + $0x48] sm:$0xff] %v432
      %449 = vst [vmem:[%s221 + $0x50] sm:$0xff] %v433
      %450 = vst [vmem:[%s221 + $0x58] sm:$0xff] %v434
      %451 = vst [vmem:[%s221 + $0x60] sm:$0xff] %v435
      %452 = vst [vmem:[%s221 + $0x68] sm:$0xff] %v436
      %453 = vst [vmem:[%s221 + $0x70] sm:$0xff] %v437
      %454 = vst [vmem:[%s221 + $0x78] sm:$0xff] %v438
      %s455 = smul.u32 16, %s15
      %p456 = scmp.lt.s32.totalorder %s455, 47
      %s457 = scalar_select %p456, %s455, 47
      %s458 = smul.addr %s457, 8
      %s459 = scalar_lea.vmem %s4, %s458
      // Predicated region
      $region37: #{compression_relation_predictor_forward.10} parent=35 // pred_check
        %p460 = pneg %p127
      $region38: #{compression_relation_predictor_forward.10} parent=35 // pred_check_branch
        %462 = sbr.rel (%p460) target = $region40
      $region39: #{compression_relation_predictor_forward.10} parent=35 // pred_region
        %s463 = smul.u32 16, %s15
      $region40: #{compression_relation_predictor_forward.10} parent=35 // pred_fallthru
        _
    $region36: #{compression_relation_predictor_forward.10} parent=5 // pred_fallthru
      _
    %p464 = scmp.le.s32.totalorder 2, %s10
    // Predicated region
    $region41: #{compression_relation_predictor_forward.10} parent=5 // pred_check
      %p465 = pneg %p464
    $region42: #{compression_relation_predictor_forward.10} parent=5 // pred_check_branch
      %467 = sbr.rel (%p465) target = $region44
    $region43: #{compression_relation_predictor_forward.10} parent=5 // pred_region
      %s468 = ssub.s32 %s10, 2
      // Predicated region
      $region45: #{compression_relation_predictor_forward.10} parent=43 // pred_check
        %p469 = pneg %p133
      $region46: #{compression_relation_predictor_forward.10} parent=43 // pred_check_branch
        %471 = sbr.rel (%p469) target = $region48
      $region47: #{compression_relation_predictor_forward.10} parent=43 // pred_region
        %s472 = smul.u32 16, %s16
        %p473 = scmp.lt.s32.totalorder %s472, 47
        %s474 = scalar_select %p473, %s472, 47
        %s475 = smul.addr %s474, 8
        %s476 = scalar_lea.vmem %s4, %s475
      $region48: #{compression_relation_predictor_forward.10} parent=43 // pred_fallthru
        _
    $region44: #{compression_relation_predictor_forward.10} parent=5 // pred_fallthru
      _
  $region6: #{compression_relation_predictor_forward.10} parent=0 // loop_footer
    %s14 = sadd.s32 1, %s10
  $region7: #{compression_relation_predictor_forward.10} parent=0 // loop_footer_branch
    %9 = sbr.rel target = $region3
  $region8: #{compression_relation_predictor_forward.10} parent=0 // loop_exit
    _

// kernel: compression_relation_predictor_forward.8
$region0: #{compression_relation_predictor_forward.8}
  #allocation0 [shape = 'u32[]', space=smem, size = 0x4, offset = 0x4, fixed_abs, tag = 'smem constant byte address 0x4 - core index']
  #allocation1 [shape = 'u32[144,128]{1,0:T(1,128)}', space=vmem, size = 0x12000, scoped, tag = 'internal scratch']
  %s0 = inlined_call_operand.vmem [shape: f32[384,128], index: 0, kind: input, shape index: {}]
  %s1 = inlined_call_operand.vmem [shape: f32[128,896], index: 1, kind: input, shape index: {}]
  %s2 = inlined_call_operand.vmem [shape: bf16[384,896], index: 2, kind: output, shape index: {}]
  %s3 = sld [smem:[#allocation0]]
  $region41: #{compression_relation_predictor_forward.8} parent=0
    _
  %s5 = ssub.s32 1, %s3
  %s6 = scalar_select 0, %s5, %s3
  loop: start=0, step=1, limit=5
  $region2: #{compression_relation_predictor_forward.8} parent=0 // loop_pre_header
    _
  $region3: #{compression_relation_predictor_forward.8} parent=0 // loop_header
    %s8 = sphi 0, %s12
    %p9 = scmp.ge.s32.totalorder %s8, 5
    %s18 = sphi 0, %s20
    %s21 = sphi 0, %s18
    %s22 = sphi 0, %s21
    %s38 = sphi 0, %s22
    %s42 = sphi 0, %s42
    %s44 = sphi 0, %s42
    %s45 = sphi 0, %s44
    %s59 = sphi 0, %s45
    %s65 = sphi 0, %s67
    %s68 = sphi 0, %s65
    %s69 = sphi 0, %s68
    %s85 = sphi 0, %s69
  $region4: #{compression_relation_predictor_forward.8} parent=0 // loop_header_branch
    %11 = sbr.rel (%p9) target = $region8
  $region5: #{compression_relation_predictor_forward.8} parent=0 // loop_body
    %s13 = ssub.s32 %s8, 1
    %s14 = ssub.s32 %s8, 2
    %s15 = sadd.s32 %s8, 1
    %s16 = ssub.s32 %s8, %s15
    %p17 = scmp.eq.s32.totalorder %s16, 0
    %s19 = sadd.s32 %s18, 1
    %s20 = scalar_select %p17, %s18, %s19
    %p23 = pneg %p17
    %p24 = scmp.eq.s32.totalorder %s8, 2
    %p25 = por %p23, %p24
    %p26 = scmp.ne.s32.totalorder %s18, %s21
    %p27 = scmp.eq.s32.totalorder %s8, 0
    %p28 = por %p26, %p27
    %p29 = scmp.ne.s32.totalorder %s18, %s21
    %p30 = scmp.eq.s32.totalorder %s13, 2
    %p31 = por %p29, %p30
    %p32 = scmp.ne.s32.totalorder %s21, %s22
    %p33 = scmp.eq.s32.totalorder %s13, 0
    %p34 = por %p32, %p33
    %p35 = scmp.ne.s32.totalorder %s21, %s22
    %p36 = scmp.eq.s32.totalorder %s14, 2
    %p37 = por %p35, %p36
    %p39 = scmp.ne.s32.totalorder %s22, %s38
    %p40 = scmp.eq.s32.totalorder %s14, 0
    %p41 = por %p39, %p40
    %s43 = sadd.s32 %s42, 1
    %p46 = scmp.eq.s32.totalorder %s8, 2
    %p47 = scmp.ne.s32.totalorder %s42, %s44
    %p48 = scmp.eq.s32.totalorder %s8, 0
    %p49 = por %p47, %p48
    %p50 = scmp.ne.s32.totalorder %s42, %s44
    %p51 = scmp.eq.s32.totalorder %s13, 2
    %p52 = por %p50, %p51
    %p53 = scmp.ne.s32.totalorder %s44, %s45
    %p54 = scmp.eq.s32.totalorder %s13, 0
    %p55 = por %p53, %p54
    %p56 = scmp.ne.s32.totalorder %s44, %s45
    %p57 = scmp.eq.s32.totalorder %s14, 2
    %p58 = por %p56, %p57
    %p60 = scmp.ne.s32.totalorder %s45, %s59
    %p61 = scmp.eq.s32.totalorder %s14, 0
    %p62 = por %p60, %p61
    %s63 = ssub.s32 %s8, %s15
    %p64 = scmp.eq.s32.totalorder %s63, 0
    %s66 = sadd.s32 %s65, 1
    %s67 = scalar_select %p64, %s65, %s66
    %p70 = pneg %p64
    %p71 = scmp.eq.s32.totalorder %s8, 2
    %p72 = por %p70, %p71
    %p73 = scmp.ne.s32.totalorder %s65, %s68
    %p74 = scmp.eq.s32.totalorder %s8, 0
    %p75 = por %p73, %p74
    %p76 = scmp.ne.s32.totalorder %s65, %s68
    %p77 = scmp.eq.s32.totalorder %s13, 2
    %p78 = por %p76, %p77
    %p79 = scmp.ne.s32.totalorder %s68, %s69
    %p80 = scmp.eq.s32.totalorder %s13, 0
    %p81 = por %p79, %p80
    %p82 = scmp.ne.s32.totalorder %s68, %s69
    %p83 = scmp.eq.s32.totalorder %s14, 2
    %p84 = por %p82, %p83
    %p86 = scmp.ne.s32.totalorder %s69, %s85
    %p87 = scmp.eq.s32.totalorder %s14, 0
    %p88 = por %p86, %p87
    %p89 = scmp.le.s32.totalorder 1, %s8
    %p90 = scmp.lt.s32.totalorder %s8, 4
    %p91 = pnand %p89, %p90
    %p92 = pneg %p91
    // Predicated region
    $region9: #{compression_relation_predictor_forward.8} parent=5 // pred_check
      _
    $region10: #{compression_relation_predictor_forward.8} parent=5 // pred_check_branch
      %94 = sbr.rel (%p91) target = $region12
    $region11: #{compression_relation_predictor_forward.8} parent=5 // pred_region
      %s95 = ssub.s32 %s8, 1
      // Predicated region
      $region13: #{compression_relation_predictor_forward.8} parent=11 // pred_check
        %p96 = pneg %p55
      $region14: #{compression_relation_predictor_forward.8} parent=11 // pred_check_branch
        %98 = sbr.rel (%p96) target = $region16
      $region15: #{compression_relation_predictor_forward.8} parent=11 // pred_region
        _
      $region16: #{compression_relation_predictor_forward.8} parent=11 // pred_fallthru
        _
    $region12: #{compression_relation_predictor_forward.8} parent=5 // pred_fallthru
      _
    %p99 = scmp.lt.s32.totalorder %s8, 3
    // Predicated region
    $region17: #{compression_relation_predictor_forward.8} parent=5 // pred_check
      %p100 = pneg %p99
    $region18: #{compression_relation_predictor_forward.8} parent=5 // pred_check_branch
      %102 = sbr.rel (%p100) target = $region20
    $region19: #{compression_relation_predictor_forward.8} parent=5 // pred_region
      // Predicated region
      $region21: #{compression_relation_predictor_forward.8} parent=19 // pred_check
        %p103 = pneg %p28
      $region22: #{compression_relation_predictor_forward.8} parent=19 // pred_check_branch
        %105 = sbr.rel (%p103) target = $region24
      $region23: #{compression_relation_predictor_forward.8} parent=19 // pred_region
        %s106 = smul.u32 16, %s8
        %p107 = scmp.lt.s32.totalorder %s106, 47
        %s108 = scalar_select %p107, %s106, 47
        %s109 = smul.addr %s108, 8
        %s110 = scalar_lea.vmem %s0, %s109
        %s111 = smul.u32 16, %s8
      $region24: #{compression_relation_predictor_forward.8} parent=19 // pred_fallthru
        _
    $region20: #{compression_relation_predictor_forward.8} parent=5 // pred_fallthru
      _
    %p112 = scmp.le.s32.totalorder 1, %s8
    %p113 = scmp.lt.s32.totalorder %s8, 4
    %p114 = pnand %p112, %p113
    %p115 = pneg %p114
    // Predicated region
    $region25: #{compression_relation_predictor_forward.8} parent=5 // pred_check
      _
    $region26: #{compression_relation_predictor_forward.8} parent=5 // pred_check_branch
      %117 = sbr.rel (%p114) target = $region28
    $region27: #{compression_relation_predictor_forward.8} parent=5 // pred_region
      %s118 = ssub.s32 %s8, 1
      %s119 = smul.u32 16, %s13
      %p120 = scmp.lt.s32.totalorder %s119, 47
      %s121 = scalar_select %p120, %s119, 47
      %s122 = smul.addr %s121, 8
      %s123 = scalar_lea.vmem %s0, %s122
      %p124 = pneg %p34
      %p125 = pneg %p31
      %p126 = pneg %p55
      %p127 = pneg %p52
      %p128 = pneg %p81
      %p129 = pneg %p78
      %s130 = smul.u32 16, %s13
      %p131 = scmp.lt.s32.totalorder %s130, 47
      %s132 = scalar_select %p131, %s130, 47
      %s133 = smul.addr %s132, 7
      %s134 = smul.addr %s133, 4
      %s135 = scalar_lea.vmem %s2, %s134
      %s136 = smul.u32 16, %s13
      %p137 = scmp.lt.s32.totalorder %s136, 47
      %s138 = scalar_select %p137, %s136, 47
      %s139 = smul.addr %s138, 8
      %s140 = scalar_lea.vmem %s0, %s139
      %s141 = smul.u32 16, %s13
      %s142 = smul.u32 16, %s13
      %p143 = scmp.lt.s32.totalorder %s142, 47
      %s144 = scalar_select %p143, %s142, 47
      %s145 = smul.addr %s144, 7
      %s146 = smul.addr %s145, 4
      %s147 = scalar_lea.vmem %s2, %s146
      %s148 = smul.u32 16, %s13
      %v149 = vld [vmem:[%s140] sm:$0xff]
      %v150 = vld [vmem:[%s140 + $0x8] sm:$0xff]
      %v151 = vld [vmem:[%s140 + $0x10] sm:$0xff]
      %v152 = vld [vmem:[%s140 + $0x18] sm:$0xff]
      %v153 = vld [vmem:[%s140 + $0x20] sm:$0xff]
      %v154 = vld [vmem:[%s140 + $0x28] sm:$0xff]
      %v155 = vld [vmem:[%s140 + $0x30] sm:$0xff]
      %v156 = vld [vmem:[%s140 + $0x38] sm:$0xff]
      %v157 = vld [vmem:[%s140 + $0x40] sm:$0xff]
      %v158 = vld [vmem:[%s140 + $0x48] sm:$0xff]
      %v159 = vld [vmem:[%s140 + $0x50] sm:$0xff]
      %v160 = vld [vmem:[%s140 + $0x58] sm:$0xff]
      %v161 = vld [vmem:[%s140 + $0x60] sm:$0xff]
      %v162 = vld [vmem:[%s140 + $0x68] sm:$0xff]
      %v163 = vld [vmem:[%s140 + $0x70] sm:$0xff]
      %v164 = vld [vmem:[%s140 + $0x78] sm:$0xff]
      %v165 = vmax.f32 %v149, 0.0
      %v166 = vmax.f32 %v150, 0.0
      %v167 = vmax.f32 %v151, 0.0
      %v168 = vmax.f32 %v152, 0.0
      %v169 = vmax.f32 %v153, 0.0
      %v170 = vmax.f32 %v154, 0.0
      %v171 = vmax.f32 %v155, 0.0
      %v172 = vmax.f32 %v156, 0.0
      %v173 = vmax.f32 %v157, 0.0
      %v174 = vmax.f32 %v158, 0.0
      %v175 = vmax.f32 %v159, 0.0
      %v176 = vmax.f32 %v160, 0.0
      %v177 = vmax.f32 %v161, 0.0
      %v178 = vmax.f32 %v162, 0.0
      %v179 = vmax.f32 %v163, 0.0
      %v180 = vmax.f32 %v164, 0.0
      %v181 = vld [vmem:[%s1] sm:$0xff]
      %v182 = vld [vmem:[%s1 + $0x8] sm:$0xff]
      %v183 = vld [vmem:[%s1 + $0x10] sm:$0xff]
      %v184 = vld [vmem:[%s1 + $0x18] sm:$0xff]
      %v185 = vld [vmem:[%s1 + $0x20] sm:$0xff]
      %v186 = vld [vmem:[%s1 + $0x28] sm:$0xff]
      %v187 = vld [vmem:[%s1 + $0x30] sm:$0xff]
      %v188 = vld [vmem:[%s1 + $0x38] sm:$0xff]
      %v189 = vld [vmem:[%s1 + $0x40] sm:$0xff]
      %v190 = vld [vmem:[%s1 + $0x48] sm:$0xff]
      %v191 = vld [vmem:[%s1 + $0x50] sm:$0xff]
      %v192 = vld [vmem:[%s1 + $0x58] sm:$0xff]
      %v193 = vld [vmem:[%s1 + $0x60] sm:$0xff]
      %v194 = vld [vmem:[%s1 + $0x68] sm:$0xff]
      %v195 = vld [vmem:[%s1 + $0x70] sm:$0xff]
      %v196 = vld [vmem:[%s1 + $0x78] sm:$0xff]
      %v197 = vld [vmem:[%s1 + $0x80] sm:$0xff]
      %v198 = vld [vmem:[%s1 + $0x88] sm:$0xff]
      %v199 = vld [vmem:[%s1 + $0x90] sm:$0xff]
      %v200 = vld [vmem:[%s1 + $0x98] sm:$0xff]
      %v201 = vld [vmem:[%s1 + $0xa0] sm:$0xff]
      %v202 = vld [vmem:[%s1 + $0xa8] sm:$0xff]
      %v203 = vld [vmem:[%s1 + $0xb0] sm:$0xff]
      %v204 = vld [vmem:[%s1 + $0xb8] sm:$0xff]
      %v205 = vld [vmem:[%s1 + $0xc0] sm:$0xff]
      %v206 = vld [vmem:[%s1 + $0xc8] sm:$0xff]
      %v207 = vld [vmem:[%s1 + $0xd0] sm:$0xff]
      %v208 = vld [vmem:[%s1 + $0xd8] sm:$0xff]
      %v209 = vld [vmem:[%s1 + $0xe0] sm:$0xff]
      %v210 = vld [vmem:[%s1 + $0xe8] sm:$0xff]
      %v211 = vld [vmem:[%s1 + $0xf0] sm:$0xff]
      %v212 = vld [vmem:[%s1 + $0xf8] sm:$0xff]
      %v213 = vld [vmem:[%s1 + $0x100] sm:$0xff]
      %v214 = vld [vmem:[%s1 + $0x108] sm:$0xff]
      %v215 = vld [vmem:[%s1 + $0x110] sm:$0xff]
      %v216 = vld [vmem:[%s1 + $0x118] sm:$0xff]
      %v217 = vld [vmem:[%s1 + $0x120] sm:$0xff]
      %v218 = vld [vmem:[%s1 + $0x128] sm:$0xff]
      %v219 = vld [vmem:[%s1 + $0x130] sm:$0xff]
      %v220 = vld [vmem:[%s1 + $0x138] sm:$0xff]
      %v221 = vld [vmem:[%s1 + $0x140] sm:$0xff]
      %v222 = vld [vmem:[%s1 + $0x148] sm:$0xff]
      %v223 = vld [vmem:[%s1 + $0x150] sm:$0xff]
      %v224 = vld [vmem:[%s1 + $0x158] sm:$0xff]
      %v225 = vld [vmem:[%s1 + $0x160] sm:$0xff]
      %v226 = vld [vmem:[%s1 + $0x168] sm:$0xff]
      %v227 = vld [vmem:[%s1 + $0x170] sm:$0xff]
      %v228 = vld [vmem:[%s1 + $0x178] sm:$0xff]
      %v229 = vld [vmem:[%s1 + $0x180] sm:$0xff]
      %v230 = vld [vmem:[%s1 + $0x188] sm:$0xff]
      %v231 = vld [vmem:[%s1 + $0x190] sm:$0xff]
      %v232 = vld [vmem:[%s1 + $0x198] sm:$0xff]
      %v233 = vld [vmem:[%s1 + $0x1a0] sm:$0xff]
      %v234 = vld [vmem:[%s1 + $0x1a8] sm:$0xff]
      %v235 = vld [vmem:[%s1 + $0x1b0] sm:$0xff]
      %v236 = vld [vmem:[%s1 + $0x1b8] sm:$0xff]
      %v237 = vld [vmem:[%s1 + $0x1c0] sm:$0xff]
      %v238 = vld [vmem:[%s1 + $0x1c8] sm:$0xff]
      %v239 = vld [vmem:[%s1 + $0x1d0] sm:$0xff]
      %v240 = vld [vmem:[%s1 + $0x1d8] sm:$0xff]
      %v241 = vld [vmem:[%s1 + $0x1e0] sm:$0xff]
      %v242 = vld [vmem:[%s1 + $0x1e8] sm:$0xff]
      %v243 = vld [vmem:[%s1 + $0x1f0] sm:$0xff]
      %v244 = vld [vmem:[%s1 + $0x1f8] sm:$0xff]
      %v245 = vld [vmem:[%s1 + $0x200] sm:$0xff]
      %v246 = vld [vmem:[%s1 + $0x208] sm:$0xff]
      %v247 = vld [vmem:[%s1 + $0x210] sm:$0xff]
      %v248 = vld [vmem:[%s1 + $0x218] sm:$0xff]
      %v249 = vld [vmem:[%s1 + $0x220] sm:$0xff]
      %v250 = vld [vmem:[%s1 + $0x228] sm:$0xff]
      %v251 = vld [vmem:[%s1 + $0x230] sm:$0xff]
      %v252 = vld [vmem:[%s1 + $0x238] sm:$0xff]
      %v253 = vld [vmem:[%s1 + $0x240] sm:$0xff]
      %v254 = vld [vmem:[%s1 + $0x248] sm:$0xff]
      %v255 = vld [vmem:[%s1 + $0x250] sm:$0xff]
      %v256 = vld [vmem:[%s1 + $0x258] sm:$0xff]
      %v257 = vld [vmem:[%s1 + $0x260] sm:$0xff]
      %v258 = vld [vmem:[%s1 + $0x268] sm:$0xff]
      %v259 = vld [vmem:[%s1 + $0x270] sm:$0xff]
      %v260 = vld [vmem:[%s1 + $0x278] sm:$0xff]
      %v261 = vld [vmem:[%s1 + $0x280] sm:$0xff]
      %v262 = vld [vmem:[%s1 + $0x288] sm:$0xff]
      %v263 = vld [vmem:[%s1 + $0x290] sm:$0xff]
      %v264 = vld [vmem:[%s1 + $0x298] sm:$0xff]
      %v265 = vld [vmem:[%s1 + $0x2a0] sm:$0xff]
      %v266 = vld [vmem:[%s1 + $0x2a8] sm:$0xff]
      %v267 = vld [vmem:[%s1 + $0x2b0] sm:$0xff]
      %v268 = vld [vmem:[%s1 + $0x2b8] sm:$0xff]
      %v269 = vld [vmem:[%s1 + $0x2c0] sm:$0xff]
      %v270 = vld [vmem:[%s1 + $0x2c8] sm:$0xff]
      %v271 = vld [vmem:[%s1 + $0x2d0] sm:$0xff]
      %v272 = vld [vmem:[%s1 + $0x2d8] sm:$0xff]
      %v273 = vld [vmem:[%s1 + $0x2e0] sm:$0xff]
      %v274 = vld [vmem:[%s1 + $0x2e8] sm:$0xff]
      %v275 = vld [vmem:[%s1 + $0x2f0] sm:$0xff]
      %v276 = vld [vmem:[%s1 + $0x2f8] sm:$0xff]
      %v277 = vld [vmem:[%s1 + $0x300] sm:$0xff]
      %v278 = vld [vmem:[%s1 + $0x308] sm:$0xff]
      %v279 = vld [vmem:[%s1 + $0x310] sm:$0xff]
      %v280 = vld [vmem:[%s1 + $0x318] sm:$0xff]
      %v281 = vld [vmem:[%s1 + $0x320] sm:$0xff]
      %v282 = vld [vmem:[%s1 + $0x328] sm:$0xff]
      %v283 = vld [vmem:[%s1 + $0x330] sm:$0xff]
      %v284 = vld [vmem:[%s1 + $0x338] sm:$0xff]
      %v285 = vld [vmem:[%s1 + $0x340] sm:$0xff]
      %v286 = vld [vmem:[%s1 + $0x348] sm:$0xff]
      %v287 = vld [vmem:[%s1 + $0x350] sm:$0xff]
      %v288 = vld [vmem:[%s1 + $0x358] sm:$0xff]
      %v289 = vld [vmem:[%s1 + $0x360] sm:$0xff]
      %v290 = vld [vmem:[%s1 + $0x368] sm:$0xff]
      %v291 = vld [vmem:[%s1 + $0x370] sm:$0xff]
      %v292 = vld [vmem:[%s1 + $0x378] sm:$0xff]
      %293 = vmatprep.subr.mxu0 %v182
      %294 = vmatpush1.msra.mxu0 %v181
      %295 = vmatprep.subr.mxu0 %v189
      %296 = vmatpush1.msra.mxu0 %v188
      %297 = vmatprep.subr.mxu0 %v196
      %298 = vmatpush1.msra.mxu0 %v195
      %299 = vmatprep.subr.mxu0 %v203
      %300 = vmatpush1.msra.mxu0 %v202
      %301 = vmatprep.subr.mxu0 %v210
      %302 = vmatpush1.msra.mxu0 %v209
      %303 = vmatprep.subr.mxu0 %v217
      %304 = vmatpush1.msra.mxu0 %v216
      %305 = vmatprep.subr.mxu0 %v224
      %306 = vmatpush1.msra.mxu0 %v223
      %307 = vmatprep.subr.mxu0 %v231
      %308 = vmatpush1.msra.mxu0 %v230
      %309 = vmatprep.subr.mxu0 %v238
      %310 = vmatpush1.msra.mxu0 %v237
      %311 = vmatprep.subr.mxu0 %v245
      %312 = vmatpush1.msra.mxu0 %v244
      %313 = vmatprep.subr.mxu0 %v252
      %314 = vmatpush1.msra.mxu0 %v251
      %315 = vmatprep.subr.mxu0 %v259
      %316 = vmatpush1.msra.mxu0 %v258
      %317 = vmatprep.subr.mxu0 %v266
      %318 = vmatpush1.msra.mxu0 %v265
      %319 = vmatprep.subr.mxu0 %v273
      %320 = vmatpush1.msra.mxu0 %v272
      %321 = vmatprep.subr.mxu0 %v280
      %322 = vmatpush1.msra.mxu0 %v279
      %323 = vmatprep.subr.mxu0 %v287
      %324 = vmatpush1.msra.mxu0 %v286
      %325 = vmatprep.subr.mxu0 0.0
      %326 = vmatpush1.msra.mxu0 0.0
      %327 = vmatprep.subr.mxu0 0.0
      %328 = vmatpush1.msra.mxu0 0.0
      %329 = vmatprep.subr.mxu0 0.0
      %330 = vmatpush1.msra.mxu0 0.0
      %331 = vmatprep.subr.mxu0 0.0
      %332 = vmatpush1.msra.mxu0 0.0
      %333 = vmatprep.subr.mxu0 0.0
      %334 = vmatpush1.msra.mxu0 0.0
      %335 = vmatprep.subr.mxu0 0.0
      %336 = vmatpush1.msra.mxu0 0.0
      %337 = vmatprep.subr.mxu0 0.0
      %338 = vmatpush1.msra.mxu0 0.0
      %339 = vmatprep.subr.mxu0 0.0
      %340 = vmatpush1.msra.mxu0 0.0
      %341 = vmatprep.subr.mxu0 0.0
      %342 = vmatpush1.msra.mxu0 0.0
      %343 = vmatprep.subr.mxu0 0.0
      %344 = vmatpush1.msra.mxu0 0.0
      %345 = vmatprep.subr.mxu0 0.0
      %346 = vmatpush1.msra.mxu0 0.0
      %347 = vmatprep.subr.mxu0 0.0
      %348 = vmatpush1.msra.mxu0 0.0
      %349 = vmatprep.subr.mxu0 0.0
      %350 = vmatpush1.msra.mxu0 0.0
      %351 = vmatprep.subr.mxu0 0.0
      %352 = vmatpush1.msra.mxu0 0.0
      %353 = vmatprep.subr.mxu0 0.0
      %354 = vmatpush1.msra.mxu0 0.0
      %355 = vmatprep.subr.mxu0 0.0
      %356 = vmatpush1.msra.mxu0 0.0
      %357 = vmatprep.mubr.f32.mxu0 0.0
      %358 = vmatmul.mubr.f32.gmra.mrb[0].mxu0 %v165
      %v359 = vpop.f32.mrb[0].mxu0
      %v360 = vadd.f32 0.0, %v359
      %v361 = vpop.f32.mrb[0].mxu0
      %v362 = vadd.f32 0.0, %v361
      %363 = vmatprep.mubr.f32.mxu0 0.0
      %364 = vmatmul.mubr.f32.gmra.mrb[0].mxu0 %v166
      %v365 = vpop.f32.mrb[0].mxu0
      %v366 = vadd.f32 0.0, %v365
      %v367 = vpop.f32.mrb[0].mxu0
      %v368 = vadd.f32 0.0, %v367
      %369 = vmatprep.mubr.f32.mxu0 0.0
      %370 = vmatmul.mubr.f32.gmra.mrb[0].mxu0 %v167
      %v371 = vpop.f32.mrb[0].mxu0
      %v372 = vadd.f32 0.0, %v371
      %v373 = vpop.f32.mrb[0].mxu0
      %v374 = vadd.f32 0.0, %v373
      %375 = vmatprep.mubr.f32.mxu0 0.0
      %376 = vmatmul.mubr.f32.gmra.mrb[0].mxu0 %v168
      %v377 = vpop.f32.mrb[0].mxu0
      %v378 = vadd.f32 0.0, %v377
      %v379 = vpop.f32.mrb[0].mxu0
      %v380 = vadd.f32 0.0, %v379
      %381 = vmatprep.mubr.f32.mxu0 0.0
      %382 = vmatmul.mubr.f32.gmra.mrb[0].mxu0 %v169
      %v383 = vpop.f32.mrb[0].mxu0
      %v384 = vadd.f32 0.0, %v383
      %v385 = vpop.f32.mrb[0].mxu0
      %v386 = vadd.f32 0.0, %v385
      %387 = vmatprep.mubr.f32.mxu0 0.0
      %388 = vmatmul.mubr.f32.gmra.mrb[0].mxu0 %v170
      %v389 = vpop.f32.mrb[0].mxu0
      %v390 = vadd.f32 0.0, %v389
      %v391 = vpop.f32.mrb[0].mxu0
      %v392 = vadd.f32 0.0, %v391
      %393 = vmatprep.mubr.f32.mxu0 0.0
      %394 = vmatmul.mubr.f32.gmra.mrb[0].mxu0 %v171
      %v395 = vpop.f32.mrb[0].mxu0
      %v396 = vadd.f32 0.0, %v395
      %v397 = vpop.f32.mrb[0].mxu0
      %v398 = vadd.f32 0.0, %v397
      %399 = vmatprep.mubr.f32.mxu0 0.0
      %400 = vmatmul.mubr.f32.gmra.mrb[0].mxu0 %v172
      %v401 = vpop.f32.mrb[0].mxu0
      %v402 = vadd.f32 0.0, %v401
      %v403 = vpop.f32.mrb[0].mxu0
      %v404 = vadd.f32 0.0, %v403
      %405 = vmatprep.mubr.f32.mxu0 0.0
      %406 = vmatmul.mubr.f32.gmra.mrb[0].mxu0 %v173
      %v407 = vpop.f32.mrb[0].mxu0
      %v408 = vadd.f32 0.0, %v407
      %v409 = vpop.f32.mrb[0].mxu0
      %v410 = vadd.f32 0.0, %v409
      %411 = vmatprep.mubr.f32.mxu0 0.0
      %412 = vmatmul.mubr.f32.gmra.mrb[0].mxu0 %v174
      %v413 = vpop.f32.mrb[0].mxu0
      %v414 = vadd.f32 0.0, %v413
      %v415 = vpop.f32.mrb[0].mxu0
      %v416 = vadd.f32 0.0, %v415
      %417 = vmatprep.mubr.f32.mxu0 0.0
      %418 = vmatmul.mubr.f32.gmra.mrb[0].mxu0 %v175
      %v419 = vpop.f32.mrb[0].mxu0
      %v420 = vadd.f32 0.0, %v419
      %v421 = vpop.f32.mrb[0].mxu0
      %v422 = vadd.f32 0.0, %v421
      %423 = vmatprep.mubr.f32.mxu0 0.0
      %424 = vmatmul.mubr.f32.gmra.mrb[0].mxu0 %v176
      %v425 = vpop.f32.mrb[0].mxu0
      %v426 = vadd.f32 0.0, %v425
      %v427 = vpop.f32.mrb[0].mxu0
      %v428 = vadd.f32 0.0, %v427
      %429 = vmatprep.mubr.f32.mxu0 0.0
      %430 = vmatmul.mubr.f32.gmra.mrb[0].mxu0 %v177
      %v431 = vpop.f32.mrb[0].mxu0
      %v432 = vadd.f32 0.0, %v431
      %v433 = vpop.f32.mrb[0].mxu0
      %v434 = vadd.f32 0.0, %v433
      %435 = vmatprep.mubr.f32.mxu0 0.0
      %436 = vmatmul.mubr.f32.gmra.mrb[0].mxu0 %v178
      %v437 = vpop.f32.mrb[0].mxu0
      %v438 = vadd.f32 0.0, %v437
      %v439 = vpop.f32.mrb[0].mxu0
      %v440 = vadd.f32 0.0, %v439
      %441 = vmatprep.mubr.f32.mxu0 0.0
      %442 = vmatmul.mubr.f32.gmra.mrb[0].mxu0 %v179
      %v443 = vpop.f32.mrb[0].mxu0
      %v444 = vadd.f32 0.0, %v443
      %v445 = vpop.f32.mrb[0].mxu0
      %v446 = vadd.f32 0.0, %v445
      %447 = vmatprep.mubr.f32.mxu0 0.0
      %448 = vmatmul.mubr.f32.gmra.mrb[0].mxu0 %v180
      %v449 = vpop.f32.mrb[0].mxu0
      %v450 = vadd.f32 0.0, %v449
      %v451 = vpop.f32.mrb[0].mxu0
      %v452 = vadd.f32 0.0, %v451
      %453 = vdwg.mxu0
      %454 = vmatprep.subr.mxu0 %v184
      %455 = vmatpush1.msra.mxu0 %v183
      %456 = vmatprep.subr.mxu0 %v191
      %457 = vmatpush1.msra.mxu0 %v190
      %458 = vmatprep.subr.mxu0 %v198
      %459 = vmatpush1.msra.mxu0 %v197
      %460 = vmatprep.subr.mxu0 %v205
      %461 = vmatpush1.msra.mxu0 %v204
      %462 = vmatprep.subr.mxu0 %v212
      %463 = vmatpush1.msra.mxu0 %v211
      %464 = vmatprep.subr.mxu0 %v219
      %465 = vmatpush1.msra.mxu0 %v218
      %466 = vmatprep.subr.mxu0 %v226
      %467 = vmatpush1.msra.mxu0 %v225
      %468 = vmatprep.subr.mxu0 %v233
      %469 = vmatpush1.msra.mxu0 %v232
      %470 = vmatprep.subr.mxu0 %v240
      %471 = vmatpush1.msra.mxu0 %v239
      %472 = vmatprep.subr.mxu0 %v247
      %473 = vmatpush1.msra.mxu0 %v246
      %474 = vmatprep.subr.mxu0 %v254
      %475 = vmatpush1.msra.mxu0 %v253
      %476 = vmatprep.subr.mxu0 %v261
      %477 = vmatpush1.msra.mxu0 %v260
      %478 = vmatprep.subr.mxu0 %v268
      %479 = vmatpush1.msra.mxu0 %v267
      %480 = vmatprep.subr.mxu0 %v275
      %481 = vmatpush1.msra.mxu0 %v274
      %482 = vmatprep.subr.mxu0 %v282
      %483 = vmatpush1.msra.mxu0 %v281
      %484 = vmatprep.subr.mxu0 %v289
      %485 = vmatpush1.msra.mxu0 %v288
      %486 = vmatprep.subr.mxu0 0.0
      %487 = vmatpush1.msra.mxu0 0.0
      %488 = vmatprep.subr.mxu0 0.0
      %489 = vmatpush1.msra.mxu0 0.0
      %490 = vmatprep.subr.mxu0 0.0
      %491 = vmatpush1.msra.mxu0 0.0
      %492 = vmatprep.subr.mxu0 0.0
      %493 = vmatpush1.msra.mxu0 0.0
      %494 = vmatprep.subr.mxu0 0.0
      %495 = vmatpush1.msra.mxu0 0.0
      %496 = vmatprep.subr.mxu0 0.0
      %497 = vmatpush1.msra.mxu0 0.0
      %498 = vmatprep.subr.mxu0 0.0
      %499 = vmatpush1.msra.mxu0 0.0
      %500 = vmatprep.subr.mxu0 0.0
      %501 = vmatpush1.msra.mxu0 0.0
      %502 = vmatprep.subr.mxu0 0.0
      %503 = vmatpush1.msra.mxu0 0.0
      %504 = vmatprep.subr.mxu0 0.0
      %505 = vmatpush1.msra.mxu0 0.0
      %506 = vmatprep.subr.mxu0 0.0
      %507 = vmatpush1.msra.mxu0 0.0
      %508 = vmatprep.subr.mxu0 0.0
      %509 = vmatpush1.msra.mxu0 0.0
      %510 = vmatprep.subr.mxu0 0.0
      %511 = vmatpush1.msra.mxu0 0.0
      %512 = vmatprep.subr.mxu0 0.0
      %513 = vmatpush1.msra.mxu0 0.0
      %514 = vmatprep.subr.mxu0 0.0
      %515 = vmatpush1.msra.mxu0 0.0
      %516 = vmatprep.subr.mxu0 0.0
      %517 = vmatpush1.msra.mxu0 0.0
      %518 = vmatprep.mubr.f32.mxu0 0.0
      %519 = vmatmul.mubr.f32.gmra.mrb[0].mxu0 %v165
      %v520 = vpop.f32.mrb[0].mxu0
      %v521 = vadd.f32 0.0, %v520
      %v522 = vpop.f32.mrb[0].mxu0
      %v523 = vadd.f32 0.0, %v522
      %524 = vmatprep.mubr.f32.mxu0 0.0
      %525 = vmatmul.mubr.f32.gmra.mrb[0].mxu0 %v166
      %v526 = vpop.f32.mrb[0].mxu0
      %v527 = vadd.f32 0.0, %v526
      %v528 = vpop.f32.mrb[0].mxu0
      %v529 = vadd.f32 0.0, %v528
      %530 = vmatprep.mubr.f32.mxu0 0.0
      %531 = vmatmul.mubr.f32.gmra.mrb[0].mxu0 %v167
      %v532 = vpop.f32.mrb[0].mxu0
      %v533 = vadd.f32 0.0, %v532
      %v534 = vpop.f32.mrb[0].mxu0
      %v535 = vadd.f32 0.0, %v534
      %536 = vmatprep.mubr.f32.mxu0 0.0
      %537 = vmatmul.mubr.f32.gmra.mrb[0].mxu0 %v168
      %v538 = vpop.f32.mrb[0].mxu0
      %v539 = vadd.f32 0.0, %v538
      %v540 = vpop.f32.mrb[0].mxu0
      %v541 = vadd.f32 0.0, %v540
      %542 = vmatprep.mubr.f32.mxu0 0.0
      %543 = vmatmul.mubr.f32.gmra.mrb[0].mxu0 %v169
      %v544 = vpop.f32.mrb[0].mxu0
      %v545 = vadd.f32 0.0, %v544
      %v546 = vpop.f32.mrb[0].mxu0
      %v547 = vadd.f32 0.0, %v546
      %548 = vmatprep.mubr.f32.mxu0 0.0
      %549 = vmatmul.mubr.f32.gmra.mrb[0].mxu0 %v170
      %v550 = vpop.f32.mrb[0].mxu0
      %v551 = vadd.f32 0.0, %v550
      %v552 = vpop.f32.mrb[0].mxu0
      %v553 = vadd.f32 0.0, %v552
      %554 = vmatprep.mubr.f32.mxu0 0.0
      %555 = vmatmul.mubr.f32.gmra.mrb[0].mxu0 %v171
      %v556 = vpop.f32.mrb[0].mxu0
      %v557 = vadd.f32 0.0, %v556
      %v558 = vpop.f32.mrb[0].mxu0
      %v559 = vadd.f32 0.0, %v558
      %560 = vmatprep.mubr.f32.mxu0 0.0
      %561 = vmatmul.mubr.f32.gmra.mrb[0].mxu0 %v172
      %v562 = vpop.f32.mrb[0].mxu0
      %v563 = vadd.f32 0.0, %v562
      %v564 = vpop.f32.mrb[0].mxu0
      %v565 = vadd.f32 0.0, %v564
      %566 = vmatprep.mubr.f32.mxu0 0.0
      %567 = vmatmul.mubr.f32.gmra.mrb[0].mxu0 %v173
      %v568 = vpop.f32.mrb[0].mxu0
      %v569 = vadd.f32 0.0, %v568
      %v570 = vpop.f32.mrb[0].mxu0
      %v571 = vadd.f32 0.0, %v570
      %572 = vmatprep.mubr.f32.mxu0 0.0
      %573 = vmatmul.mubr.f32.gmra.mrb[0].mxu0 %v174
      %v574 = vpop.f32.mrb[0].mxu0
      %v575 = vadd.f32 0.0, %v574
      %v576 = vpop.f32.mrb[0].mxu0
      %v577 = vadd.f32 0.0, %v576
      %578 = vmatprep.mubr.f32.mxu0 0.0
      %579 = vmatmul.mubr.f32.gmra.mrb[0].mxu0 %v175
      %v580 = vpop.f32.mrb[0].mxu0
      %v581 = vadd.f32 0.0, %v580
      %v582 = vpop.f32.mrb[0].mxu0
      %v583 = vadd.f32 0.0, %v582
      %584 = vmatprep.mubr.f32.mxu0 0.0
      %585 = vmatmul.mubr.f32.gmra.mrb[0].mxu0 %v176
      %v586 = vpop.f32.mrb[0].mxu0
      %v587 = vadd.f32 0.0, %v586
      %v588 = vpop.f32.mrb[0].mxu0
      %v589 = vadd.f32 0.0, %v588
      %590 = vmatprep.mubr.f32.mxu0 0.0
      %591 = vmatmul.mubr.f32.gmra.mrb[0].mxu0 %v177
      %v592 = vpop.f32.mrb[0].mxu0
      %v593 = vadd.f32 0.0, %v592
      %v594 = vpop.f32.mrb[0].mxu0
      %v595 = vadd.f32 0.0, %v594
      %596 = vmatprep.mubr.f32.mxu0 0.0
      %597 = vmatmul.mubr.f32.gmra.mrb[0].mxu0 %v178
      %v598 = vpop.f32.mrb[0].mxu0
      %v599 = vadd.f32 0.0, %v598
      %v600 = vpop.f32.mrb[0].mxu0
      %v601 = vadd.f32 0.0, %v600
      %602 = vmatprep.mubr.f32.mxu0 0.0
      %603 = vmatmul.mubr.f32.gmra.mrb[0].mxu0 %v179
      %v604 = vpop.f32.mrb[0].mxu0
      %v605 = vadd.f32 0.0, %v604
      %v606 = vpop.f32.mrb[0].mxu0
      %v607 = vadd.f32 0.0, %v606
      %608 = vmatprep.mubr.f32.mxu0 0.0
      %609 = vmatmul.mubr.f32.gmra.mrb[0].mxu0 %v180
      %v610 = vpop.f32.mrb[0].mxu0
      %v611 = vadd.f32 0.0, %v610
      %v612 = vpop.f32.mrb[0].mxu0
      %v613 = vadd.f32 0.0, %v612
      %614 = vdwg.mxu0
      %615 = vmatprep.subr.mxu0 %v186
      %616 = vmatpush1.msra.mxu0 %v185
      %617 = vmatprep.subr.mxu0 %v193
      %618 = vmatpush1.msra.mxu0 %v192
      %619 = vmatprep.subr.mxu0 %v200
      %620 = vmatpush1.msra.mxu0 %v199
      %621 = vmatprep.subr.mxu0 %v207
      %622 = vmatpush1.msra.mxu0 %v206
      %623 = vmatprep.subr.mxu0 %v214
      %624 = vmatpush1.msra.mxu0 %v213
      %625 = vmatprep.subr.mxu0 %v221
      %626 = vmatpush1.msra.mxu0 %v220
      %627 = vmatprep.subr.mxu0 %v228
      %628 = vmatpush1.msra.mxu0 %v227
      %629 = vmatprep.subr.mxu0 %v235
      %630 = vmatpush1.msra.mxu0 %v234
      %631 = vmatprep.subr.mxu0 %v242
      %632 = vmatpush1.msra.mxu0 %v241
      %633 = vmatprep.subr.mxu0 %v249
      %634 = vmatpush1.msra.mxu0 %v248
      %635 = vmatprep.subr.mxu0 %v256
      %636 = vmatpush1.msra.mxu0 %v255
      %637 = vmatprep.subr.mxu0 %v263
      %638 = vmatpush1.msra.mxu0 %v262
      %639 = vmatprep.subr.mxu0 %v270
      %640 = vmatpush1.msra.mxu0 %v269
      %641 = vmatprep.subr.mxu0 %v277
      %642 = vmatpush1.msra.mxu0 %v276
      %643 = vmatprep.subr.mxu0 %v284
      %644 = vmatpush1.msra.mxu0 %v283
      %645 = vmatprep.subr.mxu0 %v291
      %646 = vmatpush1.msra.mxu0 %v290
      %647 = vmatprep.subr.mxu0 0.0
      %648 = vmatpush1.msra.mxu0 0.0
      %649 = vmatprep.subr.mxu0 0.0
      %650 = vmatpush1.msra.mxu0 0.0
      %651 = vmatprep.subr.mxu0 0.0
      %652 = vmatpush1.msra.mxu0 0.0
      %653 = vmatprep.subr.mxu0 0.0
      %654 = vmatpush1.msra.mxu0 0.0
      %655 = vmatprep.subr.mxu0 0.0
      %656 = vmatpush1.msra.mxu0 0.0
      %657 = vmatprep.subr.mxu0 0.0
      %658 = vmatpush1.msra.mxu0 0.0
      %659 = vmatprep.subr.mxu0 0.0
      %660 = vmatpush1.msra.mxu0 0.0
      %661 = vmatprep.subr.mxu0 0.0
      %662 = vmatpush1.msra.mxu0 0.0
      %663 = vmatprep.subr.mxu0 0.0
      %664 = vmatpush1.msra.mxu0 0.0
      %665 = vmatprep.subr.mxu0 0.0
      %666 = vmatpush1.msra.mxu0 0.0
      %667 = vmatprep.subr.mxu0 0.0
      %668 = vmatpush1.msra.mxu0 0.0
      %669 = vmatprep.subr.mxu0 0.0
      %670 = vmatpush1.msra.mxu0 0.0
      %671 = vmatprep.subr.mxu0 0.0
      %672 = vmatpush1.msra.mxu0 0.0
      %673 = vmatprep.subr.mxu0 0.0
      %674 = vmatpush1.msra.mxu0 0.0
      %675 = vmatprep.subr.mxu0 0.0
      %676 = vmatpush1.msra.mxu0 0.0
      %677 = vmatprep.subr.mxu0 0.0
      %678 = vmatpush1.msra.mxu0 0.0
      %679 = vmatprep.mubr.f32.mxu0 0.0
      %680 = vmatmul.mubr.f32.gmra.mrb[0].mxu0 %v165
      %v681 = vpop.f32.mrb[0].mxu0
      %v682 = vadd.f32 0.0, %v681
      %v683 = vpop.f32.mrb[0].mxu0
      %v684 = vadd.f32 0.0, %v683
      %685 = vmatprep.mubr.f32.mxu0 0.0
      %686 = vmatmul.mubr.f32.gmra.mrb[0].mxu0 %v166
      %v687 = vpop.f32.mrb[0].mxu0
      %v688 = vadd.f32 0.0, %v687
      %v689 = vpop.f32.mrb[0].mxu0
      %v690 = vadd.f32 0.0, %v689
      %691 = vmatprep.mubr.f32.mxu0 0.0
      %692 = vmatmul.mubr.f32.gmra.mrb[0].mxu0 %v167
      %v693 = vpop.f32.mrb[0].mxu0
      %v694 = vadd.f32 0.0, %v693
      %v695 = vpop.f32.mrb[0].mxu0
      %v696 = vadd.f32 0.0, %v695
      %697 = vmatprep.mubr.f32.mxu0 0.0
      %698 = vmatmul.mubr.f32.gmra.mrb[0].mxu0 %v168
      %v699 = vpop.f32.mrb[0].mxu0
      %v700 = vadd.f32 0.0, %v699
      %v701 = vpop.f32.mrb[0].mxu0
      %v702 = vadd.f32 0.0, %v701
      %703 = vmatprep.mubr.f32.mxu0 0.0
      %704 = vmatmul.mubr.f32.gmra.mrb[0].mxu0 %v169
      %v705 = vpop.f32.mrb[0].mxu0
      %v706 = vadd.f32 0.0, %v705
      %v707 = vpop.f32.mrb[0].mxu0
      %v708 = vadd.f32 0.0, %v707
      %709 = vmatprep.mubr.f32.mxu0 0.0
      %710 = vmatmul.mubr.f32.gmra.mrb[0].mxu0 %v170
      %v711 = vpop.f32.mrb[0].mxu0
      %v712 = vadd.f32 0.0, %v711
      %v713 = vpop.f32.mrb[0].mxu0
      %v714 = vadd.f32 0.0, %v713
      %715 = vmatprep.mubr.f32.mxu0 0.0
      %716 = vmatmul.mubr.f32.gmra.mrb[0].mxu0 %v171
      %v717 = vpop.f32.mrb[0].mxu0
      %v718 = vadd.f32 0.0, %v717
      %v719 = vpop.f32.mrb[0].mxu0
      %v720 = vadd.f32 0.0, %v719
      %721 = vmatprep.mubr.f32.mxu0 0.0
      %722 = vmatmul.mubr.f32.gmra.mrb[0].mxu0 %v172
      %v723 = vpop.f32.mrb[0].mxu0
      %v724 = vadd.f32 0.0, %v723
      %v725 = vpop.f32.mrb[0].mxu0
      %v726 = vadd.f32 0.0, %v725
      %727 = vmatprep.mubr.f32.mxu0 0.0
      %728 = vmatmul.mubr.f32.gmra.mrb[0].mxu0 %v173
      %v729 = vpop.f32.mrb[0].mxu0
      %v730 = vadd.f32 0.0, %v729
      %v731 = vpop.f32.mrb[0].mxu0
      %v732 = vadd.f32 0.0, %v731
      %733 = vmatprep.mubr.f32.mxu0 0.0
      %734 = vmatmul.mubr.f32.gmra.mrb[0].mxu0 %v174
      %v735 = vpop.f32.mrb[0].mxu0
      %v736 = vadd.f32 0.0, %v735
      %v737 = vpop.f32.mrb[0].mxu0
      %v738 = vadd.f32 0.0, %v737
      %739 = vmatprep.mubr.f32.mxu0 0.0
      %740 = vmatmul.mubr.f32.gmra.mrb[0].mxu0 %v175
      %v741 = vpop.f32.mrb[0].mxu0
      %v742 = vadd.f32 0.0, %v741
      %v743 = vpop.f32.mrb[0].mxu0
      %v744 = vadd.f32 0.0, %v743
      %745 = vmatprep.mubr.f32.mxu0 0.0
      %746 = vmatmul.mubr.f32.gmra.mrb[0].mxu0 %v176
      %v747 = vpop.f32.mrb[0].mxu0
      %v748 = vadd.f32 0.0, %v747
      %v749 = vpop.f32.mrb[0].mxu0
      %v750 = vadd.f32 0.0, %v749
      %751 = vmatprep.mubr.f32.mxu0 0.0
      %752 = vmatmul.mubr.f32.gmra.mrb[0].mxu0 %v177
      %v753 = vpop.f32.mrb[0].mxu0
      %v754 = vadd.f32 0.0, %v753
      %v755 = vpop.f32.mrb[0].mxu0
      %v756 = vadd.f32 0.0, %v755
      %757 = vmatprep.mubr.f32.mxu0 0.0
      %758 = vmatmul.mubr.f32.gmra.mrb[0].mxu0 %v178
      %v759 = vpop.f32.mrb[0].mxu0
      %v760 = vadd.f32 0.0, %v759
      %v761 = vpop.f32.mrb[0].mxu0
      %v762 = vadd.f32 0.0, %v761
      %763 = vmatprep.mubr.f32.mxu0 0.0
      %764 = vmatmul.mubr.f32.gmra.mrb[0].mxu0 %v179
      %v765 = vpop.f32.mrb[0].mxu0
      %v766 = vadd.f32 0.0, %v765
      %v767 = vpop.f32.mrb[0].mxu0
      %v768 = vadd.f32 0.0, %v767
      %769 = vmatprep.mubr.f32.mxu0 0.0
      %770 = vmatmul.mubr.f32.gmra.mrb[0].mxu0 %v180
      %v771 = vpop.f32.mrb[0].mxu0
      %v772 = vadd.f32 0.0, %v771
      %v773 = vpop.f32.mrb[0].mxu0
      %v774 = vadd.f32 0.0, %v773
      %775 = vdwg.mxu0
      %776 = vmatprep.subr.mxu0 0.0
      %777 = vmatpush1.msra.mxu0 %v187
      %778 = vmatprep.subr.mxu0 0.0
      %779 = vmatpush1.msra.mxu0 %v194
      %780 = vmatprep.subr.mxu0 0.0
      %781 = vmatpush1.msra.mxu0 %v201
      %782 = vmatprep.subr.mxu0 0.0
      %783 = vmatpush1.msra.mxu0 %v208
      %784 = vmatprep.subr.mxu0 0.0
      %785 = vmatpush1.msra.mxu0 %v215
      %786 = vmatprep.subr.mxu0 0.0
      %787 = vmatpush1.msra.mxu0 %v222
      %788 = vmatprep.subr.mxu0 0.0
      %789 = vmatpush1.msra.mxu0 %v229
      %790 = vmatprep.subr.mxu0 0.0
      %791 = vmatpush1.msra.mxu0 %v236
      %792 = vmatprep.subr.mxu0 0.0
      %793 = vmatpush1.msra.mxu0 %v243
      %794 = vmatprep.subr.mxu0 0.0
      %795 = vmatpush1.msra.mxu0 %v250
      %796 = vmatprep.subr.mxu0 0.0
      %797 = vmatpush1.msra.mxu0 %v257
      %798 = vmatprep.subr.mxu0 0.0
      %799 = vmatpush1.msra.mxu0 %v264
      %800 = vmatprep.subr.mxu0 0.0
      %801 = vmatpush1.msra.mxu0 %v271
      %802 = vmatprep.subr.mxu0 0.0
      %803 = vmatpush1.msra.mxu0 %v278
      %804 = vmatprep.subr.mxu0 0.0
      %805 = vmatpush1.msra.mxu0 %v285
      %806 = vmatprep.subr.mxu0 0.0
      %807 = vmatpush1.msra.mxu0 %v292
      %808 = vmatprep.subr.mxu0 0.0
      %809 = vmatpush1.msra.mxu0 0.0
      %810 = vmatprep.subr.mxu0 0.0
      %811 = vmatpush1.msra.mxu0 0.0
      %812 = vmatprep.subr.mxu0 0.0
      %813 = vmatpush1.msra.mxu0 0.0
      %814 = vmatprep.subr.mxu0 0.0
      %815 = vmatpush1.msra.mxu0 0.0
      %816 = vmatprep.subr.mxu0 0.0
      %817 = vmatpush1.msra.mxu0 0.0
      %818 = vmatprep.subr.mxu0 0.0
      %819 = vmatpush1.msra.mxu0 0.0
      %820 = vmatprep.subr.mxu0 0.0
      %821 = vmatpush1.msra.mxu0 0.0
      %822 = vmatprep.subr.mxu0 0.0
      %823 = vmatpush1.msra.mxu0 0.0
      %824 = vmatprep.subr.mxu0 0.0
      %825 = vmatpush1.msra.mxu0 0.0
      %826 = vmatprep.subr.mxu0 0.0
      %827 = vmatpush1.msra.mxu0 0.0
      %828 = vmatprep.subr.mxu0 0.0
      %829 = vmatpush1.msra.mxu0 0.0
      %830 = vmatprep.subr.mxu0 0.0
      %831 = vmatpush1.msra.mxu0 0.0
      %832 = vmatprep.subr.mxu0 0.0
      %833 = vmatpush1.msra.mxu0 0.0
      %834 = vmatprep.subr.mxu0 0.0
      %835 = vmatpush1.msra.mxu0 0.0
      %836 = vmatprep.subr.mxu0 0.0
      %837 = vmatpush1.msra.mxu0 0.0
      %838 = vmatprep.subr.mxu0 0.0
      %839 = vmatpush1.msra.mxu0 0.0
      %840 = vmatprep.mubr.f32.mxu0 0.0
      %841 = vmatmul.mubr.f32.gmra.mrb[0].mxu0 %v165
      %v842 = vpop.f32.mrb[0].mxu0
      %v843 = vadd.f32 0.0, %v842
      %v844 = vpop.f32.mrb[0].mxu0
      %845 = vmatprep.mubr.f32.mxu0 0.0
      %846 = vmatmul.mubr.f32.gmra.mrb[0].mxu0 %v166
      %v847 = vpop.f32.mrb[0].mxu0
      %v848 = vadd.f32 0.0, %v847
      %v849 = vpop.f32.mrb[0].mxu0
      %850 = vmatprep.mubr.f32.mxu0 0.0
      %851 = vmatmul.mubr.f32.gmra.mrb[0].mxu0 %v167
      %v852 = vpop.f32.mrb[0].mxu0
      %v853 = vadd.f32 0.0, %v852
      %v854 = vpop.f32.mrb[0].mxu0
      %855 = vmatprep.mubr.f32.mxu0 0.0
      %856 = vmatmul.mubr.f32.gmra.mrb[0].mxu0 %v168
      %v857 = vpop.f32.mrb[0].mxu0
      %v858 = vadd.f32 0.0, %v857
      %v859 = vpop.f32.mrb[0].mxu0
      %860 = vmatprep.mubr.f32.mxu0 0.0
      %861 = vmatmul.mubr.f32.gmra.mrb[0].mxu0 %v169
      %v862 = vpop.f32.mrb[0].mxu0
      %v863 = vadd.f32 0.0, %v862
      %v864 = vpop.f32.mrb[0].mxu0
      %865 = vmatprep.mubr.f32.mxu0 0.0
      %866 = vmatmul.mubr.f32.gmra.mrb[0].mxu0 %v170
      %v867 = vpop.f32.mrb[0].mxu0
      %v868 = vadd.f32 0.0, %v867
      %v869 = vpop.f32.mrb[0].mxu0
      %870 = vmatprep.mubr.f32.mxu0 0.0
      %871 = vmatmul.mubr.f32.gmra.mrb[0].mxu0 %v171
      %v872 = vpop.f32.mrb[0].mxu0
      %v873 = vadd.f32 0.0, %v872
      %v874 = vpop.f32.mrb[0].mxu0
      %875 = vmatprep.mubr.f32.mxu0 0.0
      %876 = vmatmul.mubr.f32.gmra.mrb[0].mxu0 %v172
      %v877 = vpop.f32.mrb[0].mxu0
      %v878 = vadd.f32 0.0, %v877
      %v879 = vpop.f32.mrb[0].mxu0
      %880 = vmatprep.mubr.f32.mxu0 0.0
      %881 = vmatmul.mubr.f32.gmra.mrb[0].mxu0 %v173
      %v882 = vpop.f32.mrb[0].mxu0
      %v883 = vadd.f32 0.0, %v882
      %v884 = vpop.f32.mrb[0].mxu0
      %885 = vmatprep.mubr.f32.mxu0 0.0
      %886 = vmatmul.mubr.f32.gmra.mrb[0].mxu0 %v174
      %v887 = vpop.f32.mrb[0].mxu0
      %v888 = vadd.f32 0.0, %v887
      %v889 = vpop.f32.mrb[0].mxu0
      %890 = vmatprep.mubr.f32.mxu0 0.0
      %891 = vmatmul.mubr.f32.gmra.mrb[0].mxu0 %v175
      %v892 = vpop.f32.mrb[0].mxu0
      %v893 = vadd.f32 0.0, %v892
      %v894 = vpop.f32.mrb[0].mxu0
      %895 = vmatprep.mubr.f32.mxu0 0.0
      %896 = vmatmul.mubr.f32.gmra.mrb[0].mxu0 %v176
      %v897 = vpop.f32.mrb[0].mxu0
      %v898 = vadd.f32 0.0, %v897
      %v899 = vpop.f32.mrb[0].mxu0
      %900 = vmatprep.mubr.f32.mxu0 0.0
      %901 = vmatmul.mubr.f32.gmra.mrb[0].mxu0 %v177
      %v902 = vpop.f32.mrb[0].mxu0
      %v903 = vadd.f32 0.0, %v902
      %v904 = vpop.f32.mrb[0].mxu0
      %905 = vmatprep.mubr.f32.mxu0 0.0
      %906 = vmatmul.mubr.f32.gmra.mrb[0].mxu0 %v178
      %v907 = vpop.f32.mrb[0].mxu0
      %v908 = vadd.f32 0.0, %v907
      %v909 = vpop.f32.mrb[0].mxu0
      %910 = vmatprep.mubr.f32.mxu0 0.0
      %911 = vmatmul.mubr.f32.gmra.mrb[0].mxu0 %v179
      %v912 = vpop.f32.mrb[0].mxu0
      %v913 = vadd.f32 0.0, %v912
      %v914 = vpop.f32.mrb[0].mxu0
      %915 = vmatprep.mubr.f32.mxu0 0.0
      %916 = vmatmul.mubr.f32.gmra.mrb[0].mxu0 %v180
      %v917 = vpop.f32.mrb[0].mxu0
      %v918 = vadd.f32 0.0, %v917
      %v919 = vpop.f32.mrb[0].mxu0
      %920 = vdwg.mxu0
      %v921 = vpack.c.bf16 %v366, %v360
      %v922 = vpack.c.bf16 %v368, %v362
      %v923 = vpack.c.bf16 %v527, %v521
      %v924 = vpack.c.bf16 %v529, %v523
      %v925 = vpack.c.bf16 %v688, %v682
      %v926 = vpack.c.bf16 %v690, %v684
      %v927 = vpack.c.bf16 %v848, %v843
      %v928 = vpack.c.bf16 %v378, %v372
      %v929 = vpack.c.bf16 %v380, %v374
      %v930 = vpack.c.bf16 %v539, %v533
      %v931 = vpack.c.bf16 %v541, %v535
      %v932 = vpack.c.bf16 %v700, %v694
      %v933 = vpack.c.bf16 %v702, %v696
      %v934 = vpack.c.bf16 %v858, %v853
      %v935 = vpack.c.bf16 %v390, %v384
      %v936 = vpack.c.bf16 %v392, %v386
      %v937 = vpack.c.bf16 %v551, %v545
      %v938 = vpack.c.bf16 %v553, %v547
      %v939 = vpack.c.bf16 %v712, %v706
      %v940 = vpack.c.bf16 %v714, %v708
      %v941 = vpack.c.bf16 %v868, %v863
      %v942 = vpack.c.bf16 %v402, %v396
      %v943 = vpack.c.bf16 %v404, %v398
      %v944 = vpack.c.bf16 %v563, %v557
      %v945 = vpack.c.bf16 %v565, %v559
      %v946 = vpack.c.bf16 %v724, %v718
      %v947 = vpack.c.bf16 %v726, %v720
      %v948 = vpack.c.bf16 %v878, %v873
      %v949 = vpack.c.bf16 %v414, %v408
      %v950 = vpack.c.bf16 %v416, %v410
      %v951 = vpack.c.bf16 %v575, %v569
      %v952 = vpack.c.bf16 %v577, %v571
      %v953 = vpack.c.bf16 %v736, %v730
      %v954 = vpack.c.bf16 %v738, %v732
      %v955 = vpack.c.bf16 %v888, %v883
      %v956 = vpack.c.bf16 %v426, %v420
      %v957 = vpack.c.bf16 %v428, %v422
      %v958 = vpack.c.bf16 %v587, %v581
      %v959 = vpack.c.bf16 %v589, %v583
      %v960 = vpack.c.bf16 %v748, %v742
      %v961 = vpack.c.bf16 %v750, %v744
      %v962 = vpack.c.bf16 %v898, %v893
      %v963 = vpack.c.bf16 %v438, %v432
      %v964 = vpack.c.bf16 %v440, %v434
      %v965 = vpack.c.bf16 %v599, %v593
      %v966 = vpack.c.bf16 %v601, %v595
      %v967 = vpack.c.bf16 %v760, %v754
      %v968 = vpack.c.bf16 %v762, %v756
      %v969 = vpack.c.bf16 %v908, %v903
      %v970 = vpack.c.bf16 %v450, %v444
      %v971 = vpack.c.bf16 %v452, %v446
      %v972 = vpack.c.bf16 %v611, %v605
      %v973 = vpack.c.bf16 %v613, %v607
      %v974 = vpack.c.bf16 %v772, %v766
      %v975 = vpack.c.bf16 %v774, %v768
      %v976 = vpack.c.bf16 %v918, %v913
      %v1033 = vunpack.c.l.b16 %v921
      %v1034 = vunpack.c.l.b16 %v922
      %v1035 = vunpack.c.l.b16 %v923
      %v1036 = vunpack.c.l.b16 %v924
      %v1037 = vunpack.c.l.b16 %v925
      %v1038 = vunpack.c.l.b16 %v926
      %v1039 = vunpack.c.l.b16 %v927
      %v1040 = vunpack.c.h.b16 %v921
      %v1041 = vunpack.c.h.b16 %v922
      %v1042 = vunpack.c.h.b16 %v923
      %v1043 = vunpack.c.h.b16 %v924
      %v1044 = vunpack.c.h.b16 %v925
      %v1045 = vunpack.c.h.b16 %v926
      %v1046 = vunpack.c.h.b16 %v927
      %v1047 = vunpack.c.l.b16 %v928
      %v1048 = vunpack.c.l.b16 %v929
      %v1049 = vunpack.c.l.b16 %v930
      %v1050 = vunpack.c.l.b16 %v931
      %v1051 = vunpack.c.l.b16 %v932
      %v1052 = vunpack.c.l.b16 %v933
      %v1053 = vunpack.c.l.b16 %v934
      %v1054 = vunpack.c.h.b16 %v928
      %v1055 = vunpack.c.h.b16 %v929
      %v1056 = vunpack.c.h.b16 %v930
      %v1057 = vunpack.c.h.b16 %v931
      %v1058 = vunpack.c.h.b16 %v932
      %v1059 = vunpack.c.h.b16 %v933
      %v1060 = vunpack.c.h.b16 %v934
      %v1061 = vunpack.c.l.b16 %v935
      %v1062 = vunpack.c.l.b16 %v936
      %v1063 = vunpack.c.l.b16 %v937
      %v1064 = vunpack.c.l.b16 %v938
      %v1065 = vunpack.c.l.b16 %v939
      %v1066 = vunpack.c.l.b16 %v940
      %v1067 = vunpack.c.l.b16 %v941
      %v1068 = vunpack.c.h.b16 %v935
      %v1069 = vunpack.c.h.b16 %v936
      %v1070 = vunpack.c.h.b16 %v937
      %v1071 = vunpack.c.h.b16 %v938
      %v1072 = vunpack.c.h.b16 %v939
      %v1073 = vunpack.c.h.b16 %v940
      %v1074 = vunpack.c.h.b16 %v941
      %v1075 = vunpack.c.l.b16 %v942
      %v1076 = vunpack.c.l.b16 %v943
      %v1077 = vunpack.c.l.b16 %v944
      %v1078 = vunpack.c.l.b16 %v945
      %v1079 = vunpack.c.l.b16 %v946
      %v1080 = vunpack.c.l.b16 %v947
      %v1081 = vunpack.c.l.b16 %v948
      %v1082 = vunpack.c.h.b16 %v942
      %v1083 = vunpack.c.h.b16 %v943
      %v1084 = vunpack.c.h.b16 %v944
      %v1085 = vunpack.c.h.b16 %v945
      %v1086 = vunpack.c.h.b16 %v946
      %v1087 = vunpack.c.h.b16 %v947
      %v1088 = vunpack.c.h.b16 %v948
      %v1089 = vunpack.c.l.b16 %v949
      %v1090 = vunpack.c.l.b16 %v950
      %v1091 = vunpack.c.l.b16 %v951
      %v1092 = vunpack.c.l.b16 %v952
      %v1093 = vunpack.c.l.b16 %v953
      %v1094 = vunpack.c.l.b16 %v954
      %v1095 = vunpack.c.l.b16 %v955
      %v1096 = vunpack.c.h.b16 %v949
      %v1097 = vunpack.c.h.b16 %v950
      %v1098 = vunpack.c.h.b16 %v951
      %v1099 = vunpack.c.h.b16 %v952
      %v1100 = vunpack.c.h.b16 %v953
      %v1101 = vunpack.c.h.b16 %v954
      %v1102 = vunpack.c.h.b16 %v955
      %v1103 = vunpack.c.l.b16 %v956
      %v1104 = vunpack.c.l.b16 %v957
      %v1105 = vunpack.c.l.b16 %v958
      %v1106 = vunpack.c.l.b16 %v959
      %v1107 = vunpack.c.l.b16 %v960
      %v1108 = vunpack.c.l.b16 %v961
      %v1109 = vunpack.c.l.b16 %v962
      %v1110 = vunpack.c.h.b16 %v956
      %v1111 = vunpack.c.h.b16 %v957
      %v1112 = vunpack.c.h.b16 %v958
      %v1113 = vunpack.c.h.b16 %v959
      %v1114 = vunpack.c.h.b16 %v960
      %v1115 = vunpack.c.h.b16 %v961
      %v1116 = vunpack.c.h.b16 %v962
      %v1117 = vunpack.c.l.b16 %v963
      %v1118 = vunpack.c.l.b16 %v964
      %v1119 = vunpack.c.l.b16 %v965
      %v1120 = vunpack.c.l.b16 %v966
      %v1121 = vunpack.c.l.b16 %v967
      %v1122 = vunpack.c.l.b16 %v968
      %v1123 = vunpack.c.l.b16 %v969
      %v1124 = vunpack.c.h.b16 %v963
      %v1125 = vunpack.c.h.b16 %v964
      %v1126 = vunpack.c.h.b16 %v965
      %v1127 = vunpack.c.h.b16 %v966
      %v1128 = vunpack.c.h.b16 %v967
      %v1129 = vunpack.c.h.b16 %v968
      %v1130 = vunpack.c.h.b16 %v969
      %v1131 = vunpack.c.l.b16 %v970
      %v1132 = vunpack.c.l.b16 %v971
      %v1133 = vunpack.c.l.b16 %v972
      %v1134 = vunpack.c.l.b16 %v973
      %v1135 = vunpack.c.l.b16 %v974
      %v1136 = vunpack.c.l.b16 %v975
      %v1137 = vunpack.c.l.b16 %v976
      %v1138 = vunpack.c.h.b16 %v970
      %v1139 = vunpack.c.h.b16 %v971
      %v1140 = vunpack.c.h.b16 %v972
      %v1141 = vunpack.c.h.b16 %v973
      %v1142 = vunpack.c.h.b16 %v974
      %v1143 = vunpack.c.h.b16 %v975
      %v1144 = vunpack.c.h.b16 %v976
      %v1145 = vpack.c.b16 %v1034, %v1033
      %v1146 = vpack.c.b16 %v1036, %v1035
      %v1147 = vpack.c.b16 %v1038, %v1037
      %v1148 = vpack.c.b16 %v1039, %v1039
      %v1149 = vpack.c.b16 %v1041, %v1040
      %v1150 = vpack.c.b16 %v1043, %v1042
      %v1151 = vpack.c.b16 %v1045, %v1044
      %v1152 = vpack.c.b16 %v1046, %v1046
      %v1153 = vpack.c.b16 %v1048, %v1047
      %v1154 = vpack.c.b16 %v1050, %v1049
      %v1155 = vpack.c.b16 %v1052, %v1051
      %v1156 = vpack.c.b16 %v1053, %v1053
      %v1157 = vpack.c.b16 %v1055, %v1054
      %v1158 = vpack.c.b16 %v1057, %v1056
      %v1159 = vpack.c.b16 %v1059, %v1058
      %v1160 = vpack.c.b16 %v1060, %v1060
      %v1161 = vpack.c.b16 %v1062, %v1061
      %v1162 = vpack.c.b16 %v1064, %v1063
      %v1163 = vpack.c.b16 %v1066, %v1065
      %v1164 = vpack.c.b16 %v1067, %v1067
      %v1165 = vpack.c.b16 %v1069, %v1068
      %v1166 = vpack.c.b16 %v1071, %v1070
      %v1167 = vpack.c.b16 %v1073, %v1072
      %v1168 = vpack.c.b16 %v1074, %v1074
      %v1169 = vpack.c.b16 %v1076, %v1075
      %v1170 = vpack.c.b16 %v1078, %v1077
      %v1171 = vpack.c.b16 %v1080, %v1079
      %v1172 = vpack.c.b16 %v1081, %v1081
      %v1173 = vpack.c.b16 %v1083, %v1082
      %v1174 = vpack.c.b16 %v1085, %v1084
      %v1175 = vpack.c.b16 %v1087, %v1086
      %v1176 = vpack.c.b16 %v1088, %v1088
      %v1177 = vpack.c.b16 %v1090, %v1089
      %v1178 = vpack.c.b16 %v1092, %v1091
      %v1179 = vpack.c.b16 %v1094, %v1093
      %v1180 = vpack.c.b16 %v1095, %v1095
      %v1181 = vpack.c.b16 %v1097, %v1096
      %v1182 = vpack.c.b16 %v1099, %v1098
      %v1183 = vpack.c.b16 %v1101, %v1100
      %v1184 = vpack.c.b16 %v1102, %v1102
      %v1185 = vpack.c.b16 %v1104, %v1103
      %v1186 = vpack.c.b16 %v1106, %v1105
      %v1187 = vpack.c.b16 %v1108, %v1107
      %v1188 = vpack.c.b16 %v1109, %v1109
      %v1189 = vpack.c.b16 %v1111, %v1110
      %v1190 = vpack.c.b16 %v1113, %v1112
      %v1191 = vpack.c.b16 %v1115, %v1114
      %v1192 = vpack.c.b16 %v1116, %v1116
      %v1193 = vpack.c.b16 %v1118, %v1117
      %v1194 = vpack.c.b16 %v1120, %v1119
      %v1195 = vpack.c.b16 %v1122, %v1121
      %v1196 = vpack.c.b16 %v1123, %v1123
      %v1197 = vpack.c.b16 %v1125, %v1124
      %v1198 = vpack.c.b16 %v1127, %v1126
      %v1199 = vpack.c.b16 %v1129, %v1128
      %v1200 = vpack.c.b16 %v1130, %v1130
      %v1201 = vpack.c.b16 %v1132, %v1131
      %v1202 = vpack.c.b16 %v1134, %v1133
      %v1203 = vpack.c.b16 %v1136, %v1135
      %v1204 = vpack.c.b16 %v1137, %v1137
      %v1205 = vpack.c.b16 %v1139, %v1138
      %v1206 = vpack.c.b16 %v1141, %v1140
      %v1207 = vpack.c.b16 %v1143, %v1142
      %v1208 = vpack.c.b16 %v1144, %v1144
      %1273 = vst [vmem:[%s147] sm:$0xff] %v1145
      %1274 = vst [vmem:[%s147 + $0x8] sm:$0xff] %v1146
      %1275 = vst [vmem:[%s147 + $0x10] sm:$0xff] %v1147
      %1276 = vst [vmem:[%s147 + $0x18] sm:$0xf] %v1148
      %1277 = vst [vmem:[%s147 + $0x1c] sm:$0xff] %v1149
      %1278 = vst [vmem:[%s147 + $0x24] sm:$0xff] %v1150
      %1279 = vst [vmem:[%s147 + $0x2c] sm:$0xff] %v1151
      %1280 = vst [vmem:[%s147 + $0x34] sm:$0xf] %v1152
      %1281 = vst [vmem:[%s147 + $0x38] sm:$0xff] %v1153
      %1282 = vst [vmem:[%s147 + $0x40] sm:$0xff] %v1154
      %1283 = vst [vmem:[%s147 + $0x48] sm:$0xff] %v1155
      %1284 = vst [vmem:[%s147 + $0x50] sm:$0xf] %v1156
      %1285 = vst [vmem:[%s147 + $0x54] sm:$0xff] %v1157
      %1286 = vst [vmem:[%s147 + $0x5c] sm:$0xff] %v1158
      %1287 = vst [vmem:[%s147 + $0x64] sm:$0xff] %v1159
      %1288 = vst [vmem:[%s147 + $0x6c] sm:$0xf] %v1160
      %1289 = vst [vmem:[%s147 + $0x70] sm:$0xff] %v1161
      %1290 = vst [vmem:[%s147 + $0x78] sm:$0xff] %v1162
      %1291 = vst [vmem:[%s147 + $0x80] sm:$0xff] %v1163
      %1292 = vst [vmem:[%s147 + $0x88] sm:$0xf] %v1164
      %1293 = vst [vmem:[%s147 + $0x8c] sm:$0xff] %v1165
      %1294 = vst [vmem:[%s147 + $0x94] sm:$0xff] %v1166
      %1295 = vst [vmem:[%s147 + $0x9c] sm:$0xff] %v1167
      %1296 = vst [vmem:[%s147 + $0xa4] sm:$0xf] %v1168
      %1297 = vst [vmem:[%s147 + $0xa8] sm:$0xff] %v1169
      %1298 = vst [vmem:[%s147 + $0xb0] sm:$0xff] %v1170
      %1299 = vst [vmem:[%s147 + $0xb8] sm:$0xff] %v1171
      %1300 = vst [vmem:[%s147 + $0xc0] sm:$0xf] %v1172
      %1301 = vst [vmem:[%s147 + $0xc4] sm:$0xff] %v1173
      %1302 = vst [vmem:[%s147 + $0xcc] sm:$0xff] %v1174
      %1303 = vst [vmem:[%s147 + $0xd4] sm:$0xff] %v1175
      %1304 = vst [vmem:[%s147 + $0xdc] sm:$0xf] %v1176
      %1305 = vst [vmem:[%s147 + $0xe0] sm:$0xff] %v1177
      %1306 = vst [vmem:[%s147 + $0xe8] sm:$0xff] %v1178
      %1307 = vst [vmem:[%s147 + $0xf0] sm:$0xff] %v1179
      %1308 = vst [vmem:[%s147 + $0xf8] sm:$0xf] %v1180
      %1309 = vst [vmem:[%s147 + $0xfc] sm:$0xff] %v1181
      %1310 = vst [vmem:[%s147 + $0x104] sm:$0xff] %v1182
      %1311 = vst [vmem:[%s147 + $0x10c] sm:$0xff] %v1183
      %1312 = vst [vmem:[%s147 + $0x114] sm:$0xf] %v1184
      %1313 = vst [vmem:[%s147 + $0x118] sm:$0xff] %v1185
      %1314 = vst [vmem:[%s147 + $0x120] sm:$0xff] %v1186
      %1315 = vst [vmem:[%s147 + $0x128] sm:$0xff] %v1187
      %1316 = vst [vmem:[%s147 + $0x130] sm:$0xf] %v1188
      %1317 = vst [vmem:[%s147 + $0x134] sm:$0xff] %v1189
      %1318 = vst [vmem:[%s147 + $0x13c] sm:$0xff] %v1190
      %1319 = vst [vmem:[%s147 + $0x144] sm:$0xff] %v1191
      %1320 = vst [vmem:[%s147 + $0x14c] sm:$0xf] %v1192
      %1321 = vst [vmem:[%s147 + $0x150] sm:$0xff] %v1193
      %1322 = vst [vmem:[%s147 + $0x158] sm:$0xff] %v1194
      %1323 = vst [vmem:[%s147 + $0x160] sm:$0xff] %v1195
      %1324 = vst [vmem:[%s147 + $0x168] sm:$0xf] %v1196
      %1325 = vst [vmem:[%s147 + $0x16c] sm:$0xff] %v1197
      %1326 = vst [vmem:[%s147 + $0x174] sm:$0xff] %v1198
      %1327 = vst [vmem:[%s147 + $0x17c] sm:$0xff] %v1199
      %1328 = vst [vmem:[%s147 + $0x184] sm:$0xf] %v1200
      %1329 = vst [vmem:[%s147 + $0x188] sm:$0xff] %v1201
      %1330 = vst [vmem:[%s147 + $0x190] sm:$0xff] %v1202
      %1331 = vst [vmem:[%s147 + $0x198] sm:$0xff] %v1203
      %1332 = vst [vmem:[%s147 + $0x1a0] sm:$0xf] %v1204
      %1333 = vst [vmem:[%s147 + $0x1a4] sm:$0xff] %v1205
      %1334 = vst [vmem:[%s147 + $0x1ac] sm:$0xff] %v1206
      %1335 = vst [vmem:[%s147 + $0x1b4] sm:$0xff] %v1207
      %1336 = vst [vmem:[%s147 + $0x1bc] sm:$0xf] %v1208
      %s1337 = smul.u32 16, %s13
      %p1338 = scmp.lt.s32.totalorder %s1337, 47
      %s1339 = scalar_select %p1338, %s1337, 47
      %s1340 = smul.addr %s1339, 7
      %s1341 = smul.addr %s1340, 4
      %s1342 = scalar_lea.vmem %s2, %s1341
      // Predicated region
      $region29: #{compression_relation_predictor_forward.8} parent=27 // pred_check
        %p1343 = pneg %p78
      $region30: #{compression_relation_predictor_forward.8} parent=27 // pred_check_branch
        %1345 = sbr.rel (%p1343) target = $region32
      $region31: #{compression_relation_predictor_forward.8} parent=27 // pred_region
        %s1346 = smul.u32 16, %s13
      $region32: #{compression_relation_predictor_forward.8} parent=27 // pred_fallthru
        _
    $region28: #{compression_relation_predictor_forward.8} parent=5 // pred_fallthru
      _
    %p1347 = scmp.le.s32.totalorder 2, %s8
    // Predicated region
    $region33: #{compression_relation_predictor_forward.8} parent=5 // pred_check
      %p1348 = pneg %p1347
    $region34: #{compression_relation_predictor_forward.8} parent=5 // pred_check_branch
      %1350 = sbr.rel (%p1348) target = $region36
    $region35: #{compression_relation_predictor_forward.8} parent=5 // pred_region
      %s1351 = ssub.s32 %s8, 2
      // Predicated region
      $region37: #{compression_relation_predictor_forward.8} parent=35 // pred_check
        %p1352 = pneg %p84
      $region38: #{compression_relation_predictor_forward.8} parent=35 // pred_check_branch
        %1354 = sbr.rel (%p1352) target = $region40
      $region39: #{compression_relation_predictor_forward.8} parent=35 // pred_region
        %s1355 = smul.u32 16, %s14
        %p1356 = scmp.lt.s32.totalorder %s1355, 47
        %s1357 = scalar_select %p1356, %s1355, 47
        %s1358 = smul.addr %s1357, 7
        %s1359 = smul.addr %s1358, 4
        %s1360 = scalar_lea.vmem %s2, %s1359
      $region40: #{compression_relation_predictor_forward.8} parent=35 // pred_fallthru
        _
    $region36: #{compression_relation_predictor_forward.8} parent=5 // pred_fallthru
      _
  $region6: #{compression_relation_predictor_forward.8} parent=0 // loop_footer
    %s12 = sadd.s32 1, %s8
  $region7: #{compression_relation_predictor_forward.8} parent=0 // loop_footer_branch
    %7 = sbr.rel target = $region3
  $region8: #{compression_relation_predictor_forward.8} parent=0 // loop_exit
    _

// kernel: compression_relation_predictor_forward.11
$region0: #{compression_relation_predictor_forward.11}
  #allocation0 [shape = 'u32[]', space=smem, size = 0x4, offset = 0x4, fixed_abs, tag = 'smem constant byte address 0x4 - core index']
  #allocation1 [shape = 'u32[144,128]{1,0:T(1,128)}', space=vmem, size = 0x12000, scoped, tag = 'internal scratch']
  %s0 = inlined_call_operand.vmem [shape: f32[128,16], index: 0, kind: input, shape index: {}]
  %s1 = inlined_call_operand.vmem [shape: f32[128,16], index: 1, kind: input, shape index: {}]
  %s2 = inlined_call_operand.vmem [shape: f32[128,16], index: 2, kind: input, shape index: {}]
  %s3 = inlined_call_operand.hbm [shape: f32[1,16], index: 3, kind: output, shape index: {}]
  %s4 = sld [smem:[#allocation0]]
  $region22: #{compression_relation_predictor_forward.11} parent=0
    _
  %s6 = ssub.s32 1, %s4
  %s7 = scalar_select 0, %s6, %s4
  $region1: #{compression_relation_predictor_forward.11} parent=0
    #allocation2 [shape = 'u8[512]{0}', space=vmem, size = 0x400, scoped, tag = 'output window, operand 0, single buffered']
    #allocation3 [shape = 's32[1]{0}', space=sflag, size = 0x4, scoped, tag = 'scoped memory for compression_relation_predictor_forward.11']
    %8 = vsyncpa [#allocation3], 0
    // Predicated region
    $region2: #{compression_relation_predictor_forward.11} parent=1 // pred_check
      _
    $region3: #{compression_relation_predictor_forward.11} parent=1 // pred_check_branch
      %10 = sbr.rel (0) target = $region5
    $region4: #{compression_relation_predictor_forward.11} parent=1 // pred_region
      _
    $region5: #{compression_relation_predictor_forward.11} parent=1 // pred_fallthru
      _
    // Predicated region
    $region6: #{compression_relation_predictor_forward.11} parent=1 // pred_check
      _
    $region7: #{compression_relation_predictor_forward.11} parent=1 // pred_check_branch
      %12 = sbr.rel (0) target = $region9
    $region8: #{compression_relation_predictor_forward.11} parent=1 // pred_region
      _
    $region9: #{compression_relation_predictor_forward.11} parent=1 // pred_fallthru
      _
    // Predicated region
    $region10: #{compression_relation_predictor_forward.11} parent=1 // pred_check
      _
    $region11: #{compression_relation_predictor_forward.11} parent=1 // pred_check_branch
      %14 = sbr.rel (0) target = $region13
    $region12: #{compression_relation_predictor_forward.11} parent=1 // pred_region
      _
    $region13: #{compression_relation_predictor_forward.11} parent=1 // pred_fallthru
      _
    %v15 = vld [vmem:[%s0] sm:$0xff]
    %v16 = vld [vmem:[%s0 + $0x8] sm:$0xff]
    %v17 = vld [vmem:[%s0 + $0x10] sm:$0xff]
    %v18 = vld [vmem:[%s0 + $0x18] sm:$0xff]
    %v19 = vld [vmem:[%s0 + $0x20] sm:$0xff]
    %v20 = vld [vmem:[%s0 + $0x28] sm:$0xff]
    %v21 = vld [vmem:[%s0 + $0x30] sm:$0xff]
    %v22 = vld [vmem:[%s0 + $0x38] sm:$0xff]
    %v23 = vld [vmem:[%s0 + $0x40] sm:$0xff]
    %v24 = vld [vmem:[%s0 + $0x48] sm:$0xff]
    %v25 = vld [vmem:[%s0 + $0x50] sm:$0xff]
    %v26 = vld [vmem:[%s0 + $0x58] sm:$0xff]
    %v27 = vld [vmem:[%s0 + $0x60] sm:$0xff]
    %v28 = vld [vmem:[%s0 + $0x68] sm:$0xff]
    %v29 = vld [vmem:[%s0 + $0x70] sm:$0xff]
    %v30 = vld [vmem:[%s0 + $0x78] sm:$0xff]
    %v31 = vld [vmem:[%s1] sm:$0xff]
    %v32 = vld [vmem:[%s1 + $0x8] sm:$0xff]
    %v33 = vld [vmem:[%s1 + $0x10] sm:$0xff]
    %v34 = vld [vmem:[%s1 + $0x18] sm:$0xff]
    %v35 = vld [vmem:[%s1 + $0x20] sm:$0xff]
    %v36 = vld [vmem:[%s1 + $0x28] sm:$0xff]
    %v37 = vld [vmem:[%s1 + $0x30] sm:$0xff]
    %v38 = vld [vmem:[%s1 + $0x38] sm:$0xff]
    %v39 = vld [vmem:[%s1 + $0x40] sm:$0xff]
    %v40 = vld [vmem:[%s1 + $0x48] sm:$0xff]
    %v41 = vld [vmem:[%s1 + $0x50] sm:$0xff]
    %v42 = vld [vmem:[%s1 + $0x58] sm:$0xff]
    %v43 = vld [vmem:[%s1 + $0x60] sm:$0xff]
    %v44 = vld [vmem:[%s1 + $0x68] sm:$0xff]
    %v45 = vld [vmem:[%s1 + $0x70] sm:$0xff]
    %v46 = vld [vmem:[%s1 + $0x78] sm:$0xff]
    %v47 = vmul.f32 %v15, %v31
    %v48 = vmul.f32 %v16, %v32
    %v49 = vmul.f32 %v17, %v33
    %v50 = vmul.f32 %v18, %v34
    %v51 = vmul.f32 %v19, %v35
    %v52 = vmul.f32 %v20, %v36
    %v53 = vmul.f32 %v21, %v37
    %v54 = vmul.f32 %v22, %v38
    %v55 = vmul.f32 %v23, %v39
    %v56 = vmul.f32 %v24, %v40
    %v57 = vmul.f32 %v25, %v41
    %v58 = vmul.f32 %v26, %v42
    %v59 = vmul.f32 %v27, %v43
    %v60 = vmul.f32 %v28, %v44
    %v61 = vmul.f32 %v29, %v45
    %v62 = vmul.f32 %v30, %v46
    %v63 = vld [vmem:[%s2] sm:$0xff]
    %v64 = vld [vmem:[%s2 + $0x8] sm:$0xff]
    %v65 = vld [vmem:[%s2 + $0x10] sm:$0xff]
    %v66 = vld [vmem:[%s2 + $0x18] sm:$0xff]
    %v67 = vld [vmem:[%s2 + $0x20] sm:$0xff]
    %v68 = vld [vmem:[%s2 + $0x28] sm:$0xff]
    %v69 = vld [vmem:[%s2 + $0x30] sm:$0xff]
    %v70 = vld [vmem:[%s2 + $0x38] sm:$0xff]
    %v71 = vld [vmem:[%s2 + $0x40] sm:$0xff]
    %v72 = vld [vmem:[%s2 + $0x48] sm:$0xff]
    %v73 = vld [vmem:[%s2 + $0x50] sm:$0xff]
    %v74 = vld [vmem:[%s2 + $0x58] sm:$0xff]
    %v75 = vld [vmem:[%s2 + $0x60] sm:$0xff]
    %v76 = vld [vmem:[%s2 + $0x68] sm:$0xff]
    %v77 = vld [vmem:[%s2 + $0x70] sm:$0xff]
    %v78 = vld [vmem:[%s2 + $0x78] sm:$0xff]
    %v79 = vmul.f32 %v47, %v63
    %v80 = vmul.f32 %v48, %v64
    %v81 = vmul.f32 %v49, %v65
    %v82 = vmul.f32 %v50, %v66
    %v83 = vmul.f32 %v51, %v67
    %v84 = vmul.f32 %v52, %v68
    %v85 = vmul.f32 %v53, %v69
    %v86 = vmul.f32 %v54, %v70
    %v87 = vmul.f32 %v55, %v71
    %v88 = vmul.f32 %v56, %v72
    %v89 = vmul.f32 %v57, %v73
    %v90 = vmul.f32 %v58, %v74
    %v91 = vmul.f32 %v59, %v75
    %v92 = vmul.f32 %v60, %v76
    %v93 = vmul.f32 %v61, %v77
    %v94 = vmul.f32 %v62, %v78
    %vm95 = vcmask 130048
    %v96 = vsel %vm95, %v79, 0.0
    %v97 = vsel %vm95, %v80, 0.0
    %v98 = vadd.f32 %v96, %v97
    %v99 = vsel %vm95, %v81, 0.0
    %v100 = vadd.f32 %v98, %v99
    %v101 = vsel %vm95, %v82, 0.0
    %v102 = vadd.f32 %v100, %v101
    %v103 = vsel %vm95, %v83, 0.0
    %v104 = vadd.f32 %v102, %v103
    %v105 = vsel %vm95, %v84, 0.0
    %v106 = vadd.f32 %v104, %v105
    %v107 = vsel %vm95, %v85, 0.0
    %v108 = vadd.f32 %v106, %v107
    %v109 = vsel %vm95, %v86, 0.0
    %v110 = vadd.f32 %v108, %v109
    %v111 = vsel %vm95, %v87, 0.0
    %v112 = vadd.f32 %v110, %v111
    %v113 = vsel %vm95, %v88, 0.0
    %v114 = vadd.f32 %v112, %v113
    %v115 = vsel %vm95, %v89, 0.0
    %v116 = vadd.f32 %v114, %v115
    %v117 = vsel %vm95, %v90, 0.0
    %v118 = vadd.f32 %v116, %v117
    %v119 = vsel %vm95, %v91, 0.0
    %v120 = vadd.f32 %v118, %v119
    %v121 = vsel %vm95, %v92, 0.0
    %v122 = vadd.f32 %v120, %v121
    %v123 = vsel %vm95, %v93, 0.0
    %v124 = vadd.f32 %v122, %v123
    %v125 = vsel %vm95, %v94, 0.0
    %v126 = vadd.f32 %v124, %v125
    %v127 = vrot.slane %v126, 4
    %v128 = vadd.f32 %v126, %v127
    %v129 = vrot.slane %v128, 2
    %v130 = vadd.f32 %v128, %v129
    %v131 = vrot.slane %v130, 1
    %v132 = vadd.f32 %v130, %v131
    %vm133 = vcmask 122880
    %134 = vst.msk [vmem:[#allocation2] sm:$0x1] %vm133, %v132
    // Predicated region
    $region14: #{compression_relation_predictor_forward.11} parent=1 // pred_check
      _
    $region15: #{compression_relation_predictor_forward.11} parent=1 // pred_check_branch
      %136 = sbr.rel (0) target = $region17
    $region16: #{compression_relation_predictor_forward.11} parent=1 // pred_region
      %s138 = ssub.s32 16, 16
      %139 = vsyncadd [#allocation3], %s138
      %s141 = sshll.u32 [#allocation2], 4
      %s142 = int_to_ptr.vmem [resolvable:$true] %s141
      %144 = dma.vmem_to_hbm [thread:$0]  %s142, 16, %s3, [#allocation3]
    $region17: #{compression_relation_predictor_forward.11} parent=1 // pred_fallthru
      _
    // Predicated region
    $region18: #{compression_relation_predictor_forward.11} parent=1 // pred_check
      _
    $region19: #{compression_relation_predictor_forward.11} parent=1 // pred_check_branch
      %146 = sbr.rel (0) target = $region21
    $region20: #{compression_relation_predictor_forward.11} parent=1 // pred_region
      %147 = dma.done [#allocation3], 16
    $region21: #{compression_relation_predictor_forward.11} parent=1 // pred_fallthru
      _
    %148 = vsyncpa [#allocation3], 1

</llo_original>
